<compile_context>
chip_gen: v6e
topology: v6e:2x2x1
jax: 0.10.0
libtpu: 0.0.40
codegen_flags: <defaults>
</compile_context>

<pallas_src>
from functools import partial

import jax
import jax.numpy as jnp
import numpy as np
from jax.experimental import pallas as pl
from jax.experimental.pallas import tpu as pltpu


# ----------------------------- Fused Pallas kernel ------------------------------ #

def _fused_lstm_regressor_kernel(
        x_ref,                                   # (T*Bp, I)  time-major, batch-padded
        w1i_ref, w1h_ref, b1_ref,                # layer 1: (I, 4H), (H, 4H), (1, 4H)
        w2i_ref, w2h_ref, b2_ref,                # layer 2: (H, 4H), (H, 4H), (1, 4H)
        w3i_ref, w3h_ref, b3_ref,                # layer 3
        w4i_ref, w4h_ref, b4_ref,                # layer 4
        fcw_ref, fcb_ref,                        # (H, O), (1, O)
        out_ref,                                 # (Bp, O)
        *, T, Bp, H):

    def run_layer(xin_2d, wih_ref, whh_ref, b_ref):
        # ---- Hoisted input projection: one matmul for all timesteps. ----
        gx = (jnp.dot(xin_2d, wih_ref[...], preferred_element_type=jnp.float32)
              + b_ref[...])                      # (T*Bp, 4H); bias (b_ih + b_hh) added once
        whh = whh_ref[...]                       # (H, 4H), resident across the time loop

        def gate_nonlin(gates):
            # PyTorch gate order [i, f, g, o]. One full-width sigmoid pass covers
            # i, f, o; tanh only touches the g slice.
            sig = jax.nn.sigmoid(gates)
            return (sig[:, 0 * H:1 * H],         # i
                    sig[:, 1 * H:2 * H],         # f
                    jnp.tanh(gates[:, 2 * H:3 * H]),  # g
                    sig[:, 3 * H:4 * H])         # o

        # ---- t = 0: h0 = c0 = 0 so the recurrent matmul and f*c vanish exactly. ----
        i, _f, g, o = gate_nonlin(gx[0:Bp, :])
        c = i * g
        h = o * jnp.tanh(c)
        hs = [h]

        # ---- Serial recurrence; T is small & static so a full unroll is cheap and
        #      keeps every carry in vregs (no VMEM traffic inside the loop). ----
        for t in range(1, T):
            gates = gx[t * Bp:(t + 1) * Bp, :] + jnp.dot(
                h, whh, preferred_element_type=jnp.float32)
            i, f, g, o = gate_nonlin(gates)
            c = f * c + i * g
            h = o * jnp.tanh(c)
            hs.append(h)

        # Last hidden state + full hidden sequence (input to the next layer).
        return h, jnp.concatenate(hs, axis=0)    # (Bp, H), (T*Bp, H)

    # Layer 1 reads the external input; layers 2-4 consume the previous layer's
    # hidden sequence directly from vregs. Dropout = identity (eval mode).
    # TODO(synk): training-mode RNG dropout not implemented (inference semantics).
    _, seq = run_layer(x_ref[...], w1i_ref, w1h_ref, b1_ref)
    _, seq = run_layer(seq, w2i_ref, w2h_ref, b2_ref)
    _, seq = run_layer(seq, w3i_ref, w3h_ref, b3_ref)
    h_last, _ = run_layer(seq, w4i_ref, w4h_ref, b4_ref)

    # Final Linear on the last timestep's hidden state only.
    out_ref[...] = (jnp.dot(h_last, fcw_ref[...], preferred_element_type=jnp.float32)
                    + fcb_ref[...]).astype(out_ref.dtype)


# ------------------------------ Wrapper ----------------------------------- #

def lstm_regressor_forward(x_bti, params):
    """Matches LSTMRegressor.forward: 4x (LSTM -> Dropout) -> Linear on last step.

    x_bti: (batch, seq, input_size), float32. Returns (batch, output_size).
    """
    B, T, I = x_bti.shape
    H = params["lstm"][0][1].shape[0]            # w_hh_t is (H, 4H)
    O = params["fc_w"].shape[1]

    # Pad batch up to a multiple of the 8-row sublane height (padded rows are
    # computed and discarded; the LSTM is independent per batch row).
    Bp = max(8, ((B + 7) // 8) * 8)
    x_tbi = jnp.transpose(x_bti, (1, 0, 2)).astype(jnp.float32)   # (T, B, I)
    if Bp != B:
        x_tbi = jnp.pad(x_tbi, ((0, 0), (0, Bp - B), (0, 0)))
    x_2d = x_tbi.reshape(T * Bp, I)              # flatten outside the kernel

    flat_w = []
    for (w_ih_t, w_hh_t, b) in params["lstm"]:
        flat_w += [w_ih_t, w_hh_t, b]

    n_inputs = 1 + len(flat_w) + 2
    vmem_spec = lambda: pl.BlockSpec(memory_space=pltpu.MemorySpace.VMEM)

    out = pl.pallas_call(
        partial(_fused_lstm_regressor_kernel, T=T, Bp=Bp, H=H),
        out_shape=jax.ShapeDtypeStruct((Bp, O), jnp.float32),
        in_specs=[vmem_spec() for _ in range(n_inputs)],
        out_specs=vmem_spec(),
    )(x_2d, *flat_w, params["fc_w"], params["fc_b"])

    return out[:B]


# --------------------------- Parameter init -------------------------------- #

def init_params(key, input_size, hidden_size, output_size):
    """PyTorch-style uniform(-1/sqrt(H), 1/sqrt(H)) init; deterministic.

    Weights are stored pre-transposed ((F, 4H), (H, 4H)) and biases combined
    (b_ih + b_hh), matching what the kernel consumes.
    """
    k = 1.0 / np.sqrt(hidden_size)
    lstm_params = []
    in_dim = input_size
    for _ in range(4):
        key, k1, k2, k3, k4 = jax.random.split(key, 5)
        w_ih = jax.random.uniform(k1, (4 * hidden_size, in_dim), jnp.float32, -k, k)
        w_hh = jax.random.uniform(k2, (4 * hidden_size, hidden_size), jnp.float32, -k, k)
        b_ih = jax.random.uniform(k3, (4 * hidden_size,), jnp.float32, -k, k)
        b_hh = jax.random.uniform(k4, (4 * hidden_size,), jnp.float32, -k, k)
        lstm_params.append((w_ih.T, w_hh.T, (b_ih + b_hh)[None, :]))
        in_dim = hidden_size
    key, k5, k6 = jax.random.split(key, 3)
    kf = 1.0 / np.sqrt(hidden_size)
    fc_w = jax.random.uniform(k5, (hidden_size, output_size), jnp.float32, -kf, kf)
    fc_b = jax.random.uniform(k6, (1, output_size), jnp.float32, -kf, kf)
    return {"lstm": lstm_params, "fc_w": fc_w, "fc_b": fc_b}


# --------------------------- Pure-JAX reference ----------------------------- #

def _lstm_layer_ref(x_tbi, w_ih_t, w_hh_t, b):
    T, B, _ = x_tbi.shape
    H = w_hh_t.shape[0]

    def step(carry, x_t):
        h, c = carry
        gates = x_t @ w_ih_t + h @ w_hh_t + b
        i, f, g, o = jnp.split(gates, 4, axis=-1)
        i, f, o = jax.nn.sigmoid(i), jax.nn.sigmoid(f), jax.nn.sigmoid(o)
        g = jnp.tanh(g)
        c = f * c + i * g
        h = o * jnp.tanh(c)
        return (h, c), h

    init = (jnp.zeros((B, H), jnp.float32), jnp.zeros((B, H), jnp.float32))
    _, hs = jax.lax.scan(step, init, x_tbi)
    return hs


def _forward_ref(x_bti, params):
    h = jnp.transpose(x_bti, (1, 0, 2))
    for (w_ih_t, w_hh_t, b) in params["lstm"]:
        h = _lstm_layer_ref(h, w_ih_t, w_hh_t, b)
    return h[-1] @ params["fc_w"] + params["fc_b"]


# --------------------------------- Main ------------------------------------ #

if __name__ == "__main__":
    batch, seq_len, input_size = 2, 8, 4
    hidden_size, output_size = 32, 1

    key = jax.random.PRNGKey(0)
    key, pkey, xkey = jax.random.split(key, 3)
    params = init_params(pkey, input_size, hidden_size, output_size)
    x = jax.random.normal(xkey, (batch, seq_len, input_size), jnp.float32)

    out = lstm_regressor_forward(x, params)
    out = jax.block_until_ready(out)

    ref = jax.block_until_ready(_forward_ref(x, params))
    assert out.shape == (batch, output_size), out.shape
    np.testing.assert_allclose(np.asarray(out), np.asarray(ref),
                               rtol=5e-3, atol=5e-3)

    print("KERNEL_OK")
</pallas_src>

<mosaic_0001>
module attributes {stable_mosaic.version = 11 : i64} {
  func.func @_fused_lstm_regressor_kernel(%arg0: memref<64x4xf32, #tpu.memory_space<vmem>>, %arg1: memref<4x128xf32, #tpu.memory_space<vmem>>, %arg2: memref<32x128xf32, #tpu.memory_space<vmem>>, %arg3: memref<1x128xf32, #tpu.memory_space<vmem>>, %arg4: memref<32x128xf32, #tpu.memory_space<vmem>>, %arg5: memref<32x128xf32, #tpu.memory_space<vmem>>, %arg6: memref<1x128xf32, #tpu.memory_space<vmem>>, %arg7: memref<32x128xf32, #tpu.memory_space<vmem>>, %arg8: memref<32x128xf32, #tpu.memory_space<vmem>>, %arg9: memref<1x128xf32, #tpu.memory_space<vmem>>, %arg10: memref<32x128xf32, #tpu.memory_space<vmem>>, %arg11: memref<32x128xf32, #tpu.memory_space<vmem>>, %arg12: memref<1x128xf32, #tpu.memory_space<vmem>>, %arg13: memref<32x1xf32, #tpu.memory_space<vmem>>, %arg14: memref<1x1xf32, #tpu.memory_space<vmem>>, %arg15: memref<8x1xf32, #tpu.memory_space<vmem>>) attributes {dimension_semantics = [], scalar_prefetch = 0 : i64, scratch_operands = 0 : i64, tpu.core_type = #tpu.core_type<tc>} {
    %c0 = arith.constant 0 : index
    %c0_0 = arith.constant 0 : index
    %0 = vector.load %arg0[%c0, %c0_0] : memref<64x4xf32, #tpu.memory_space<vmem>>, vector<64x4xf32>
    %c0_1 = arith.constant 0 : index
    %c0_2 = arith.constant 0 : index
    %1 = vector.load %arg1[%c0_1, %c0_2] : memref<4x128xf32, #tpu.memory_space<vmem>>, vector<4x128xf32>
    %cst = arith.constant dense<0.000000e+00> : vector<64x128xf32>
    %2 = tpu.matmul %0, %1, %cst {dimension_numbers = #tpu.dot_dimension_numbers<[1], [0], [0], [1], [0, 0, 1, 1], [], []>} : vector<64x4xf32>, vector<4x128xf32>, vector<64x128xf32> -> vector<64x128xf32>
    %c0_3 = arith.constant 0 : index
    %c0_4 = arith.constant 0 : index
    %3 = vector.load %arg3[%c0_3, %c0_4] : memref<1x128xf32, #tpu.memory_space<vmem>>, vector<1x128xf32>
    %4 = vector.broadcast %3 : vector<1x128xf32> to vector<64x128xf32>
    %5 = arith.addf %2, %4 : vector<64x128xf32>
    %c0_5 = arith.constant 0 : index
    %c0_6 = arith.constant 0 : index
    %6 = vector.load %arg2[%c0_5, %c0_6] : memref<32x128xf32, #tpu.memory_space<vmem>>, vector<32x128xf32>
    %7 = vector.extract_strided_slice %5 {offsets = [0, 0], sizes = [8, 128], strides = [1, 1]} : vector<64x128xf32> to vector<8x128xf32>
    %8 = arith.negf %7 : vector<8x128xf32>
    %9 = math.exp %8 : vector<8x128xf32>
    %cst_7 = arith.constant 1.000000e+00 : f32
    %10 = vector.broadcast %cst_7 : f32 to vector<8x128xf32>
    %11 = arith.addf %10, %9 : vector<8x128xf32>
    %12 = arith.divf %10, %11 : vector<8x128xf32>
    %13 = vector.extract_strided_slice %12 {offsets = [0, 0], sizes = [8, 32], strides = [1, 1]} : vector<8x128xf32> to vector<8x32xf32>
    %14 = vector.extract_strided_slice %7 {offsets = [0, 64], sizes = [8, 32], strides = [1, 1]} : vector<8x128xf32> to vector<8x32xf32>
    %15 = math.tanh %14 : vector<8x32xf32>
    %16 = vector.extract_strided_slice %12 {offsets = [0, 96], sizes = [8, 32], strides = [1, 1]} : vector<8x128xf32> to vector<8x32xf32>
    %17 = arith.mulf %13, %15 : vector<8x32xf32>
    %18 = math.tanh %17 : vector<8x32xf32>
    %19 = arith.mulf %16, %18 : vector<8x32xf32>
    %20 = vector.extract_strided_slice %5 {offsets = [8, 0], sizes = [8, 128], strides = [1, 1]} : vector<64x128xf32> to vector<8x128xf32>
    %cst_8 = arith.constant dense<0.000000e+00> : vector<8x128xf32>
    %21 = tpu.matmul %19, %6, %cst_8 {dimension_numbers = #tpu.dot_dimension_numbers<[1], [0], [0], [1], [0, 0, 1, 1], [], []>} : vector<8x32xf32>, vector<32x128xf32>, vector<8x128xf32> -> vector<8x128xf32>
    %22 = arith.addf %20, %21 : vector<8x128xf32>
    %23 = arith.negf %22 : vector<8x128xf32>
    %24 = math.exp %23 : vector<8x128xf32>
    %cst_9 = arith.constant 1.000000e+00 : f32
    %25 = vector.broadcast %cst_9 : f32 to vector<8x128xf32>
    %26 = arith.addf %25, %24 : vector<8x128xf32>
    %27 = arith.divf %25, %26 : vector<8x128xf32>
    %28 = vector.extract_strided_slice %27 {offsets = [0, 0], sizes = [8, 32], strides = [1, 1]} : vector<8x128xf32> to vector<8x32xf32>
    %29 = vector.extract_strided_slice %27 {offsets = [0, 32], sizes = [8, 32], strides = [1, 1]} : vector<8x128xf32> to vector<8x32xf32>
    %30 = vector.extract_strided_slice %22 {offsets = [0, 64], sizes = [8, 32], strides = [1, 1]} : vector<8x128xf32> to vector<8x32xf32>
    %31 = math.tanh %30 : vector<8x32xf32>
    %32 = vector.extract_strided_slice %27 {offsets = [0, 96], sizes = [8, 32], strides = [1, 1]} : vector<8x128xf32> to vector<8x32xf32>
    %33 = arith.mulf %29, %17 : vector<8x32xf32>
    %34 = arith.mulf %28, %31 : vector<8x32xf32>
    %35 = arith.addf %33, %34 : vector<8x32xf32>
    %36 = math.tanh %35 : vector<8x32xf32>
    %37 = arith.mulf %32, %36 : vector<8x32xf32>
    %38 = vector.extract_strided_slice %5 {offsets = [16, 0], sizes = [8, 128], strides = [1, 1]} : vector<64x128xf32> to vector<8x128xf32>
    %cst_10 = arith.constant dense<0.000000e+00> : vector<8x128xf32>
    %39 = tpu.matmul %37, %6, %cst_10 {dimension_numbers = #tpu.dot_dimension_numbers<[1], [0], [0], [1], [0, 0, 1, 1], [], []>} : vector<8x32xf32>, vector<32x128xf32>, vector<8x128xf32> -> vector<8x128xf32>
    %40 = arith.addf %38, %39 : vector<8x128xf32>
    %41 = arith.negf %40 : vector<8x128xf32>
    %42 = math.exp %41 : vector<8x128xf32>
    %cst_11 = arith.constant 1.000000e+00 : f32
    %43 = vector.broadcast %cst_11 : f32 to vector<8x128xf32>
    %44 = arith.addf %43, %42 : vector<8x128xf32>
    %45 = arith.divf %43, %44 : vector<8x128xf32>
    %46 = vector.extract_strided_slice %45 {offsets = [0, 0], sizes = [8, 32], strides = [1, 1]} : vector<8x128xf32> to vector<8x32xf32>
    %47 = vector.extract_strided_slice %45 {offsets = [0, 32], sizes = [8, 32], strides = [1, 1]} : vector<8x128xf32> to vector<8x32xf32>
    %48 = vector.extract_strided_slice %40 {offsets = [0, 64], sizes = [8, 32], strides = [1, 1]} : vector<8x128xf32> to vector<8x32xf32>
    %49 = math.tanh %48 : vector<8x32xf32>
    %50 = vector.extract_strided_slice %45 {offsets = [0, 96], sizes = [8, 32], strides = [1, 1]} : vector<8x128xf32> to vector<8x32xf32>
    %51 = arith.mulf %47, %35 : vector<8x32xf32>
    %52 = arith.mulf %46, %49 : vector<8x32xf32>
    %53 = arith.addf %51, %52 : vector<8x32xf32>
    %54 = math.tanh %53 : vector<8x32xf32>
    %55 = arith.mulf %50, %54 : vector<8x32xf32>
    %56 = vector.extract_strided_slice %5 {offsets = [24, 0], sizes = [8, 128], strides = [1, 1]} : vector<64x128xf32> to vector<8x128xf32>
    %cst_12 = arith.constant dense<0.000000e+00> : vector<8x128xf32>
    %57 = tpu.matmul %55, %6, %cst_12 {dimension_numbers = #tpu.dot_dimension_numbers<[1], [0], [0], [1], [0, 0, 1, 1], [], []>} : vector<8x32xf32>, vector<32x128xf32>, vector<8x128xf32> -> vector<8x128xf32>
    %58 = arith.addf %56, %57 : vector<8x128xf32>
    %59 = arith.negf %58 : vector<8x128xf32>
    %60 = math.exp %59 : vector<8x128xf32>
    %cst_13 = arith.constant 1.000000e+00 : f32
    %61 = vector.broadcast %cst_13 : f32 to vector<8x128xf32>
    %62 = arith.addf %61, %60 : vector<8x128xf32>
    %63 = arith.divf %61, %62 : vector<8x128xf32>
    %64 = vector.extract_strided_slice %63 {offsets = [0, 0], sizes = [8, 32], strides = [1, 1]} : vector<8x128xf32> to vector<8x32xf32>
    %65 = vector.extract_strided_slice %63 {offsets = [0, 32], sizes = [8, 32], strides = [1, 1]} : vector<8x128xf32> to vector<8x32xf32>
    %66 = vector.extract_strided_slice %58 {offsets = [0, 64], sizes = [8, 32], strides = [1, 1]} : vector<8x128xf32> to vector<8x32xf32>
    %67 = math.tanh %66 : vector<8x32xf32>
    %68 = vector.extract_strided_slice %63 {offsets = [0, 96], sizes = [8, 32], strides = [1, 1]} : vector<8x128xf32> to vector<8x32xf32>
    %69 = arith.mulf %65, %53 : vector<8x32xf32>
    %70 = arith.mulf %64, %67 : vector<8x32xf32>
    %71 = arith.addf %69, %70 : vector<8x32xf32>
    %72 = math.tanh %71 : vector<8x32xf32>
    %73 = arith.mulf %68, %72 : vector<8x32xf32>
    %74 = vector.extract_strided_slice %5 {offsets = [32, 0], sizes = [8, 128], strides = [1, 1]} : vector<64x128xf32> to vector<8x128xf32>
    %cst_14 = arith.constant dense<0.000000e+00> : vector<8x128xf32>
    %75 = tpu.matmul %73, %6, %cst_14 {dimension_numbers = #tpu.dot_dimension_numbers<[1], [0], [0], [1], [0, 0, 1, 1], [], []>} : vector<8x32xf32>, vector<32x128xf32>, vector<8x128xf32> -> vector<8x128xf32>
    %76 = arith.addf %74, %75 : vector<8x128xf32>
    %77 = arith.negf %76 : vector<8x128xf32>
    %78 = math.exp %77 : vector<8x128xf32>
    %cst_15 = arith.constant 1.000000e+00 : f32
    %79 = vector.broadcast %cst_15 : f32 to vector<8x128xf32>
    %80 = arith.addf %79, %78 : vector<8x128xf32>
    %81 = arith.divf %79, %80 : vector<8x128xf32>
    %82 = vector.extract_strided_slice %81 {offsets = [0, 0], sizes = [8, 32], strides = [1, 1]} : vector<8x128xf32> to vector<8x32xf32>
    %83 = vector.extract_strided_slice %81 {offsets = [0, 32], sizes = [8, 32], strides = [1, 1]} : vector<8x128xf32> to vector<8x32xf32>
    %84 = vector.extract_strided_slice %76 {offsets = [0, 64], sizes = [8, 32], strides = [1, 1]} : vector<8x128xf32> to vector<8x32xf32>
    %85 = math.tanh %84 : vector<8x32xf32>
    %86 = vector.extract_strided_slice %81 {offsets = [0, 96], sizes = [8, 32], strides = [1, 1]} : vector<8x128xf32> to vector<8x32xf32>
    %87 = arith.mulf %83, %71 : vector<8x32xf32>
    %88 = arith.mulf %82, %85 : vector<8x32xf32>
    %89 = arith.addf %87, %88 : vector<8x32xf32>
    %90 = math.tanh %89 : vector<8x32xf32>
    %91 = arith.mulf %86, %90 : vector<8x32xf32>
    %92 = vector.extract_strided_slice %5 {offsets = [40, 0], sizes = [8, 128], strides = [1, 1]} : vector<64x128xf32> to vector<8x128xf32>
    %cst_16 = arith.constant dense<0.000000e+00> : vector<8x128xf32>
    %93 = tpu.matmul %91, %6, %cst_16 {dimension_numbers = #tpu.dot_dimension_numbers<[1], [0], [0], [1], [0, 0, 1, 1], [], []>} : vector<8x32xf32>, vector<32x128xf32>, vector<8x128xf32> -> vector<8x128xf32>
    %94 = arith.addf %92, %93 : vector<8x128xf32>
    %95 = arith.negf %94 : vector<8x128xf32>
    %96 = math.exp %95 : vector<8x128xf32>
    %cst_17 = arith.constant 1.000000e+00 : f32
    %97 = vector.broadcast %cst_17 : f32 to vector<8x128xf32>
    %98 = arith.addf %97, %96 : vector<8x128xf32>
    %99 = arith.divf %97, %98 : vector<8x128xf32>
    %100 = vector.extract_strided_slice %99 {offsets = [0, 0], sizes = [8, 32], strides = [1, 1]} : vector<8x128xf32> to vector<8x32xf32>
    %101 = vector.extract_strided_slice %99 {offsets = [0, 32], sizes = [8, 32], strides = [1, 1]} : vector<8x128xf32> to vector<8x32xf32>
    %102 = vector.extract_strided_slice %94 {offsets = [0, 64], sizes = [8, 32], strides = [1, 1]} : vector<8x128xf32> to vector<8x32xf32>
    %103 = math.tanh %102 : vector<8x32xf32>
    %104 = vector.extract_strided_slice %99 {offsets = [0, 96], sizes = [8, 32], strides = [1, 1]} : vector<8x128xf32> to vector<8x32xf32>
    %105 = arith.mulf %101, %89 : vector<8x32xf32>
    %106 = arith.mulf %100, %103 : vector<8x32xf32>
    %107 = arith.addf %105, %106 : vector<8x32xf32>
    %108 = math.tanh %107 : vector<8x32xf32>
    %109 = arith.mulf %104, %108 : vector<8x32xf32>
    %110 = vector.extract_strided_slice %5 {offsets = [48, 0], sizes = [8, 128], strides = [1, 1]} : vector<64x128xf32> to vector<8x128xf32>
    %cst_18 = arith.constant dense<0.000000e+00> : vector<8x128xf32>
    %111 = tpu.matmul %109, %6, %cst_18 {dimension_numbers = #tpu.dot_dimension_numbers<[1], [0], [0], [1], [0, 0, 1, 1], [], []>} : vector<8x32xf32>, vector<32x128xf32>, vector<8x128xf32> -> vector<8x128xf32>
    %112 = arith.addf %110, %111 : vector<8x128xf32>
    %113 = arith.negf %112 : vector<8x128xf32>
    %114 = math.exp %113 : vector<8x128xf32>
    %cst_19 = arith.constant 1.000000e+00 : f32
    %115 = vector.broadcast %cst_19 : f32 to vector<8x128xf32>
    %116 = arith.addf %115, %114 : vector<8x128xf32>
    %117 = arith.divf %115, %116 : vector<8x128xf32>
    %118 = vector.extract_strided_slice %117 {offsets = [0, 0], sizes = [8, 32], strides = [1, 1]} : vector<8x128xf32> to vector<8x32xf32>
    %119 = vector.extract_strided_slice %117 {offsets = [0, 32], sizes = [8, 32], strides = [1, 1]} : vector<8x128xf32> to vector<8x32xf32>
    %120 = vector.extract_strided_slice %112 {offsets = [0, 64], sizes = [8, 32], strides = [1, 1]} : vector<8x128xf32> to vector<8x32xf32>
    %121 = math.tanh %120 : vector<8x32xf32>
    %122 = vector.extract_strided_slice %117 {offsets = [0, 96], sizes = [8, 32], strides = [1, 1]} : vector<8x128xf32> to vector<8x32xf32>
    %123 = arith.mulf %119, %107 : vector<8x32xf32>
    %124 = arith.mulf %118, %121 : vector<8x32xf32>
    %125 = arith.addf %123, %124 : vector<8x32xf32>
    %126 = math.tanh %125 : vector<8x32xf32>
    %127 = arith.mulf %122, %126 : vector<8x32xf32>
    %128 = vector.extract_strided_slice %5 {offsets = [56, 0], sizes = [8, 128], strides = [1, 1]} : vector<64x128xf32> to vector<8x128xf32>
    %cst_20 = arith.constant dense<0.000000e+00> : vector<8x128xf32>
    %129 = tpu.matmul %127, %6, %cst_20 {dimension_numbers = #tpu.dot_dimension_numbers<[1], [0], [0], [1], [0, 0, 1, 1], [], []>} : vector<8x32xf32>, vector<32x128xf32>, vector<8x128xf32> -> vector<8x128xf32>
    %130 = arith.addf %128, %129 : vector<8x128xf32>
    %131 = arith.negf %130 : vector<8x128xf32>
    %132 = math.exp %131 : vector<8x128xf32>
    %cst_21 = arith.constant 1.000000e+00 : f32
    %133 = vector.broadcast %cst_21 : f32 to vector<8x128xf32>
    %134 = arith.addf %133, %132 : vector<8x128xf32>
    %135 = arith.divf %133, %134 : vector<8x128xf32>
    %136 = vector.extract_strided_slice %135 {offsets = [0, 0], sizes = [8, 32], strides = [1, 1]} : vector<8x128xf32> to vector<8x32xf32>
    %137 = vector.extract_strided_slice %135 {offsets = [0, 32], sizes = [8, 32], strides = [1, 1]} : vector<8x128xf32> to vector<8x32xf32>
    %138 = vector.extract_strided_slice %130 {offsets = [0, 64], sizes = [8, 32], strides = [1, 1]} : vector<8x128xf32> to vector<8x32xf32>
    %139 = math.tanh %138 : vector<8x32xf32>
    %140 = vector.extract_strided_slice %135 {offsets = [0, 96], sizes = [8, 32], strides = [1, 1]} : vector<8x128xf32> to vector<8x32xf32>
    %141 = arith.mulf %137, %125 : vector<8x32xf32>
    %142 = arith.mulf %136, %139 : vector<8x32xf32>
    %143 = arith.addf %141, %142 : vector<8x32xf32>
    %144 = math.tanh %143 : vector<8x32xf32>
    %145 = arith.mulf %140, %144 : vector<8x32xf32>
    %146 = tpu.concatenate %19, %37, %55, %73, %91, %109, %127, %145 in 0 : vector<8x32xf32>, vector<8x32xf32>, vector<8x32xf32>, vector<8x32xf32>, vector<8x32xf32>, vector<8x32xf32>, vector<8x32xf32>, vector<8x32xf32> -> vector<64x32xf32>
    %c0_22 = arith.constant 0 : index
    %c0_23 = arith.constant 0 : index
    %147 = vector.load %arg4[%c0_22, %c0_23] : memref<32x128xf32, #tpu.memory_space<vmem>>, vector<32x128xf32>
    %cst_24 = arith.constant dense<0.000000e+00> : vector<64x128xf32>
    %148 = tpu.matmul %146, %147, %cst_24 {dimension_numbers = #tpu.dot_dimension_numbers<[1], [0], [0], [1], [0, 0, 1, 1], [], []>} : vector<64x32xf32>, vector<32x128xf32>, vector<64x128xf32> -> vector<64x128xf32>
    %c0_25 = arith.constant 0 : index
    %c0_26 = arith.constant 0 : index
    %149 = vector.load %arg6[%c0_25, %c0_26] : memref<1x128xf32, #tpu.memory_space<vmem>>, vector<1x128xf32>
    %150 = vector.broadcast %149 : vector<1x128xf32> to vector<64x128xf32>
    %151 = arith.addf %148, %150 : vector<64x128xf32>
    %c0_27 = arith.constant 0 : index
    %c0_28 = arith.constant 0 : index
    %152 = vector.load %arg5[%c0_27, %c0_28] : memref<32x128xf32, #tpu.memory_space<vmem>>, vector<32x128xf32>
    %153 = vector.extract_strided_slice %151 {offsets = [0, 0], sizes = [8, 128], strides = [1, 1]} : vector<64x128xf32> to vector<8x128xf32>
    %154 = arith.negf %153 : vector<8x128xf32>
    %155 = math.exp %154 : vector<8x128xf32>
    %cst_29 = arith.constant 1.000000e+00 : f32
    %156 = vector.broadcast %cst_29 : f32 to vector<8x128xf32>
    %157 = arith.addf %156, %155 : vector<8x128xf32>
    %158 = arith.divf %156, %157 : vector<8x128xf32>
    %159 = vector.extract_strided_slice %158 {offsets = [0, 0], sizes = [8, 32], strides = [1, 1]} : vector<8x128xf32> to vector<8x32xf32>
    %160 = vector.extract_strided_slice %153 {offsets = [0, 64], sizes = [8, 32], strides = [1, 1]} : vector<8x128xf32> to vector<8x32xf32>
    %161 = math.tanh %160 : vector<8x32xf32>
    %162 = vector.extract_strided_slice %158 {offsets = [0, 96], sizes = [8, 32], strides = [1, 1]} : vector<8x128xf32> to vector<8x32xf32>
    %163 = arith.mulf %159, %161 : vector<8x32xf32>
    %164 = math.tanh %163 : vector<8x32xf32>
    %165 = arith.mulf %162, %164 : vector<8x32xf32>
    %166 = vector.extract_strided_slice %151 {offsets = [8, 0], sizes = [8, 128], strides = [1, 1]} : vector<64x128xf32> to vector<8x128xf32>
    %cst_30 = arith.constant dense<0.000000e+00> : vector<8x128xf32>
    %167 = tpu.matmul %165, %152, %cst_30 {dimension_numbers = #tpu.dot_dimension_numbers<[1], [0], [0], [1], [0, 0, 1, 1], [], []>} : vector<8x32xf32>, vector<32x128xf32>, vector<8x128xf32> -> vector<8x128xf32>
    %168 = arith.addf %166, %167 : vector<8x128xf32>
    %169 = arith.negf %168 : vector<8x128xf32>
    %170 = math.exp %169 : vector<8x128xf32>
    %cst_31 = arith.constant 1.000000e+00 : f32
    %171 = vector.broadcast %cst_31 : f32 to vector<8x128xf32>
    %172 = arith.addf %171, %170 : vector<8x128xf32>
    %173 = arith.divf %171, %172 : vector<8x128xf32>
    %174 = vector.extract_strided_slice %173 {offsets = [0, 0], sizes = [8, 32], strides = [1, 1]} : vector<8x128xf32> to vector<8x32xf32>
    %175 = vector.extract_strided_slice %173 {offsets = [0, 32], sizes = [8, 32], strides = [1, 1]} : vector<8x128xf32> to vector<8x32xf32>
    %176 = vector.extract_strided_slice %168 {offsets = [0, 64], sizes = [8, 32], strides = [1, 1]} : vector<8x128xf32> to vector<8x32xf32>
    %177 = math.tanh %176 : vector<8x32xf32>
    %178 = vector.extract_strided_slice %173 {offsets = [0, 96], sizes = [8, 32], strides = [1, 1]} : vector<8x128xf32> to vector<8x32xf32>
    %179 = arith.mulf %175, %163 : vector<8x32xf32>
    %180 = arith.mulf %174, %177 : vector<8x32xf32>
    %181 = arith.addf %179, %180 : vector<8x32xf32>
    %182 = math.tanh %181 : vector<8x32xf32>
    %183 = arith.mulf %178, %182 : vector<8x32xf32>
    %184 = vector.extract_strided_slice %151 {offsets = [16, 0], sizes = [8, 128], strides = [1, 1]} : vector<64x128xf32> to vector<8x128xf32>
    %cst_32 = arith.constant dense<0.000000e+00> : vector<8x128xf32>
    %185 = tpu.matmul %183, %152, %cst_32 {dimension_numbers = #tpu.dot_dimension_numbers<[1], [0], [0], [1], [0, 0, 1, 1], [], []>} : vector<8x32xf32>, vector<32x128xf32>, vector<8x128xf32> -> vector<8x128xf32>
    %186 = arith.addf %184, %185 : vector<8x128xf32>
    %187 = arith.negf %186 : vector<8x128xf32>
    %188 = math.exp %187 : vector<8x128xf32>
    %cst_33 = arith.constant 1.000000e+00 : f32
    %189 = vector.broadcast %cst_33 : f32 to vector<8x128xf32>
    %190 = arith.addf %189, %188 : vector<8x128xf32>
    %191 = arith.divf %189, %190 : vector<8x128xf32>
    %192 = vector.extract_strided_slice %191 {offsets = [0, 0], sizes = [8, 32], strides = [1, 1]} : vector<8x128xf32> to vector<8x32xf32>
    %193 = vector.extract_strided_slice %191 {offsets = [0, 32], sizes = [8, 32], strides = [1, 1]} : vector<8x128xf32> to vector<8x32xf32>
    %194 = vector.extract_strided_slice %186 {offsets = [0, 64], sizes = [8, 32], strides = [1, 1]} : vector<8x128xf32> to vector<8x32xf32>
    %195 = math.tanh %194 : vector<8x32xf32>
    %196 = vector.extract_strided_slice %191 {offsets = [0, 96], sizes = [8, 32], strides = [1, 1]} : vector<8x128xf32> to vector<8x32xf32>
    %197 = arith.mulf %193, %181 : vector<8x32xf32>
    %198 = arith.mulf %192, %195 : vector<8x32xf32>
    %199 = arith.addf %197, %198 : vector<8x32xf32>
    %200 = math.tanh %199 : vector<8x32xf32>
    %201 = arith.mulf %196, %200 : vector<8x32xf32>
    %202 = vector.extract_strided_slice %151 {offsets = [24, 0], sizes = [8, 128], strides = [1, 1]} : vector<64x128xf32> to vector<8x128xf32>
    %cst_34 = arith.constant dense<0.000000e+00> : vector<8x128xf32>
    %203 = tpu.matmul %201, %152, %cst_34 {dimension_numbers = #tpu.dot_dimension_numbers<[1], [0], [0], [1], [0, 0, 1, 1], [], []>} : vector<8x32xf32>, vector<32x128xf32>, vector<8x128xf32> -> vector<8x128xf32>
    %204 = arith.addf %202, %203 : vector<8x128xf32>
    %205 = arith.negf %204 : vector<8x128xf32>
    %206 = math.exp %205 : vector<8x128xf32>
    %cst_35 = arith.constant 1.000000e+00 : f32
    %207 = vector.broadcast %cst_35 : f32 to vector<8x128xf32>
    %208 = arith.addf %207, %206 : vector<8x128xf32>
    %209 = arith.divf %207, %208 : vector<8x128xf32>
    %210 = vector.extract_strided_slice %209 {offsets = [0, 0], sizes = [8, 32], strides = [1, 1]} : vector<8x128xf32> to vector<8x32xf32>
    %211 = vector.extract_strided_slice %209 {offsets = [0, 32], sizes = [8, 32], strides = [1, 1]} : vector<8x128xf32> to vector<8x32xf32>
    %212 = vector.extract_strided_slice %204 {offsets = [0, 64], sizes = [8, 32], strides = [1, 1]} : vector<8x128xf32> to vector<8x32xf32>
    %213 = math.tanh %212 : vector<8x32xf32>
    %214 = vector.extract_strided_slice %209 {offsets = [0, 96], sizes = [8, 32], strides = [1, 1]} : vector<8x128xf32> to vector<8x32xf32>
    %215 = arith.mulf %211, %199 : vector<8x32xf32>
    %216 = arith.mulf %210, %213 : vector<8x32xf32>
    %217 = arith.addf %215, %216 : vector<8x32xf32>
    %218 = math.tanh %217 : vector<8x32xf32>
    %219 = arith.mulf %214, %218 : vector<8x32xf32>
    %220 = vector.extract_strided_slice %151 {offsets = [32, 0], sizes = [8, 128], strides = [1, 1]} : vector<64x128xf32> to vector<8x128xf32>
    %cst_36 = arith.constant dense<0.000000e+00> : vector<8x128xf32>
    %221 = tpu.matmul %219, %152, %cst_36 {dimension_numbers = #tpu.dot_dimension_numbers<[1], [0], [0], [1], [0, 0, 1, 1], [], []>} : vector<8x32xf32>, vector<32x128xf32>, vector<8x128xf32> -> vector<8x128xf32>
    %222 = arith.addf %220, %221 : vector<8x128xf32>
    %223 = arith.negf %222 : vector<8x128xf32>
    %224 = math.exp %223 : vector<8x128xf32>
    %cst_37 = arith.constant 1.000000e+00 : f32
    %225 = vector.broadcast %cst_37 : f32 to vector<8x128xf32>
    %226 = arith.addf %225, %224 : vector<8x128xf32>
    %227 = arith.divf %225, %226 : vector<8x128xf32>
    %228 = vector.extract_strided_slice %227 {offsets = [0, 0], sizes = [8, 32], strides = [1, 1]} : vector<8x128xf32> to vector<8x32xf32>
    %229 = vector.extract_strided_slice %227 {offsets = [0, 32], sizes = [8, 32], strides = [1, 1]} : vector<8x128xf32> to vector<8x32xf32>
    %230 = vector.extract_strided_slice %222 {offsets = [0, 64], sizes = [8, 32], strides = [1, 1]} : vector<8x128xf32> to vector<8x32xf32>
    %231 = math.tanh %230 : vector<8x32xf32>
    %232 = vector.extract_strided_slice %227 {offsets = [0, 96], sizes = [8, 32], strides = [1, 1]} : vector<8x128xf32> to vector<8x32xf32>
    %233 = arith.mulf %229, %217 : vector<8x32xf32>
    %234 = arith.mulf %228, %231 : vector<8x32xf32>
    %235 = arith.addf %233, %234 : vector<8x32xf32>
    %236 = math.tanh %235 : vector<8x32xf32>
    %237 = arith.mulf %232, %236 : vector<8x32xf32>
    %238 = vector.extract_strided_slice %151 {offsets = [40, 0], sizes = [8, 128], strides = [1, 1]} : vector<64x128xf32> to vector<8x128xf32>
    %cst_38 = arith.constant dense<0.000000e+00> : vector<8x128xf32>
    %239 = tpu.matmul %237, %152, %cst_38 {dimension_numbers = #tpu.dot_dimension_numbers<[1], [0], [0], [1], [0, 0, 1, 1], [], []>} : vector<8x32xf32>, vector<32x128xf32>, vector<8x128xf32> -> vector<8x128xf32>
    %240 = arith.addf %238, %239 : vector<8x128xf32>
    %241 = arith.negf %240 : vector<8x128xf32>
    %242 = math.exp %241 : vector<8x128xf32>
    %cst_39 = arith.constant 1.000000e+00 : f32
    %243 = vector.broadcast %cst_39 : f32 to vector<8x128xf32>
    %244 = arith.addf %243, %242 : vector<8x128xf32>
    %245 = arith.divf %243, %244 : vector<8x128xf32>
    %246 = vector.extract_strided_slice %245 {offsets = [0, 0], sizes = [8, 32], strides = [1, 1]} : vector<8x128xf32> to vector<8x32xf32>
    %247 = vector.extract_strided_slice %245 {offsets = [0, 32], sizes = [8, 32], strides = [1, 1]} : vector<8x128xf32> to vector<8x32xf32>
    %248 = vector.extract_strided_slice %240 {offsets = [0, 64], sizes = [8, 32], strides = [1, 1]} : vector<8x128xf32> to vector<8x32xf32>
    %249 = math.tanh %248 : vector<8x32xf32>
    %250 = vector.extract_strided_slice %245 {offsets = [0, 96], sizes = [8, 32], strides = [1, 1]} : vector<8x128xf32> to vector<8x32xf32>
    %251 = arith.mulf %247, %235 : vector<8x32xf32>
    %252 = arith.mulf %246, %249 : vector<8x32xf32>
    %253 = arith.addf %251, %252 : vector<8x32xf32>
    %254 = math.tanh %253 : vector<8x32xf32>
    %255 = arith.mulf %250, %254 : vector<8x32xf32>
    %256 = vector.extract_strided_slice %151 {offsets = [48, 0], sizes = [8, 128], strides = [1, 1]} : vector<64x128xf32> to vector<8x128xf32>
    %cst_40 = arith.constant dense<0.000000e+00> : vector<8x128xf32>
    %257 = tpu.matmul %255, %152, %cst_40 {dimension_numbers = #tpu.dot_dimension_numbers<[1], [0], [0], [1], [0, 0, 1, 1], [], []>} : vector<8x32xf32>, vector<32x128xf32>, vector<8x128xf32> -> vector<8x128xf32>
    %258 = arith.addf %256, %257 : vector<8x128xf32>
    %259 = arith.negf %258 : vector<8x128xf32>
    %260 = math.exp %259 : vector<8x128xf32>
    %cst_41 = arith.constant 1.000000e+00 : f32
    %261 = vector.broadcast %cst_41 : f32 to vector<8x128xf32>
    %262 = arith.addf %261, %260 : vector<8x128xf32>
    %263 = arith.divf %261, %262 : vector<8x128xf32>
    %264 = vector.extract_strided_slice %263 {offsets = [0, 0], sizes = [8, 32], strides = [1, 1]} : vector<8x128xf32> to vector<8x32xf32>
    %265 = vector.extract_strided_slice %263 {offsets = [0, 32], sizes = [8, 32], strides = [1, 1]} : vector<8x128xf32> to vector<8x32xf32>
    %266 = vector.extract_strided_slice %258 {offsets = [0, 64], sizes = [8, 32], strides = [1, 1]} : vector<8x128xf32> to vector<8x32xf32>
    %267 = math.tanh %266 : vector<8x32xf32>
    %268 = vector.extract_strided_slice %263 {offsets = [0, 96], sizes = [8, 32], strides = [1, 1]} : vector<8x128xf32> to vector<8x32xf32>
    %269 = arith.mulf %265, %253 : vector<8x32xf32>
    %270 = arith.mulf %264, %267 : vector<8x32xf32>
    %271 = arith.addf %269, %270 : vector<8x32xf32>
    %272 = math.tanh %271 : vector<8x32xf32>
    %273 = arith.mulf %268, %272 : vector<8x32xf32>
    %274 = vector.extract_strided_slice %151 {offsets = [56, 0], sizes = [8, 128], strides = [1, 1]} : vector<64x128xf32> to vector<8x128xf32>
    %cst_42 = arith.constant dense<0.000000e+00> : vector<8x128xf32>
    %275 = tpu.matmul %273, %152, %cst_42 {dimension_numbers = #tpu.dot_dimension_numbers<[1], [0], [0], [1], [0, 0, 1, 1], [], []>} : vector<8x32xf32>, vector<32x128xf32>, vector<8x128xf32> -> vector<8x128xf32>
    %276 = arith.addf %274, %275 : vector<8x128xf32>
    %277 = arith.negf %276 : vector<8x128xf32>
    %278 = math.exp %277 : vector<8x128xf32>
    %cst_43 = arith.constant 1.000000e+00 : f32
    %279 = vector.broadcast %cst_43 : f32 to vector<8x128xf32>
    %280 = arith.addf %279, %278 : vector<8x128xf32>
    %281 = arith.divf %279, %280 : vector<8x128xf32>
    %282 = vector.extract_strided_slice %281 {offsets = [0, 0], sizes = [8, 32], strides = [1, 1]} : vector<8x128xf32> to vector<8x32xf32>
    %283 = vector.extract_strided_slice %281 {offsets = [0, 32], sizes = [8, 32], strides = [1, 1]} : vector<8x128xf32> to vector<8x32xf32>
    %284 = vector.extract_strided_slice %276 {offsets = [0, 64], sizes = [8, 32], strides = [1, 1]} : vector<8x128xf32> to vector<8x32xf32>
    %285 = math.tanh %284 : vector<8x32xf32>
    %286 = vector.extract_strided_slice %281 {offsets = [0, 96], sizes = [8, 32], strides = [1, 1]} : vector<8x128xf32> to vector<8x32xf32>
    %287 = arith.mulf %283, %271 : vector<8x32xf32>
    %288 = arith.mulf %282, %285 : vector<8x32xf32>
    %289 = arith.addf %287, %288 : vector<8x32xf32>
    %290 = math.tanh %289 : vector<8x32xf32>
    %291 = arith.mulf %286, %290 : vector<8x32xf32>
    %292 = tpu.concatenate %165, %183, %201, %219, %237, %255, %273, %291 in 0 : vector<8x32xf32>, vector<8x32xf32>, vector<8x32xf32>, vector<8x32xf32>, vector<8x32xf32>, vector<8x32xf32>, vector<8x32xf32>, vector<8x32xf32> -> vector<64x32xf32>
    %c0_44 = arith.constant 0 : index
    %c0_45 = arith.constant 0 : index
    %293 = vector.load %arg7[%c0_44, %c0_45] : memref<32x128xf32, #tpu.memory_space<vmem>>, vector<32x128xf32>
    %cst_46 = arith.constant dense<0.000000e+00> : vector<64x128xf32>
    %294 = tpu.matmul %292, %293, %cst_46 {dimension_numbers = #tpu.dot_dimension_numbers<[1], [0], [0], [1], [0, 0, 1, 1], [], []>} : vector<64x32xf32>, vector<32x128xf32>, vector<64x128xf32> -> vector<64x128xf32>
    %c0_47 = arith.constant 0 : index
    %c0_48 = arith.constant 0 : index
    %295 = vector.load %arg9[%c0_47, %c0_48] : memref<1x128xf32, #tpu.memory_space<vmem>>, vector<1x128xf32>
    %296 = vector.broadcast %295 : vector<1x128xf32> to vector<64x128xf32>
    %297 = arith.addf %294, %296 : vector<64x128xf32>
    %c0_49 = arith.constant 0 : index
    %c0_50 = arith.constant 0 : index
    %298 = vector.load %arg8[%c0_49, %c0_50] : memref<32x128xf32, #tpu.memory_space<vmem>>, vector<32x128xf32>
    %299 = vector.extract_strided_slice %297 {offsets = [0, 0], sizes = [8, 128], strides = [1, 1]} : vector<64x128xf32> to vector<8x128xf32>
    %300 = arith.negf %299 : vector<8x128xf32>
    %301 = math.exp %300 : vector<8x128xf32>
    %cst_51 = arith.constant 1.000000e+00 : f32
    %302 = vector.broadcast %cst_51 : f32 to vector<8x128xf32>
    %303 = arith.addf %302, %301 : vector<8x128xf32>
    %304 = arith.divf %302, %303 : vector<8x128xf32>
    %305 = vector.extract_strided_slice %304 {offsets = [0, 0], sizes = [8, 32], strides = [1, 1]} : vector<8x128xf32> to vector<8x32xf32>
    %306 = vector.extract_strided_slice %299 {offsets = [0, 64], sizes = [8, 32], strides = [1, 1]} : vector<8x128xf32> to vector<8x32xf32>
    %307 = math.tanh %306 : vector<8x32xf32>
    %308 = vector.extract_strided_slice %304 {offsets = [0, 96], sizes = [8, 32], strides = [1, 1]} : vector<8x128xf32> to vector<8x32xf32>
    %309 = arith.mulf %305, %307 : vector<8x32xf32>
    %310 = math.tanh %309 : vector<8x32xf32>
    %311 = arith.mulf %308, %310 : vector<8x32xf32>
    %312 = vector.extract_strided_slice %297 {offsets = [8, 0], sizes = [8, 128], strides = [1, 1]} : vector<64x128xf32> to vector<8x128xf32>
    %cst_52 = arith.constant dense<0.000000e+00> : vector<8x128xf32>
    %313 = tpu.matmul %311, %298, %cst_52 {dimension_numbers = #tpu.dot_dimension_numbers<[1], [0], [0], [1], [0, 0, 1, 1], [], []>} : vector<8x32xf32>, vector<32x128xf32>, vector<8x128xf32> -> vector<8x128xf32>
    %314 = arith.addf %312, %313 : vector<8x128xf32>
    %315 = arith.negf %314 : vector<8x128xf32>
    %316 = math.exp %315 : vector<8x128xf32>
    %cst_53 = arith.constant 1.000000e+00 : f32
    %317 = vector.broadcast %cst_53 : f32 to vector<8x128xf32>
    %318 = arith.addf %317, %316 : vector<8x128xf32>
    %319 = arith.divf %317, %318 : vector<8x128xf32>
    %320 = vector.extract_strided_slice %319 {offsets = [0, 0], sizes = [8, 32], strides = [1, 1]} : vector<8x128xf32> to vector<8x32xf32>
    %321 = vector.extract_strided_slice %319 {offsets = [0, 32], sizes = [8, 32], strides = [1, 1]} : vector<8x128xf32> to vector<8x32xf32>
    %322 = vector.extract_strided_slice %314 {offsets = [0, 64], sizes = [8, 32], strides = [1, 1]} : vector<8x128xf32> to vector<8x32xf32>
    %323 = math.tanh %322 : vector<8x32xf32>
    %324 = vector.extract_strided_slice %319 {offsets = [0, 96], sizes = [8, 32], strides = [1, 1]} : vector<8x128xf32> to vector<8x32xf32>
    %325 = arith.mulf %321, %309 : vector<8x32xf32>
    %326 = arith.mulf %320, %323 : vector<8x32xf32>
    %327 = arith.addf %325, %326 : vector<8x32xf32>
    %328 = math.tanh %327 : vector<8x32xf32>
    %329 = arith.mulf %324, %328 : vector<8x32xf32>
    %330 = vector.extract_strided_slice %297 {offsets = [16, 0], sizes = [8, 128], strides = [1, 1]} : vector<64x128xf32> to vector<8x128xf32>
    %cst_54 = arith.constant dense<0.000000e+00> : vector<8x128xf32>
    %331 = tpu.matmul %329, %298, %cst_54 {dimension_numbers = #tpu.dot_dimension_numbers<[1], [0], [0], [1], [0, 0, 1, 1], [], []>} : vector<8x32xf32>, vector<32x128xf32>, vector<8x128xf32> -> vector<8x128xf32>
    %332 = arith.addf %330, %331 : vector<8x128xf32>
    %333 = arith.negf %332 : vector<8x128xf32>
    %334 = math.exp %333 : vector<8x128xf32>
    %cst_55 = arith.constant 1.000000e+00 : f32
    %335 = vector.broadcast %cst_55 : f32 to vector<8x128xf32>
    %336 = arith.addf %335, %334 : vector<8x128xf32>
    %337 = arith.divf %335, %336 : vector<8x128xf32>
    %338 = vector.extract_strided_slice %337 {offsets = [0, 0], sizes = [8, 32], strides = [1, 1]} : vector<8x128xf32> to vector<8x32xf32>
    %339 = vector.extract_strided_slice %337 {offsets = [0, 32], sizes = [8, 32], strides = [1, 1]} : vector<8x128xf32> to vector<8x32xf32>
    %340 = vector.extract_strided_slice %332 {offsets = [0, 64], sizes = [8, 32], strides = [1, 1]} : vector<8x128xf32> to vector<8x32xf32>
    %341 = math.tanh %340 : vector<8x32xf32>
    %342 = vector.extract_strided_slice %337 {offsets = [0, 96], sizes = [8, 32], strides = [1, 1]} : vector<8x128xf32> to vector<8x32xf32>
    %343 = arith.mulf %339, %327 : vector<8x32xf32>
    %344 = arith.mulf %338, %341 : vector<8x32xf32>
    %345 = arith.addf %343, %344 : vector<8x32xf32>
    %346 = math.tanh %345 : vector<8x32xf32>
    %347 = arith.mulf %342, %346 : vector<8x32xf32>
    %348 = vector.extract_strided_slice %297 {offsets = [24, 0], sizes = [8, 128], strides = [1, 1]} : vector<64x128xf32> to vector<8x128xf32>
    %cst_56 = arith.constant dense<0.000000e+00> : vector<8x128xf32>
    %349 = tpu.matmul %347, %298, %cst_56 {dimension_numbers = #tpu.dot_dimension_numbers<[1], [0], [0], [1], [0, 0, 1, 1], [], []>} : vector<8x32xf32>, vector<32x128xf32>, vector<8x128xf32> -> vector<8x128xf32>
    %350 = arith.addf %348, %349 : vector<8x128xf32>
    %351 = arith.negf %350 : vector<8x128xf32>
    %352 = math.exp %351 : vector<8x128xf32>
    %cst_57 = arith.constant 1.000000e+00 : f32
    %353 = vector.broadcast %cst_57 : f32 to vector<8x128xf32>
    %354 = arith.addf %353, %352 : vector<8x128xf32>
    %355 = arith.divf %353, %354 : vector<8x128xf32>
    %356 = vector.extract_strided_slice %355 {offsets = [0, 0], sizes = [8, 32], strides = [1, 1]} : vector<8x128xf32> to vector<8x32xf32>
    %357 = vector.extract_strided_slice %355 {offsets = [0, 32], sizes = [8, 32], strides = [1, 1]} : vector<8x128xf32> to vector<8x32xf32>
    %358 = vector.extract_strided_slice %350 {offsets = [0, 64], sizes = [8, 32], strides = [1, 1]} : vector<8x128xf32> to vector<8x32xf32>
    %359 = math.tanh %358 : vector<8x32xf32>
    %360 = vector.extract_strided_slice %355 {offsets = [0, 96], sizes = [8, 32], strides = [1, 1]} : vector<8x128xf32> to vector<8x32xf32>
    %361 = arith.mulf %357, %345 : vector<8x32xf32>
    %362 = arith.mulf %356, %359 : vector<8x32xf32>
    %363 = arith.addf %361, %362 : vector<8x32xf32>
    %364 = math.tanh %363 : vector<8x32xf32>
    %365 = arith.mulf %360, %364 : vector<8x32xf32>
    %366 = vector.extract_strided_slice %297 {offsets = [32, 0], sizes = [8, 128], strides = [1, 1]} : vector<64x128xf32> to vector<8x128xf32>
    %cst_58 = arith.constant dense<0.000000e+00> : vector<8x128xf32>
    %367 = tpu.matmul %365, %298, %cst_58 {dimension_numbers = #tpu.dot_dimension_numbers<[1], [0], [0], [1], [0, 0, 1, 1], [], []>} : vector<8x32xf32>, vector<32x128xf32>, vector<8x128xf32> -> vector<8x128xf32>
    %368 = arith.addf %366, %367 : vector<8x128xf32>
    %369 = arith.negf %368 : vector<8x128xf32>
    %370 = math.exp %369 : vector<8x128xf32>
    %cst_59 = arith.constant 1.000000e+00 : f32
    %371 = vector.broadcast %cst_59 : f32 to vector<8x128xf32>
    %372 = arith.addf %371, %370 : vector<8x128xf32>
    %373 = arith.divf %371, %372 : vector<8x128xf32>
    %374 = vector.extract_strided_slice %373 {offsets = [0, 0], sizes = [8, 32], strides = [1, 1]} : vector<8x128xf32> to vector<8x32xf32>
    %375 = vector.extract_strided_slice %373 {offsets = [0, 32], sizes = [8, 32], strides = [1, 1]} : vector<8x128xf32> to vector<8x32xf32>
    %376 = vector.extract_strided_slice %368 {offsets = [0, 64], sizes = [8, 32], strides = [1, 1]} : vector<8x128xf32> to vector<8x32xf32>
    %377 = math.tanh %376 : vector<8x32xf32>
    %378 = vector.extract_strided_slice %373 {offsets = [0, 96], sizes = [8, 32], strides = [1, 1]} : vector<8x128xf32> to vector<8x32xf32>
    %379 = arith.mulf %375, %363 : vector<8x32xf32>
    %380 = arith.mulf %374, %377 : vector<8x32xf32>
    %381 = arith.addf %379, %380 : vector<8x32xf32>
    %382 = math.tanh %381 : vector<8x32xf32>
    %383 = arith.mulf %378, %382 : vector<8x32xf32>
    %384 = vector.extract_strided_slice %297 {offsets = [40, 0], sizes = [8, 128], strides = [1, 1]} : vector<64x128xf32> to vector<8x128xf32>
    %cst_60 = arith.constant dense<0.000000e+00> : vector<8x128xf32>
    %385 = tpu.matmul %383, %298, %cst_60 {dimension_numbers = #tpu.dot_dimension_numbers<[1], [0], [0], [1], [0, 0, 1, 1], [], []>} : vector<8x32xf32>, vector<32x128xf32>, vector<8x128xf32> -> vector<8x128xf32>
    %386 = arith.addf %384, %385 : vector<8x128xf32>
    %387 = arith.negf %386 : vector<8x128xf32>
    %388 = math.exp %387 : vector<8x128xf32>
    %cst_61 = arith.constant 1.000000e+00 : f32
    %389 = vector.broadcast %cst_61 : f32 to vector<8x128xf32>
    %390 = arith.addf %389, %388 : vector<8x128xf32>
    %391 = arith.divf %389, %390 : vector<8x128xf32>
    %392 = vector.extract_strided_slice %391 {offsets = [0, 0], sizes = [8, 32], strides = [1, 1]} : vector<8x128xf32> to vector<8x32xf32>
    %393 = vector.extract_strided_slice %391 {offsets = [0, 32], sizes = [8, 32], strides = [1, 1]} : vector<8x128xf32> to vector<8x32xf32>
    %394 = vector.extract_strided_slice %386 {offsets = [0, 64], sizes = [8, 32], strides = [1, 1]} : vector<8x128xf32> to vector<8x32xf32>
    %395 = math.tanh %394 : vector<8x32xf32>
    %396 = vector.extract_strided_slice %391 {offsets = [0, 96], sizes = [8, 32], strides = [1, 1]} : vector<8x128xf32> to vector<8x32xf32>
    %397 = arith.mulf %393, %381 : vector<8x32xf32>
    %398 = arith.mulf %392, %395 : vector<8x32xf32>
    %399 = arith.addf %397, %398 : vector<8x32xf32>
    %400 = math.tanh %399 : vector<8x32xf32>
    %401 = arith.mulf %396, %400 : vector<8x32xf32>
    %402 = vector.extract_strided_slice %297 {offsets = [48, 0], sizes = [8, 128], strides = [1, 1]} : vector<64x128xf32> to vector<8x128xf32>
    %cst_62 = arith.constant dense<0.000000e+00> : vector<8x128xf32>
    %403 = tpu.matmul %401, %298, %cst_62 {dimension_numbers = #tpu.dot_dimension_numbers<[1], [0], [0], [1], [0, 0, 1, 1], [], []>} : vector<8x32xf32>, vector<32x128xf32>, vector<8x128xf32> -> vector<8x128xf32>
    %404 = arith.addf %402, %403 : vector<8x128xf32>
    %405 = arith.negf %404 : vector<8x128xf32>
    %406 = math.exp %405 : vector<8x128xf32>
    %cst_63 = arith.constant 1.000000e+00 : f32
    %407 = vector.broadcast %cst_63 : f32 to vector<8x128xf32>
    %408 = arith.addf %407, %406 : vector<8x128xf32>
    %409 = arith.divf %407, %408 : vector<8x128xf32>
    %410 = vector.extract_strided_slice %409 {offsets = [0, 0], sizes = [8, 32], strides = [1, 1]} : vector<8x128xf32> to vector<8x32xf32>
    %411 = vector.extract_strided_slice %409 {offsets = [0, 32], sizes = [8, 32], strides = [1, 1]} : vector<8x128xf32> to vector<8x32xf32>
    %412 = vector.extract_strided_slice %404 {offsets = [0, 64], sizes = [8, 32], strides = [1, 1]} : vector<8x128xf32> to vector<8x32xf32>
    %413 = math.tanh %412 : vector<8x32xf32>
    %414 = vector.extract_strided_slice %409 {offsets = [0, 96], sizes = [8, 32], strides = [1, 1]} : vector<8x128xf32> to vector<8x32xf32>
    %415 = arith.mulf %411, %399 : vector<8x32xf32>
    %416 = arith.mulf %410, %413 : vector<8x32xf32>
    %417 = arith.addf %415, %416 : vector<8x32xf32>
    %418 = math.tanh %417 : vector<8x32xf32>
    %419 = arith.mulf %414, %418 : vector<8x32xf32>
    %420 = vector.extract_strided_slice %297 {offsets = [56, 0], sizes = [8, 128], strides = [1, 1]} : vector<64x128xf32> to vector<8x128xf32>
    %cst_64 = arith.constant dense<0.000000e+00> : vector<8x128xf32>
    %421 = tpu.matmul %419, %298, %cst_64 {dimension_numbers = #tpu.dot_dimension_numbers<[1], [0], [0], [1], [0, 0, 1, 1], [], []>} : vector<8x32xf32>, vector<32x128xf32>, vector<8x128xf32> -> vector<8x128xf32>
    %422 = arith.addf %420, %421 : vector<8x128xf32>
    %423 = arith.negf %422 : vector<8x128xf32>
    %424 = math.exp %423 : vector<8x128xf32>
    %cst_65 = arith.constant 1.000000e+00 : f32
    %425 = vector.broadcast %cst_65 : f32 to vector<8x128xf32>
    %426 = arith.addf %425, %424 : vector<8x128xf32>
    %427 = arith.divf %425, %426 : vector<8x128xf32>
    %428 = vector.extract_strided_slice %427 {offsets = [0, 0], sizes = [8, 32], strides = [1, 1]} : vector<8x128xf32> to vector<8x32xf32>
    %429 = vector.extract_strided_slice %427 {offsets = [0, 32], sizes = [8, 32], strides = [1, 1]} : vector<8x128xf32> to vector<8x32xf32>
    %430 = vector.extract_strided_slice %422 {offsets = [0, 64], sizes = [8, 32], strides = [1, 1]} : vector<8x128xf32> to vector<8x32xf32>
    %431 = math.tanh %430 : vector<8x32xf32>
    %432 = vector.extract_strided_slice %427 {offsets = [0, 96], sizes = [8, 32], strides = [1, 1]} : vector<8x128xf32> to vector<8x32xf32>
    %433 = arith.mulf %429, %417 : vector<8x32xf32>
    %434 = arith.mulf %428, %431 : vector<8x32xf32>
    %435 = arith.addf %433, %434 : vector<8x32xf32>
    %436 = math.tanh %435 : vector<8x32xf32>
    %437 = arith.mulf %432, %436 : vector<8x32xf32>
    %438 = tpu.concatenate %311, %329, %347, %365, %383, %401, %419, %437 in 0 : vector<8x32xf32>, vector<8x32xf32>, vector<8x32xf32>, vector<8x32xf32>, vector<8x32xf32>, vector<8x32xf32>, vector<8x32xf32>, vector<8x32xf32> -> vector<64x32xf32>
    %c0_66 = arith.constant 0 : index
    %c0_67 = arith.constant 0 : index
    %439 = vector.load %arg10[%c0_66, %c0_67] : memref<32x128xf32, #tpu.memory_space<vmem>>, vector<32x128xf32>
    %cst_68 = arith.constant dense<0.000000e+00> : vector<64x128xf32>
    %440 = tpu.matmul %438, %439, %cst_68 {dimension_numbers = #tpu.dot_dimension_numbers<[1], [0], [0], [1], [0, 0, 1, 1], [], []>} : vector<64x32xf32>, vector<32x128xf32>, vector<64x128xf32> -> vector<64x128xf32>
    %c0_69 = arith.constant 0 : index
    %c0_70 = arith.constant 0 : index
    %441 = vector.load %arg12[%c0_69, %c0_70] : memref<1x128xf32, #tpu.memory_space<vmem>>, vector<1x128xf32>
    %442 = vector.broadcast %441 : vector<1x128xf32> to vector<64x128xf32>
    %443 = arith.addf %440, %442 : vector<64x128xf32>
    %c0_71 = arith.constant 0 : index
    %c0_72 = arith.constant 0 : index
    %444 = vector.load %arg11[%c0_71, %c0_72] : memref<32x128xf32, #tpu.memory_space<vmem>>, vector<32x128xf32>
    %445 = vector.extract_strided_slice %443 {offsets = [0, 0], sizes = [8, 128], strides = [1, 1]} : vector<64x128xf32> to vector<8x128xf32>
    %446 = arith.negf %445 : vector<8x128xf32>
    %447 = math.exp %446 : vector<8x128xf32>
    %cst_73 = arith.constant 1.000000e+00 : f32
    %448 = vector.broadcast %cst_73 : f32 to vector<8x128xf32>
    %449 = arith.addf %448, %447 : vector<8x128xf32>
    %450 = arith.divf %448, %449 : vector<8x128xf32>
    %451 = vector.extract_strided_slice %450 {offsets = [0, 0], sizes = [8, 32], strides = [1, 1]} : vector<8x128xf32> to vector<8x32xf32>
    %452 = vector.extract_strided_slice %445 {offsets = [0, 64], sizes = [8, 32], strides = [1, 1]} : vector<8x128xf32> to vector<8x32xf32>
    %453 = math.tanh %452 : vector<8x32xf32>
    %454 = vector.extract_strided_slice %450 {offsets = [0, 96], sizes = [8, 32], strides = [1, 1]} : vector<8x128xf32> to vector<8x32xf32>
    %455 = arith.mulf %451, %453 : vector<8x32xf32>
    %456 = math.tanh %455 : vector<8x32xf32>
    %457 = arith.mulf %454, %456 : vector<8x32xf32>
    %458 = vector.extract_strided_slice %443 {offsets = [8, 0], sizes = [8, 128], strides = [1, 1]} : vector<64x128xf32> to vector<8x128xf32>
    %cst_74 = arith.constant dense<0.000000e+00> : vector<8x128xf32>
    %459 = tpu.matmul %457, %444, %cst_74 {dimension_numbers = #tpu.dot_dimension_numbers<[1], [0], [0], [1], [0, 0, 1, 1], [], []>} : vector<8x32xf32>, vector<32x128xf32>, vector<8x128xf32> -> vector<8x128xf32>
    %460 = arith.addf %458, %459 : vector<8x128xf32>
    %461 = arith.negf %460 : vector<8x128xf32>
    %462 = math.exp %461 : vector<8x128xf32>
    %cst_75 = arith.constant 1.000000e+00 : f32
    %463 = vector.broadcast %cst_75 : f32 to vector<8x128xf32>
    %464 = arith.addf %463, %462 : vector<8x128xf32>
    %465 = arith.divf %463, %464 : vector<8x128xf32>
    %466 = vector.extract_strided_slice %465 {offsets = [0, 0], sizes = [8, 32], strides = [1, 1]} : vector<8x128xf32> to vector<8x32xf32>
    %467 = vector.extract_strided_slice %465 {offsets = [0, 32], sizes = [8, 32], strides = [1, 1]} : vector<8x128xf32> to vector<8x32xf32>
    %468 = vector.extract_strided_slice %460 {offsets = [0, 64], sizes = [8, 32], strides = [1, 1]} : vector<8x128xf32> to vector<8x32xf32>
    %469 = math.tanh %468 : vector<8x32xf32>
    %470 = vector.extract_strided_slice %465 {offsets = [0, 96], sizes = [8, 32], strides = [1, 1]} : vector<8x128xf32> to vector<8x32xf32>
    %471 = arith.mulf %467, %455 : vector<8x32xf32>
    %472 = arith.mulf %466, %469 : vector<8x32xf32>
    %473 = arith.addf %471, %472 : vector<8x32xf32>
    %474 = math.tanh %473 : vector<8x32xf32>
    %475 = arith.mulf %470, %474 : vector<8x32xf32>
    %476 = vector.extract_strided_slice %443 {offsets = [16, 0], sizes = [8, 128], strides = [1, 1]} : vector<64x128xf32> to vector<8x128xf32>
    %cst_76 = arith.constant dense<0.000000e+00> : vector<8x128xf32>
    %477 = tpu.matmul %475, %444, %cst_76 {dimension_numbers = #tpu.dot_dimension_numbers<[1], [0], [0], [1], [0, 0, 1, 1], [], []>} : vector<8x32xf32>, vector<32x128xf32>, vector<8x128xf32> -> vector<8x128xf32>
    %478 = arith.addf %476, %477 : vector<8x128xf32>
    %479 = arith.negf %478 : vector<8x128xf32>
    %480 = math.exp %479 : vector<8x128xf32>
    %cst_77 = arith.constant 1.000000e+00 : f32
    %481 = vector.broadcast %cst_77 : f32 to vector<8x128xf32>
    %482 = arith.addf %481, %480 : vector<8x128xf32>
    %483 = arith.divf %481, %482 : vector<8x128xf32>
    %484 = vector.extract_strided_slice %483 {offsets = [0, 0], sizes = [8, 32], strides = [1, 1]} : vector<8x128xf32> to vector<8x32xf32>
    %485 = vector.extract_strided_slice %483 {offsets = [0, 32], sizes = [8, 32], strides = [1, 1]} : vector<8x128xf32> to vector<8x32xf32>
    %486 = vector.extract_strided_slice %478 {offsets = [0, 64], sizes = [8, 32], strides = [1, 1]} : vector<8x128xf32> to vector<8x32xf32>
    %487 = math.tanh %486 : vector<8x32xf32>
    %488 = vector.extract_strided_slice %483 {offsets = [0, 96], sizes = [8, 32], strides = [1, 1]} : vector<8x128xf32> to vector<8x32xf32>
    %489 = arith.mulf %485, %473 : vector<8x32xf32>
    %490 = arith.mulf %484, %487 : vector<8x32xf32>
    %491 = arith.addf %489, %490 : vector<8x32xf32>
    %492 = math.tanh %491 : vector<8x32xf32>
    %493 = arith.mulf %488, %492 : vector<8x32xf32>
    %494 = vector.extract_strided_slice %443 {offsets = [24, 0], sizes = [8, 128], strides = [1, 1]} : vector<64x128xf32> to vector<8x128xf32>
    %cst_78 = arith.constant dense<0.000000e+00> : vector<8x128xf32>
    %495 = tpu.matmul %493, %444, %cst_78 {dimension_numbers = #tpu.dot_dimension_numbers<[1], [0], [0], [1], [0, 0, 1, 1], [], []>} : vector<8x32xf32>, vector<32x128xf32>, vector<8x128xf32> -> vector<8x128xf32>
    %496 = arith.addf %494, %495 : vector<8x128xf32>
    %497 = arith.negf %496 : vector<8x128xf32>
    %498 = math.exp %497 : vector<8x128xf32>
    %cst_79 = arith.constant 1.000000e+00 : f32
    %499 = vector.broadcast %cst_79 : f32 to vector<8x128xf32>
    %500 = arith.addf %499, %498 : vector<8x128xf32>
    %501 = arith.divf %499, %500 : vector<8x128xf32>
    %502 = vector.extract_strided_slice %501 {offsets = [0, 0], sizes = [8, 32], strides = [1, 1]} : vector<8x128xf32> to vector<8x32xf32>
    %503 = vector.extract_strided_slice %501 {offsets = [0, 32], sizes = [8, 32], strides = [1, 1]} : vector<8x128xf32> to vector<8x32xf32>
    %504 = vector.extract_strided_slice %496 {offsets = [0, 64], sizes = [8, 32], strides = [1, 1]} : vector<8x128xf32> to vector<8x32xf32>
    %505 = math.tanh %504 : vector<8x32xf32>
    %506 = vector.extract_strided_slice %501 {offsets = [0, 96], sizes = [8, 32], strides = [1, 1]} : vector<8x128xf32> to vector<8x32xf32>
    %507 = arith.mulf %503, %491 : vector<8x32xf32>
    %508 = arith.mulf %502, %505 : vector<8x32xf32>
    %509 = arith.addf %507, %508 : vector<8x32xf32>
    %510 = math.tanh %509 : vector<8x32xf32>
    %511 = arith.mulf %506, %510 : vector<8x32xf32>
    %512 = vector.extract_strided_slice %443 {offsets = [32, 0], sizes = [8, 128], strides = [1, 1]} : vector<64x128xf32> to vector<8x128xf32>
    %cst_80 = arith.constant dense<0.000000e+00> : vector<8x128xf32>
    %513 = tpu.matmul %511, %444, %cst_80 {dimension_numbers = #tpu.dot_dimension_numbers<[1], [0], [0], [1], [0, 0, 1, 1], [], []>} : vector<8x32xf32>, vector<32x128xf32>, vector<8x128xf32> -> vector<8x128xf32>
    %514 = arith.addf %512, %513 : vector<8x128xf32>
    %515 = arith.negf %514 : vector<8x128xf32>
    %516 = math.exp %515 : vector<8x128xf32>
    %cst_81 = arith.constant 1.000000e+00 : f32
    %517 = vector.broadcast %cst_81 : f32 to vector<8x128xf32>
    %518 = arith.addf %517, %516 : vector<8x128xf32>
    %519 = arith.divf %517, %518 : vector<8x128xf32>
    %520 = vector.extract_strided_slice %519 {offsets = [0, 0], sizes = [8, 32], strides = [1, 1]} : vector<8x128xf32> to vector<8x32xf32>
    %521 = vector.extract_strided_slice %519 {offsets = [0, 32], sizes = [8, 32], strides = [1, 1]} : vector<8x128xf32> to vector<8x32xf32>
    %522 = vector.extract_strided_slice %514 {offsets = [0, 64], sizes = [8, 32], strides = [1, 1]} : vector<8x128xf32> to vector<8x32xf32>
    %523 = math.tanh %522 : vector<8x32xf32>
    %524 = vector.extract_strided_slice %519 {offsets = [0, 96], sizes = [8, 32], strides = [1, 1]} : vector<8x128xf32> to vector<8x32xf32>
    %525 = arith.mulf %521, %509 : vector<8x32xf32>
    %526 = arith.mulf %520, %523 : vector<8x32xf32>
    %527 = arith.addf %525, %526 : vector<8x32xf32>
    %528 = math.tanh %527 : vector<8x32xf32>
    %529 = arith.mulf %524, %528 : vector<8x32xf32>
    %530 = vector.extract_strided_slice %443 {offsets = [40, 0], sizes = [8, 128], strides = [1, 1]} : vector<64x128xf32> to vector<8x128xf32>
    %cst_82 = arith.constant dense<0.000000e+00> : vector<8x128xf32>
    %531 = tpu.matmul %529, %444, %cst_82 {dimension_numbers = #tpu.dot_dimension_numbers<[1], [0], [0], [1], [0, 0, 1, 1], [], []>} : vector<8x32xf32>, vector<32x128xf32>, vector<8x128xf32> -> vector<8x128xf32>
    %532 = arith.addf %530, %531 : vector<8x128xf32>
    %533 = arith.negf %532 : vector<8x128xf32>
    %534 = math.exp %533 : vector<8x128xf32>
    %cst_83 = arith.constant 1.000000e+00 : f32
    %535 = vector.broadcast %cst_83 : f32 to vector<8x128xf32>
    %536 = arith.addf %535, %534 : vector<8x128xf32>
    %537 = arith.divf %535, %536 : vector<8x128xf32>
    %538 = vector.extract_strided_slice %537 {offsets = [0, 0], sizes = [8, 32], strides = [1, 1]} : vector<8x128xf32> to vector<8x32xf32>
    %539 = vector.extract_strided_slice %537 {offsets = [0, 32], sizes = [8, 32], strides = [1, 1]} : vector<8x128xf32> to vector<8x32xf32>
    %540 = vector.extract_strided_slice %532 {offsets = [0, 64], sizes = [8, 32], strides = [1, 1]} : vector<8x128xf32> to vector<8x32xf32>
    %541 = math.tanh %540 : vector<8x32xf32>
    %542 = vector.extract_strided_slice %537 {offsets = [0, 96], sizes = [8, 32], strides = [1, 1]} : vector<8x128xf32> to vector<8x32xf32>
    %543 = arith.mulf %539, %527 : vector<8x32xf32>
    %544 = arith.mulf %538, %541 : vector<8x32xf32>
    %545 = arith.addf %543, %544 : vector<8x32xf32>
    %546 = math.tanh %545 : vector<8x32xf32>
    %547 = arith.mulf %542, %546 : vector<8x32xf32>
    %548 = vector.extract_strided_slice %443 {offsets = [48, 0], sizes = [8, 128], strides = [1, 1]} : vector<64x128xf32> to vector<8x128xf32>
    %cst_84 = arith.constant dense<0.000000e+00> : vector<8x128xf32>
    %549 = tpu.matmul %547, %444, %cst_84 {dimension_numbers = #tpu.dot_dimension_numbers<[1], [0], [0], [1], [0, 0, 1, 1], [], []>} : vector<8x32xf32>, vector<32x128xf32>, vector<8x128xf32> -> vector<8x128xf32>
    %550 = arith.addf %548, %549 : vector<8x128xf32>
    %551 = arith.negf %550 : vector<8x128xf32>
    %552 = math.exp %551 : vector<8x128xf32>
    %cst_85 = arith.constant 1.000000e+00 : f32
    %553 = vector.broadcast %cst_85 : f32 to vector<8x128xf32>
    %554 = arith.addf %553, %552 : vector<8x128xf32>
    %555 = arith.divf %553, %554 : vector<8x128xf32>
    %556 = vector.extract_strided_slice %555 {offsets = [0, 0], sizes = [8, 32], strides = [1, 1]} : vector<8x128xf32> to vector<8x32xf32>
    %557 = vector.extract_strided_slice %555 {offsets = [0, 32], sizes = [8, 32], strides = [1, 1]} : vector<8x128xf32> to vector<8x32xf32>
    %558 = vector.extract_strided_slice %550 {offsets = [0, 64], sizes = [8, 32], strides = [1, 1]} : vector<8x128xf32> to vector<8x32xf32>
    %559 = math.tanh %558 : vector<8x32xf32>
    %560 = vector.extract_strided_slice %555 {offsets = [0, 96], sizes = [8, 32], strides = [1, 1]} : vector<8x128xf32> to vector<8x32xf32>
    %561 = arith.mulf %557, %545 : vector<8x32xf32>
    %562 = arith.mulf %556, %559 : vector<8x32xf32>
    %563 = arith.addf %561, %562 : vector<8x32xf32>
    %564 = math.tanh %563 : vector<8x32xf32>
    %565 = arith.mulf %560, %564 : vector<8x32xf32>
    %566 = vector.extract_strided_slice %443 {offsets = [56, 0], sizes = [8, 128], strides = [1, 1]} : vector<64x128xf32> to vector<8x128xf32>
    %cst_86 = arith.constant dense<0.000000e+00> : vector<8x128xf32>
    %567 = tpu.matmul %565, %444, %cst_86 {dimension_numbers = #tpu.dot_dimension_numbers<[1], [0], [0], [1], [0, 0, 1, 1], [], []>} : vector<8x32xf32>, vector<32x128xf32>, vector<8x128xf32> -> vector<8x128xf32>
    %568 = arith.addf %566, %567 : vector<8x128xf32>
    %569 = arith.negf %568 : vector<8x128xf32>
    %570 = math.exp %569 : vector<8x128xf32>
    %cst_87 = arith.constant 1.000000e+00 : f32
    %571 = vector.broadcast %cst_87 : f32 to vector<8x128xf32>
    %572 = arith.addf %571, %570 : vector<8x128xf32>
    %573 = arith.divf %571, %572 : vector<8x128xf32>
    %574 = vector.extract_strided_slice %573 {offsets = [0, 0], sizes = [8, 32], strides = [1, 1]} : vector<8x128xf32> to vector<8x32xf32>
    %575 = vector.extract_strided_slice %573 {offsets = [0, 32], sizes = [8, 32], strides = [1, 1]} : vector<8x128xf32> to vector<8x32xf32>
    %576 = vector.extract_strided_slice %568 {offsets = [0, 64], sizes = [8, 32], strides = [1, 1]} : vector<8x128xf32> to vector<8x32xf32>
    %577 = math.tanh %576 : vector<8x32xf32>
    %578 = vector.extract_strided_slice %573 {offsets = [0, 96], sizes = [8, 32], strides = [1, 1]} : vector<8x128xf32> to vector<8x32xf32>
    %579 = arith.mulf %575, %563 : vector<8x32xf32>
    %580 = arith.mulf %574, %577 : vector<8x32xf32>
    %581 = arith.addf %579, %580 : vector<8x32xf32>
    %582 = math.tanh %581 : vector<8x32xf32>
    %583 = arith.mulf %578, %582 : vector<8x32xf32>
    %c0_88 = arith.constant 0 : index
    %c0_89 = arith.constant 0 : index
    %584 = vector.load %arg13[%c0_88, %c0_89] : memref<32x1xf32, #tpu.memory_space<vmem>>, vector<32x1xf32>
    %cst_90 = arith.constant dense<0.000000e+00> : vector<8x1xf32>
    %585 = tpu.matmul %583, %584, %cst_90 {dimension_numbers = #tpu.dot_dimension_numbers<[1], [0], [0], [1], [0, 0, 1, 1], [], []>} : vector<8x32xf32>, vector<32x1xf32>, vector<8x1xf32> -> vector<8x1xf32>
    %c0_91 = arith.constant 0 : index
    %c0_92 = arith.constant 0 : index
    %586 = vector.load %arg14[%c0_91, %c0_92] : memref<1x1xf32, #tpu.memory_space<vmem>>, vector<1x1xf32>
    %587 = vector.broadcast %586 : vector<1x1xf32> to vector<8x1xf32>
    %588 = arith.addf %585, %587 : vector<8x1xf32>
    %c0_93 = arith.constant 0 : index
    %c0_94 = arith.constant 0 : index
    %589 = vector.load %arg15[%c0_93, %c0_94] : memref<8x1xf32, #tpu.memory_space<vmem>>, vector<8x1xf32>
    tpu.vector_store %arg15[%c0_93, %c0_94], %588 {strides = array<i32>} : memref<8x1xf32, #tpu.memory_space<vmem>>, vector<8x1xf32>,
    return
  }
}

</mosaic_0001>

<llo_original>
// kernel: tpu_custom_call.1
$region0: #{tpu_custom_call.1}
  #allocation0 [shape = 'u32[]', space=smem, size = 0x4, offset = 0x4, fixed_abs, tag = 'smem constant byte address 0x4 - core index']
  #allocation1 [shape = 'u32[144,128]{1,0:T(1,128)}', space=vmem, size = 0x12000, scoped, tag = 'internal scratch']
  #allocation2 [shape = 'f32[1,1]{1,0:T(1,128)S(1)}', space=vmem, size = 0x200, scoped, tag = 'scoped memory for tpu_custom_call.1']
  %s0 = inlined_call_operand.vmem [shape: f32[64,4], index: 0, kind: input, shape index: {}]
  %s1 = inlined_call_operand.vmem [shape: f32[4,128], index: 1, kind: input, shape index: {}]
  %s2 = inlined_call_operand.vmem [shape: f32[32,128], index: 2, kind: input, shape index: {}]
  %s3 = inlined_call_operand.vmem [shape: f32[1,128], index: 3, kind: input, shape index: {}]
  %s4 = inlined_call_operand.vmem [shape: f32[32,128], index: 4, kind: input, shape index: {}]
  %s5 = inlined_call_operand.vmem [shape: f32[32,128], index: 5, kind: input, shape index: {}]
  %s6 = inlined_call_operand.vmem [shape: f32[1,128], index: 6, kind: input, shape index: {}]
  %s7 = inlined_call_operand.hbm [shape: f32[32,128], index: 7, kind: input, shape index: {}]
  %s8 = inlined_call_operand.hbm [shape: f32[32,128], index: 8, kind: input, shape index: {}]
  %s9 = inlined_call_operand.vmem [shape: f32[1,128], index: 9, kind: input, shape index: {}]
  %s10 = inlined_call_operand.hbm [shape: f32[32,128], index: 10, kind: input, shape index: {}]
  %s11 = inlined_call_operand.hbm [shape: f32[32,128], index: 11, kind: input, shape index: {}]
  %s12 = inlined_call_operand.vmem [shape: f32[1,128], index: 12, kind: input, shape index: {}]
  %s13 = inlined_call_operand.vmem [shape: f32[32,1], index: 13, kind: input, shape index: {}]
  %s14 = inlined_call_operand.<no memory space> [shape: f32[1,1], index: 14, kind: input, shape index: {}]
  %s15 = inlined_call_operand.vmem [shape: f32[8,1], index: 15, kind: output, shape index: {}]
  %s16 = sld [smem:[#allocation0]]
  $region86: #{tpu_custom_call.1} parent=0
    _
  %s18 = ssub.s32 1, %s16
  %s19 = scalar_select 0, %s18, %s16
  %v20 = vstv %s14
  %21 = vst [vmem:[#allocation2] sm:$0x1] %v20
  $region1: #{tpu_custom_call.1} parent=0
    #allocation3 [shape = 'u8[16384]{0}', space=vmem, size = 0x4000, scoped, tag = 'input window, operand 7, single buffered']
    #allocation4 [shape = 's32[1]{0}', space=sflag, size = 0x4, scoped, tag = 'scoped memory for tpu_custom_call.1']
    #allocation5 [shape = 'u8[16384]{0}', space=vmem, size = 0x4000, scoped, tag = 'input window, operand 8, single buffered']
    #allocation6 [shape = 's32[1]{0}', space=sflag, size = 0x4, scoped, tag = 'scoped memory for tpu_custom_call.1']
    #allocation7 [shape = 'u8[16384]{0}', space=vmem, size = 0x4000, scoped, tag = 'input window, operand 10, single buffered']
    #allocation8 [shape = 'u8[16384]{0}', space=vmem, size = 0x4000, scoped, tag = 'input window, operand 11, single buffered']
    #allocation9 [shape = 's32[1]{0}', space=sflag, size = 0x4, scoped, tag = 'scoped memory for tpu_custom_call.1']
    %22 = vsyncpa [#allocation4], 0
    %23 = vsyncpa [#allocation6], 0
    %24 = vsyncpa [#allocation9], 0
    // Predicated region
    $region2: #{tpu_custom_call.1} parent=1 // pred_check
      _
    $region3: #{tpu_custom_call.1} parent=1 // pred_check_branch
      %26 = sbr.rel (0) target = $region5
    $region4: #{tpu_custom_call.1} parent=1 // pred_region
      _
    $region5: #{tpu_custom_call.1} parent=1 // pred_fallthru
      _
    // Predicated region
    $region6: #{tpu_custom_call.1} parent=1 // pred_check
      _
    $region7: #{tpu_custom_call.1} parent=1 // pred_check_branch
      %28 = sbr.rel (0) target = $region9
    $region8: #{tpu_custom_call.1} parent=1 // pred_region
      _
    $region9: #{tpu_custom_call.1} parent=1 // pred_fallthru
      _
    // Predicated region
    $region10: #{tpu_custom_call.1} parent=1 // pred_check
      _
    $region11: #{tpu_custom_call.1} parent=1 // pred_check_branch
      %30 = sbr.rel (0) target = $region13
    $region12: #{tpu_custom_call.1} parent=1 // pred_region
      _
    $region13: #{tpu_custom_call.1} parent=1 // pred_fallthru
      _
    // Predicated region
    $region14: #{tpu_custom_call.1} parent=1 // pred_check
      _
    $region15: #{tpu_custom_call.1} parent=1 // pred_check_branch
      %32 = sbr.rel (0) target = $region17
    $region16: #{tpu_custom_call.1} parent=1 // pred_region
      _
    $region17: #{tpu_custom_call.1} parent=1 // pred_fallthru
      _
    // Predicated region
    $region18: #{tpu_custom_call.1} parent=1 // pred_check
      _
    $region19: #{tpu_custom_call.1} parent=1 // pred_check_branch
      %34 = sbr.rel (0) target = $region21
    $region20: #{tpu_custom_call.1} parent=1 // pred_region
      _
    $region21: #{tpu_custom_call.1} parent=1 // pred_fallthru
      _
    // Predicated region
    $region22: #{tpu_custom_call.1} parent=1 // pred_check
      _
    $region23: #{tpu_custom_call.1} parent=1 // pred_check_branch
      %36 = sbr.rel (0) target = $region25
    $region24: #{tpu_custom_call.1} parent=1 // pred_region
      _
    $region25: #{tpu_custom_call.1} parent=1 // pred_fallthru
      _
    // Predicated region
    $region26: #{tpu_custom_call.1} parent=1 // pred_check
      _
    $region27: #{tpu_custom_call.1} parent=1 // pred_check_branch
      %38 = sbr.rel (0) target = $region29
    $region28: #{tpu_custom_call.1} parent=1 // pred_region
      _
    $region29: #{tpu_custom_call.1} parent=1 // pred_fallthru
      _
    // Predicated region
    $region30: #{tpu_custom_call.1} parent=1 // pred_check
      _
    $region31: #{tpu_custom_call.1} parent=1 // pred_check_branch
      %40 = sbr.rel (0) target = $region33
    $region32: #{tpu_custom_call.1} parent=1 // pred_region
      %s42 = ssub.s32 512, 512
      %43 = vsyncadd [#allocation4], %s42
      %s44 = sshll.u32 [#allocation3], 4
      %s45 = int_to_ptr.vmem [resolvable:$true] %s44
      %50 = dma.hbm_to_vmem [thread:$0]  %s7, 512, %s45, [#allocation4], 128, 128, 8
    $region33: #{tpu_custom_call.1} parent=1 // pred_fallthru
      _
    // Predicated region
    $region34: #{tpu_custom_call.1} parent=1 // pred_check
      _
    $region35: #{tpu_custom_call.1} parent=1 // pred_check_branch
      %52 = sbr.rel (0) target = $region37
    $region36: #{tpu_custom_call.1} parent=1 // pred_region
      %s54 = ssub.s32 512, 512
      %55 = vsyncadd [#allocation6], %s54
      %s56 = sshll.u32 [#allocation5], 4
      %s57 = int_to_ptr.vmem [resolvable:$true] %s56
      %62 = dma.hbm_to_vmem [thread:$0]  %s8, 512, %s57, [#allocation6], 128, 128, 8
    $region37: #{tpu_custom_call.1} parent=1 // pred_fallthru
      _
    // Predicated region
    $region38: #{tpu_custom_call.1} parent=1 // pred_check
      _
    $region39: #{tpu_custom_call.1} parent=1 // pred_check_branch
      %64 = sbr.rel (0) target = $region41
    $region40: #{tpu_custom_call.1} parent=1 // pred_region
      _
    $region41: #{tpu_custom_call.1} parent=1 // pred_fallthru
      _
    // Predicated region
    $region42: #{tpu_custom_call.1} parent=1 // pred_check
      _
    $region43: #{tpu_custom_call.1} parent=1 // pred_check_branch
      %66 = sbr.rel (0) target = $region45
    $region44: #{tpu_custom_call.1} parent=1 // pred_region
      %s68 = ssub.s32 512, 512
      %69 = vsyncadd [#allocation6], %s68
      %s70 = sshll.u32 [#allocation7], 4
      %s71 = int_to_ptr.vmem [resolvable:$true] %s70
      %76 = dma.hbm_to_vmem [thread:$0]  %s10, 512, %s71, [#allocation6], 128, 128, 8
    $region45: #{tpu_custom_call.1} parent=1 // pred_fallthru
      _
    // Predicated region
    $region46: #{tpu_custom_call.1} parent=1 // pred_check
      _
    $region47: #{tpu_custom_call.1} parent=1 // pred_check_branch
      %78 = sbr.rel (0) target = $region49
    $region48: #{tpu_custom_call.1} parent=1 // pred_region
      %s80 = ssub.s32 512, 512
      %81 = vsyncadd [#allocation9], %s80
      %s82 = sshll.u32 [#allocation8], 4
      %s83 = int_to_ptr.vmem [resolvable:$true] %s82
      %88 = dma.hbm_to_vmem [thread:$0]  %s11, 512, %s83, [#allocation9], 128, 128, 8
    $region49: #{tpu_custom_call.1} parent=1 // pred_fallthru
      _
    // Predicated region
    $region50: #{tpu_custom_call.1} parent=1 // pred_check
      _
    $region51: #{tpu_custom_call.1} parent=1 // pred_check_branch
      %90 = sbr.rel (0) target = $region53
    $region52: #{tpu_custom_call.1} parent=1 // pred_region
      _
    $region53: #{tpu_custom_call.1} parent=1 // pred_fallthru
      _
    // Predicated region
    $region54: #{tpu_custom_call.1} parent=1 // pred_check
      _
    $region55: #{tpu_custom_call.1} parent=1 // pred_check_branch
      %92 = sbr.rel (0) target = $region57
    $region56: #{tpu_custom_call.1} parent=1 // pred_region
      _
    $region57: #{tpu_custom_call.1} parent=1 // pred_fallthru
      _
    // Predicated region
    $region58: #{tpu_custom_call.1} parent=1 // pred_check
      _
    $region59: #{tpu_custom_call.1} parent=1 // pred_check_branch
      %94 = sbr.rel (0) target = $region61
    $region60: #{tpu_custom_call.1} parent=1 // pred_region
      _
    $region61: #{tpu_custom_call.1} parent=1 // pred_fallthru
      _
    // Predicated region
    $region62: #{tpu_custom_call.1} parent=1 // pred_check
      _
    $region63: #{tpu_custom_call.1} parent=1 // pred_check_branch
      %96 = sbr.rel (0) target = $region65
    $region64: #{tpu_custom_call.1} parent=1 // pred_region
      %97 = dma.done [#allocation4], 512
    $region65: #{tpu_custom_call.1} parent=1 // pred_fallthru
      _
    // Predicated region
    $region66: #{tpu_custom_call.1} parent=1 // pred_check
      _
    $region67: #{tpu_custom_call.1} parent=1 // pred_check_branch
      %99 = sbr.rel (0) target = $region69
    $region68: #{tpu_custom_call.1} parent=1 // pred_region
      %100 = dma.done [#allocation6], 512
    $region69: #{tpu_custom_call.1} parent=1 // pred_fallthru
      _
    // Predicated region
    $region70: #{tpu_custom_call.1} parent=1 // pred_check
      _
    $region71: #{tpu_custom_call.1} parent=1 // pred_check_branch
      %102 = sbr.rel (0) target = $region73
    $region72: #{tpu_custom_call.1} parent=1 // pred_region
      %103 = dma.done [#allocation6], 512
    $region73: #{tpu_custom_call.1} parent=1 // pred_fallthru
      _
    // Predicated region
    $region74: #{tpu_custom_call.1} parent=1 // pred_check
      _
    $region75: #{tpu_custom_call.1} parent=1 // pred_check_branch
      %105 = sbr.rel (0) target = $region77
    $region76: #{tpu_custom_call.1} parent=1 // pred_region
      %106 = dma.done [#allocation9], 512
    $region77: #{tpu_custom_call.1} parent=1 // pred_fallthru
      _
    %v107 = vld [vmem:[%s0] sm:$0xff]
    %v108 = vld [vmem:[%s0 + $0x8] sm:$0xff]
    %v109 = vld [vmem:[%s0 + $0x10] sm:$0xff]
    %v110 = vld [vmem:[%s0 + $0x18] sm:$0xff]
    %v111 = vld [vmem:[%s0 + $0x20] sm:$0xff]
    %v112 = vld [vmem:[%s0 + $0x28] sm:$0xff]
    %v113 = vld [vmem:[%s0 + $0x30] sm:$0xff]
    %v114 = vld [vmem:[%s0 + $0x38] sm:$0xff]
    %v115 = vld [vmem:[%s1] sm:$0xf]
    %v116 = vld [vmem:[%s3] sm:$0x1]
    %v118 = vlaneseq
    %v119 = vshrl.u32 %v118, 7
    %v120 = vsub.s32 0, %v119
    %v121 = vrot.slane %v116, %v120
    %vm123 = vcmask 31744
    %v125 = vsel %vm123, %v107, 0
    %v128 = vsel %vm123, %v108, 0
    %v131 = vsel %vm123, %v109, 0
    %v134 = vsel %vm123, %v110, 0
    %v137 = vsel %vm123, %v111, 0
    %v140 = vsel %vm123, %v112, 0
    %v143 = vsel %vm123, %v113, 0
    %v146 = vsel %vm123, %v114, 0
    %vm148 = vcmask 1043456
    %v150 = vsel %vm148, %v115, 0
    %152 = vmatprep.subr.mxu0 0.0
    %153 = vmatpush1.msra.mxu0 0.0
    %154 = vmatprep.subr.mxu0 0.0
    %155 = vmatpush1.msra.mxu0 0.0
    %156 = vmatprep.subr.mxu0 0.0
    %157 = vmatpush1.msra.mxu0 0.0
    %158 = vmatprep.subr.mxu0 0.0
    %159 = vmatpush1.msra.mxu0 0.0
    %160 = vmatprep.subr.mxu0 0.0
    %161 = vmatpush1.msra.mxu0 0.0
    %162 = vmatprep.subr.mxu0 0.0
    %163 = vmatpush1.msra.mxu0 0.0
    %164 = vmatprep.subr.mxu0 0.0
    %165 = vmatpush1.msra.mxu0 0.0
    %166 = vmatprep.subr.mxu0 0.0
    %167 = vmatpush1.msra.mxu0 0.0
    %168 = vmatprep.subr.mxu0 0.0
    %169 = vmatpush1.msra.mxu0 0.0
    %170 = vmatprep.subr.mxu0 0.0
    %171 = vmatpush1.msra.mxu0 0.0
    %172 = vmatprep.subr.mxu0 0.0
    %173 = vmatpush1.msra.mxu0 0.0
    %174 = vmatprep.subr.mxu0 0.0
    %175 = vmatpush1.msra.mxu0 0.0
    %176 = vmatprep.subr.mxu0 0.0
    %177 = vmatpush1.msra.mxu0 0.0
    %178 = vmatprep.subr.mxu0 0.0
    %179 = vmatpush1.msra.mxu0 0.0
    %180 = vmatprep.subr.mxu0 0.0
    %181 = vmatpush1.msra.mxu0 0.0
    %182 = vmatprep.subr.mxu0 0.0
    %183 = vmatpush1.msra.mxu0 %v150
    %184 = vmatprep.subr.mxu0 0.0
    %185 = vmatpush2.msra.mxu0 0.0
    %186 = vmatprep.subr.mxu0 0.0
    %187 = vmatpush2.msra.mxu0 0.0
    %188 = vmatprep.subr.mxu0 0.0
    %189 = vmatpush2.msra.mxu0 0.0
    %190 = vmatprep.subr.mxu0 0.0
    %191 = vmatpush2.msra.mxu0 0.0
    %192 = vmatprep.subr.mxu0 0.0
    %193 = vmatpush2.msra.mxu0 0.0
    %194 = vmatprep.subr.mxu0 0.0
    %195 = vmatpush2.msra.mxu0 0.0
    %196 = vmatprep.subr.mxu0 0.0
    %197 = vmatpush2.msra.mxu0 0.0
    %198 = vmatprep.subr.mxu0 0.0
    %199 = vmatpush2.msra.mxu0 0.0
    %200 = vmatprep.subr.mxu0 0.0
    %201 = vmatpush2.msra.mxu0 0.0
    %202 = vmatprep.subr.mxu0 0.0
    %203 = vmatpush2.msra.mxu0 0.0
    %204 = vmatprep.subr.mxu0 0.0
    %205 = vmatpush2.msra.mxu0 0.0
    %206 = vmatprep.subr.mxu0 0.0
    %207 = vmatpush2.msra.mxu0 0.0
    %208 = vmatprep.subr.mxu0 0.0
    %209 = vmatpush2.msra.mxu0 0.0
    %210 = vmatprep.subr.mxu0 0.0
    %211 = vmatpush2.msra.mxu0 0.0
    %212 = vmatprep.subr.mxu0 0.0
    %213 = vmatpush2.msra.mxu0 0.0
    %214 = vmatprep.subr.mxu0 0.0
    %215 = vmatpush2.msra.mxu0 0.0
    %216 = vmatprep.mubr.f32.mxu0 0.0
    %217 = vmatmul.mubr.f32.gmra.mxu0 %v125
    %v218 = vpop.f32.mrf.mxu0
    %v219 = vadd.f32 %v121, %v218
    %v220 = vpop.f32.mrf.mxu0
    %221 = vmatprep.mubr.f32.mxu0 0.0
    %222 = vmatmul.mubr.f32.gmra.mxu0 %v128
    %v223 = vpop.f32.mrf.mxu0
    %v224 = vadd.f32 %v121, %v223
    %v225 = vpop.f32.mrf.mxu0
    %226 = vmatprep.mubr.f32.mxu0 0.0
    %227 = vmatmul.mubr.f32.gmra.mxu0 %v131
    %v228 = vpop.f32.mrf.mxu0
    %v229 = vadd.f32 %v121, %v228
    %v230 = vpop.f32.mrf.mxu0
    %231 = vmatprep.mubr.f32.mxu0 0.0
    %232 = vmatmul.mubr.f32.gmra.mxu0 %v134
    %v233 = vpop.f32.mrf.mxu0
    %v234 = vadd.f32 %v121, %v233
    %v235 = vpop.f32.mrf.mxu0
    %236 = vmatprep.mubr.f32.mxu0 0.0
    %237 = vmatmul.mubr.f32.gmra.mxu0 %v137
    %v238 = vpop.f32.mrf.mxu0
    %v239 = vadd.f32 %v121, %v238
    %v240 = vpop.f32.mrf.mxu0
    %241 = vmatprep.mubr.f32.mxu0 0.0
    %242 = vmatmul.mubr.f32.gmra.mxu0 %v140
    %v243 = vpop.f32.mrf.mxu0
    %v244 = vadd.f32 %v121, %v243
    %v245 = vpop.f32.mrf.mxu0
    %246 = vmatprep.mubr.f32.mxu0 0.0
    %247 = vmatmul.mubr.f32.gmra.mxu0 %v143
    %v248 = vpop.f32.mrf.mxu0
    %v249 = vadd.f32 %v121, %v248
    %v250 = vpop.f32.mrf.mxu0
    %251 = vmatprep.mubr.f32.mxu0 0.0
    %252 = vmatmul.mubr.f32.gmra.mxu0 %v146
    %v253 = vpop.f32.mrf.mxu0
    %v254 = vadd.f32 %v121, %v253
    %v255 = vpop.f32.mrf.mxu0
    %256 = vdwg.mxu0
    %v257 = vld [vmem:[%s2] sm:$0xff]
    %v258 = vld [vmem:[%s2 + $0x8] sm:$0xff]
    %v259 = vld [vmem:[%s2 + $0x10] sm:$0xff]
    %v260 = vld [vmem:[%s2 + $0x18] sm:$0xff]
    %v261 = vxor.u32 %v219, 2147483648
    %v262 = vmul.f32 %v261, 1.442695
    %v263 = vpow.pop %v262
    %v264 = vadd.f32 %v263, 1.0
    %v265 = vrcp.pop %v264
    %v266 = vmul.f32 1.0, %v265
    %v267 = vtanh.pop %v219
    %269 = vrot.lane.b32.xlu0 %v267, 64
    %v270 = vpop.permute.xlu0 %269
    %v272 = vmul.f32 %v266, %v270
    %v273 = vtanh.pop %v272
    %275 = vrot.lane.b32.xlu0 %v273, 96
    %v276 = vpop.permute.xlu0 %275
    %v278 = vmul.f32 %v266, %v276
    %280 = vrot.lane.b32.xlu0 %v278, 32
    %v281 = vpop.permute.xlu0 %280
    %vm282 = vcmask 261120
    %v283 = vsel %vm282, %v281, 0
    %285 = vmatprep.subr.mxu0 0.0
    %286 = vmatpush1.msra.mxu0 0.0
    %287 = vmatprep.subr.mxu0 0.0
    %288 = vmatpush1.msra.mxu0 0.0
    %289 = vmatprep.subr.mxu0 0.0
    %290 = vmatpush1.msra.mxu0 0.0
    %291 = vmatprep.subr.mxu0 0.0
    %292 = vmatpush1.msra.mxu0 0.0
    %293 = vmatprep.subr.mxu0 0.0
    %294 = vmatpush1.msra.mxu0 0.0
    %295 = vmatprep.subr.mxu0 0.0
    %296 = vmatpush1.msra.mxu0 0.0
    %297 = vmatprep.subr.mxu0 0.0
    %298 = vmatpush1.msra.mxu0 0.0
    %299 = vmatprep.subr.mxu0 0.0
    %300 = vmatpush1.msra.mxu0 0.0
    %301 = vmatprep.subr.mxu0 0.0
    %302 = vmatpush1.msra.mxu0 0.0
    %303 = vmatprep.subr.mxu0 0.0
    %304 = vmatpush1.msra.mxu0 0.0
    %305 = vmatprep.subr.mxu0 0.0
    %306 = vmatpush1.msra.mxu0 0.0
    %307 = vmatprep.subr.mxu0 0.0
    %308 = vmatpush1.msra.mxu0 0.0
    %309 = vmatprep.subr.mxu0 0.0
    %310 = vmatpush1.msra.mxu0 %v260
    %311 = vmatprep.subr.mxu0 0.0
    %312 = vmatpush1.msra.mxu0 %v259
    %313 = vmatprep.subr.mxu0 0.0
    %314 = vmatpush1.msra.mxu0 %v258
    %315 = vmatprep.subr.mxu0 0.0
    %316 = vmatpush1.msra.mxu0 %v257
    %317 = vmatprep.subr.mxu0 0.0
    %318 = vmatpush2.msra.mxu0 0.0
    %319 = vmatprep.subr.mxu0 0.0
    %320 = vmatpush2.msra.mxu0 0.0
    %321 = vmatprep.subr.mxu0 0.0
    %322 = vmatpush2.msra.mxu0 0.0
    %323 = vmatprep.subr.mxu0 0.0
    %324 = vmatpush2.msra.mxu0 0.0
    %325 = vmatprep.subr.mxu0 0.0
    %326 = vmatpush2.msra.mxu0 0.0
    %327 = vmatprep.subr.mxu0 0.0
    %328 = vmatpush2.msra.mxu0 0.0
    %329 = vmatprep.subr.mxu0 0.0
    %330 = vmatpush2.msra.mxu0 0.0
    %331 = vmatprep.subr.mxu0 0.0
    %332 = vmatpush2.msra.mxu0 0.0
    %333 = vmatprep.subr.mxu0 0.0
    %334 = vmatpush2.msra.mxu0 0.0
    %335 = vmatprep.subr.mxu0 0.0
    %336 = vmatpush2.msra.mxu0 0.0
    %337 = vmatprep.subr.mxu0 0.0
    %338 = vmatpush2.msra.mxu0 0.0
    %339 = vmatprep.subr.mxu0 0.0
    %340 = vmatpush2.msra.mxu0 0.0
    %341 = vmatprep.subr.mxu0 0.0
    %342 = vmatpush2.msra.mxu0 0.0
    %343 = vmatprep.subr.mxu0 0.0
    %344 = vmatpush2.msra.mxu0 0.0
    %345 = vmatprep.subr.mxu0 0.0
    %346 = vmatpush2.msra.mxu0 0.0
    %347 = vmatprep.subr.mxu0 0.0
    %348 = vmatpush2.msra.mxu0 0.0
    %349 = vmatprep.mubr.f32.mxu0 0.0
    %350 = vmatmul.mubr.f32.gmra.mxu0 %v283
    %v351 = vpop.f32.mrf.mxu0
    %v352 = vadd.f32 0.0, %v351
    %v353 = vpop.f32.mrf.mxu0
    %354 = vdwg.mxu0
    %v355 = vadd.f32 %v224, %v352
    %v356 = vxor.u32 %v355, 2147483648
    %v357 = vmul.f32 %v356, 1.442695
    %v358 = vpow.pop %v357
    %v359 = vadd.f32 %v358, 1.0
    %v360 = vrcp.pop %v359
    %v361 = vmul.f32 1.0, %v360
    %v362 = vtanh.pop %v355
    %364 = vrot.lane.b32.xlu0 %v272, 32
    %v365 = vpop.permute.xlu0 %364
    %v367 = vmul.f32 %v361, %v365
    %369 = vrot.lane.b32.xlu0 %v362, 64
    %v370 = vpop.permute.xlu0 %369
    %v372 = vmul.f32 %v361, %v370
    %374 = vrot.lane.b32.xlu0 %v372, 32
    %v375 = vpop.permute.xlu0 %374
    %v377 = vadd.f32 %v367, %v375
    %v378 = vtanh.pop %v377
    %380 = vrot.lane.b32.xlu0 %v378, 64
    %v381 = vpop.permute.xlu0 %380
    %v383 = vmul.f32 %v361, %v381
    %385 = vrot.lane.b32.xlu0 %v383, 32
    %v386 = vpop.permute.xlu0 %385
    %v387 = vsel %vm282, %v386, 0
    %389 = vmatprep.subr.mxu0 0.0
    %390 = vmatpush1.msra.mxu0 0.0
    %391 = vmatprep.subr.mxu0 0.0
    %392 = vmatpush1.msra.mxu0 0.0
    %393 = vmatprep.subr.mxu0 0.0
    %394 = vmatpush1.msra.mxu0 0.0
    %395 = vmatprep.subr.mxu0 0.0
    %396 = vmatpush1.msra.mxu0 0.0
    %397 = vmatprep.subr.mxu0 0.0
    %398 = vmatpush1.msra.mxu0 0.0
    %399 = vmatprep.subr.mxu0 0.0
    %400 = vmatpush1.msra.mxu0 0.0
    %401 = vmatprep.subr.mxu0 0.0
    %402 = vmatpush1.msra.mxu0 0.0
    %403 = vmatprep.subr.mxu0 0.0
    %404 = vmatpush1.msra.mxu0 0.0
    %405 = vmatprep.subr.mxu0 0.0
    %406 = vmatpush1.msra.mxu0 0.0
    %407 = vmatprep.subr.mxu0 0.0
    %408 = vmatpush1.msra.mxu0 0.0
    %409 = vmatprep.subr.mxu0 0.0
    %410 = vmatpush1.msra.mxu0 0.0
    %411 = vmatprep.subr.mxu0 0.0
    %412 = vmatpush1.msra.mxu0 0.0
    %413 = vmatprep.subr.mxu0 0.0
    %414 = vmatpush1.msra.mxu0 %v260
    %415 = vmatprep.subr.mxu0 0.0
    %416 = vmatpush1.msra.mxu0 %v259
    %417 = vmatprep.subr.mxu0 0.0
    %418 = vmatpush1.msra.mxu0 %v258
    %419 = vmatprep.subr.mxu0 0.0
    %420 = vmatpush1.msra.mxu0 %v257
    %421 = vmatprep.subr.mxu0 0.0
    %422 = vmatpush2.msra.mxu0 0.0
    %423 = vmatprep.subr.mxu0 0.0
    %424 = vmatpush2.msra.mxu0 0.0
    %425 = vmatprep.subr.mxu0 0.0
    %426 = vmatpush2.msra.mxu0 0.0
    %427 = vmatprep.subr.mxu0 0.0
    %428 = vmatpush2.msra.mxu0 0.0
    %429 = vmatprep.subr.mxu0 0.0
    %430 = vmatpush2.msra.mxu0 0.0
    %431 = vmatprep.subr.mxu0 0.0
    %432 = vmatpush2.msra.mxu0 0.0
    %433 = vmatprep.subr.mxu0 0.0
    %434 = vmatpush2.msra.mxu0 0.0
    %435 = vmatprep.subr.mxu0 0.0
    %436 = vmatpush2.msra.mxu0 0.0
    %437 = vmatprep.subr.mxu0 0.0
    %438 = vmatpush2.msra.mxu0 0.0
    %439 = vmatprep.subr.mxu0 0.0
    %440 = vmatpush2.msra.mxu0 0.0
    %441 = vmatprep.subr.mxu0 0.0
    %442 = vmatpush2.msra.mxu0 0.0
    %443 = vmatprep.subr.mxu0 0.0
    %444 = vmatpush2.msra.mxu0 0.0
    %445 = vmatprep.subr.mxu0 0.0
    %446 = vmatpush2.msra.mxu0 0.0
    %447 = vmatprep.subr.mxu0 0.0
    %448 = vmatpush2.msra.mxu0 0.0
    %449 = vmatprep.subr.mxu0 0.0
    %450 = vmatpush2.msra.mxu0 0.0
    %451 = vmatprep.subr.mxu0 0.0
    %452 = vmatpush2.msra.mxu0 0.0
    %453 = vmatprep.mubr.f32.mxu0 0.0
    %454 = vmatmul.mubr.f32.gmra.mxu0 %v387
    %v455 = vpop.f32.mrf.mxu0
    %v456 = vadd.f32 0.0, %v455
    %v457 = vpop.f32.mrf.mxu0
    %458 = vdwg.mxu0
    %v459 = vadd.f32 %v229, %v456
    %v460 = vxor.u32 %v459, 2147483648
    %v461 = vmul.f32 %v460, 1.442695
    %v462 = vpow.pop %v461
    %v463 = vadd.f32 %v462, 1.0
    %v464 = vrcp.pop %v463
    %v465 = vmul.f32 1.0, %v464
    %v466 = vtanh.pop %v459
    %v467 = vmul.f32 %v465, %v377
    %469 = vrot.lane.b32.xlu0 %v466, 64
    %v470 = vpop.permute.xlu0 %469
    %v472 = vmul.f32 %v465, %v470
    %474 = vrot.lane.b32.xlu0 %v472, 32
    %v475 = vpop.permute.xlu0 %474
    %v477 = vadd.f32 %v467, %v475
    %v478 = vtanh.pop %v477
    %480 = vrot.lane.b32.xlu0 %v478, 64
    %v481 = vpop.permute.xlu0 %480
    %v483 = vmul.f32 %v465, %v481
    %485 = vrot.lane.b32.xlu0 %v483, 32
    %v486 = vpop.permute.xlu0 %485
    %v487 = vsel %vm282, %v486, 0
    %489 = vmatprep.subr.mxu0 0.0
    %490 = vmatpush1.msra.mxu0 0.0
    %491 = vmatprep.subr.mxu0 0.0
    %492 = vmatpush1.msra.mxu0 0.0
    %493 = vmatprep.subr.mxu0 0.0
    %494 = vmatpush1.msra.mxu0 0.0
    %495 = vmatprep.subr.mxu0 0.0
    %496 = vmatpush1.msra.mxu0 0.0
    %497 = vmatprep.subr.mxu0 0.0
    %498 = vmatpush1.msra.mxu0 0.0
    %499 = vmatprep.subr.mxu0 0.0
    %500 = vmatpush1.msra.mxu0 0.0
    %501 = vmatprep.subr.mxu0 0.0
    %502 = vmatpush1.msra.mxu0 0.0
    %503 = vmatprep.subr.mxu0 0.0
    %504 = vmatpush1.msra.mxu0 0.0
    %505 = vmatprep.subr.mxu0 0.0
    %506 = vmatpush1.msra.mxu0 0.0
    %507 = vmatprep.subr.mxu0 0.0
    %508 = vmatpush1.msra.mxu0 0.0
    %509 = vmatprep.subr.mxu0 0.0
    %510 = vmatpush1.msra.mxu0 0.0
    %511 = vmatprep.subr.mxu0 0.0
    %512 = vmatpush1.msra.mxu0 0.0
    %513 = vmatprep.subr.mxu0 0.0
    %514 = vmatpush1.msra.mxu0 %v260
    %515 = vmatprep.subr.mxu0 0.0
    %516 = vmatpush1.msra.mxu0 %v259
    %517 = vmatprep.subr.mxu0 0.0
    %518 = vmatpush1.msra.mxu0 %v258
    %519 = vmatprep.subr.mxu0 0.0
    %520 = vmatpush1.msra.mxu0 %v257
    %521 = vmatprep.subr.mxu0 0.0
    %522 = vmatpush2.msra.mxu0 0.0
    %523 = vmatprep.subr.mxu0 0.0
    %524 = vmatpush2.msra.mxu0 0.0
    %525 = vmatprep.subr.mxu0 0.0
    %526 = vmatpush2.msra.mxu0 0.0
    %527 = vmatprep.subr.mxu0 0.0
    %528 = vmatpush2.msra.mxu0 0.0
    %529 = vmatprep.subr.mxu0 0.0
    %530 = vmatpush2.msra.mxu0 0.0
    %531 = vmatprep.subr.mxu0 0.0
    %532 = vmatpush2.msra.mxu0 0.0
    %533 = vmatprep.subr.mxu0 0.0
    %534 = vmatpush2.msra.mxu0 0.0
    %535 = vmatprep.subr.mxu0 0.0
    %536 = vmatpush2.msra.mxu0 0.0
    %537 = vmatprep.subr.mxu0 0.0
    %538 = vmatpush2.msra.mxu0 0.0
    %539 = vmatprep.subr.mxu0 0.0
    %540 = vmatpush2.msra.mxu0 0.0
    %541 = vmatprep.subr.mxu0 0.0
    %542 = vmatpush2.msra.mxu0 0.0
    %543 = vmatprep.subr.mxu0 0.0
    %544 = vmatpush2.msra.mxu0 0.0
    %545 = vmatprep.subr.mxu0 0.0
    %546 = vmatpush2.msra.mxu0 0.0
    %547 = vmatprep.subr.mxu0 0.0
    %548 = vmatpush2.msra.mxu0 0.0
    %549 = vmatprep.subr.mxu0 0.0
    %550 = vmatpush2.msra.mxu0 0.0
    %551 = vmatprep.subr.mxu0 0.0
    %552 = vmatpush2.msra.mxu0 0.0
    %553 = vmatprep.mubr.f32.mxu0 0.0
    %554 = vmatmul.mubr.f32.gmra.mxu0 %v487
    %v555 = vpop.f32.mrf.mxu0
    %v556 = vadd.f32 0.0, %v555
    %v557 = vpop.f32.mrf.mxu0
    %558 = vdwg.mxu0
    %v559 = vadd.f32 %v234, %v556
    %v560 = vxor.u32 %v559, 2147483648
    %v561 = vmul.f32 %v560, 1.442695
    %v562 = vpow.pop %v561
    %v563 = vadd.f32 %v562, 1.0
    %v564 = vrcp.pop %v563
    %v565 = vmul.f32 1.0, %v564
    %v566 = vtanh.pop %v559
    %v567 = vmul.f32 %v565, %v477
    %569 = vrot.lane.b32.xlu0 %v566, 64
    %v570 = vpop.permute.xlu0 %569
    %v572 = vmul.f32 %v565, %v570
    %574 = vrot.lane.b32.xlu0 %v572, 32
    %v575 = vpop.permute.xlu0 %574
    %v577 = vadd.f32 %v567, %v575
    %v578 = vtanh.pop %v577
    %580 = vrot.lane.b32.xlu0 %v578, 64
    %v581 = vpop.permute.xlu0 %580
    %v583 = vmul.f32 %v565, %v581
    %585 = vrot.lane.b32.xlu0 %v583, 32
    %v586 = vpop.permute.xlu0 %585
    %v587 = vsel %vm282, %v586, 0
    %589 = vmatprep.subr.mxu0 0.0
    %590 = vmatpush1.msra.mxu0 0.0
    %591 = vmatprep.subr.mxu0 0.0
    %592 = vmatpush1.msra.mxu0 0.0
    %593 = vmatprep.subr.mxu0 0.0
    %594 = vmatpush1.msra.mxu0 0.0
    %595 = vmatprep.subr.mxu0 0.0
    %596 = vmatpush1.msra.mxu0 0.0
    %597 = vmatprep.subr.mxu0 0.0
    %598 = vmatpush1.msra.mxu0 0.0
    %599 = vmatprep.subr.mxu0 0.0
    %600 = vmatpush1.msra.mxu0 0.0
    %601 = vmatprep.subr.mxu0 0.0
    %602 = vmatpush1.msra.mxu0 0.0
    %603 = vmatprep.subr.mxu0 0.0
    %604 = vmatpush1.msra.mxu0 0.0
    %605 = vmatprep.subr.mxu0 0.0
    %606 = vmatpush1.msra.mxu0 0.0
    %607 = vmatprep.subr.mxu0 0.0
    %608 = vmatpush1.msra.mxu0 0.0
    %609 = vmatprep.subr.mxu0 0.0
    %610 = vmatpush1.msra.mxu0 0.0
    %611 = vmatprep.subr.mxu0 0.0
    %612 = vmatpush1.msra.mxu0 0.0
    %613 = vmatprep.subr.mxu0 0.0
    %614 = vmatpush1.msra.mxu0 %v260
    %615 = vmatprep.subr.mxu0 0.0
    %616 = vmatpush1.msra.mxu0 %v259
    %617 = vmatprep.subr.mxu0 0.0
    %618 = vmatpush1.msra.mxu0 %v258
    %619 = vmatprep.subr.mxu0 0.0
    %620 = vmatpush1.msra.mxu0 %v257
    %621 = vmatprep.subr.mxu0 0.0
    %622 = vmatpush2.msra.mxu0 0.0
    %623 = vmatprep.subr.mxu0 0.0
    %624 = vmatpush2.msra.mxu0 0.0
    %625 = vmatprep.subr.mxu0 0.0
    %626 = vmatpush2.msra.mxu0 0.0
    %627 = vmatprep.subr.mxu0 0.0
    %628 = vmatpush2.msra.mxu0 0.0
    %629 = vmatprep.subr.mxu0 0.0
    %630 = vmatpush2.msra.mxu0 0.0
    %631 = vmatprep.subr.mxu0 0.0
    %632 = vmatpush2.msra.mxu0 0.0
    %633 = vmatprep.subr.mxu0 0.0
    %634 = vmatpush2.msra.mxu0 0.0
    %635 = vmatprep.subr.mxu0 0.0
    %636 = vmatpush2.msra.mxu0 0.0
    %637 = vmatprep.subr.mxu0 0.0
    %638 = vmatpush2.msra.mxu0 0.0
    %639 = vmatprep.subr.mxu0 0.0
    %640 = vmatpush2.msra.mxu0 0.0
    %641 = vmatprep.subr.mxu0 0.0
    %642 = vmatpush2.msra.mxu0 0.0
    %643 = vmatprep.subr.mxu0 0.0
    %644 = vmatpush2.msra.mxu0 0.0
    %645 = vmatprep.subr.mxu0 0.0
    %646 = vmatpush2.msra.mxu0 0.0
    %647 = vmatprep.subr.mxu0 0.0
    %648 = vmatpush2.msra.mxu0 0.0
    %649 = vmatprep.subr.mxu0 0.0
    %650 = vmatpush2.msra.mxu0 0.0
    %651 = vmatprep.subr.mxu0 0.0
    %652 = vmatpush2.msra.mxu0 0.0
    %653 = vmatprep.mubr.f32.mxu0 0.0
    %654 = vmatmul.mubr.f32.gmra.mxu0 %v587
    %v655 = vpop.f32.mrf.mxu0
    %v656 = vadd.f32 0.0, %v655
    %v657 = vpop.f32.mrf.mxu0
    %658 = vdwg.mxu0
    %v659 = vadd.f32 %v239, %v656
    %v660 = vxor.u32 %v659, 2147483648
    %v661 = vmul.f32 %v660, 1.442695
    %v662 = vpow.pop %v661
    %v663 = vadd.f32 %v662, 1.0
    %v664 = vrcp.pop %v663
    %v665 = vmul.f32 1.0, %v664
    %v666 = vtanh.pop %v659
    %v667 = vmul.f32 %v665, %v577
    %669 = vrot.lane.b32.xlu0 %v666, 64
    %v670 = vpop.permute.xlu0 %669
    %v672 = vmul.f32 %v665, %v670
    %674 = vrot.lane.b32.xlu0 %v672, 32
    %v675 = vpop.permute.xlu0 %674
    %v677 = vadd.f32 %v667, %v675
    %v678 = vtanh.pop %v677
    %680 = vrot.lane.b32.xlu0 %v678, 64
    %v681 = vpop.permute.xlu0 %680
    %v683 = vmul.f32 %v665, %v681
    %685 = vrot.lane.b32.xlu0 %v683, 32
    %v686 = vpop.permute.xlu0 %685
    %v687 = vsel %vm282, %v686, 0
    %689 = vmatprep.subr.mxu0 0.0
    %690 = vmatpush1.msra.mxu0 0.0
    %691 = vmatprep.subr.mxu0 0.0
    %692 = vmatpush1.msra.mxu0 0.0
    %693 = vmatprep.subr.mxu0 0.0
    %694 = vmatpush1.msra.mxu0 0.0
    %695 = vmatprep.subr.mxu0 0.0
    %696 = vmatpush1.msra.mxu0 0.0
    %697 = vmatprep.subr.mxu0 0.0
    %698 = vmatpush1.msra.mxu0 0.0
    %699 = vmatprep.subr.mxu0 0.0
    %700 = vmatpush1.msra.mxu0 0.0
    %701 = vmatprep.subr.mxu0 0.0
    %702 = vmatpush1.msra.mxu0 0.0
    %703 = vmatprep.subr.mxu0 0.0
    %704 = vmatpush1.msra.mxu0 0.0
    %705 = vmatprep.subr.mxu0 0.0
    %706 = vmatpush1.msra.mxu0 0.0
    %707 = vmatprep.subr.mxu0 0.0
    %708 = vmatpush1.msra.mxu0 0.0
    %709 = vmatprep.subr.mxu0 0.0
    %710 = vmatpush1.msra.mxu0 0.0
    %711 = vmatprep.subr.mxu0 0.0
    %712 = vmatpush1.msra.mxu0 0.0
    %713 = vmatprep.subr.mxu0 0.0
    %714 = vmatpush1.msra.mxu0 %v260
    %715 = vmatprep.subr.mxu0 0.0
    %716 = vmatpush1.msra.mxu0 %v259
    %717 = vmatprep.subr.mxu0 0.0
    %718 = vmatpush1.msra.mxu0 %v258
    %719 = vmatprep.subr.mxu0 0.0
    %720 = vmatpush1.msra.mxu0 %v257
    %721 = vmatprep.subr.mxu0 0.0
    %722 = vmatpush2.msra.mxu0 0.0
    %723 = vmatprep.subr.mxu0 0.0
    %724 = vmatpush2.msra.mxu0 0.0
    %725 = vmatprep.subr.mxu0 0.0
    %726 = vmatpush2.msra.mxu0 0.0
    %727 = vmatprep.subr.mxu0 0.0
    %728 = vmatpush2.msra.mxu0 0.0
    %729 = vmatprep.subr.mxu0 0.0
    %730 = vmatpush2.msra.mxu0 0.0
    %731 = vmatprep.subr.mxu0 0.0
    %732 = vmatpush2.msra.mxu0 0.0
    %733 = vmatprep.subr.mxu0 0.0
    %734 = vmatpush2.msra.mxu0 0.0
    %735 = vmatprep.subr.mxu0 0.0
    %736 = vmatpush2.msra.mxu0 0.0
    %737 = vmatprep.subr.mxu0 0.0
    %738 = vmatpush2.msra.mxu0 0.0
    %739 = vmatprep.subr.mxu0 0.0
    %740 = vmatpush2.msra.mxu0 0.0
    %741 = vmatprep.subr.mxu0 0.0
    %742 = vmatpush2.msra.mxu0 0.0
    %743 = vmatprep.subr.mxu0 0.0
    %744 = vmatpush2.msra.mxu0 0.0
    %745 = vmatprep.subr.mxu0 0.0
    %746 = vmatpush2.msra.mxu0 0.0
    %747 = vmatprep.subr.mxu0 0.0
    %748 = vmatpush2.msra.mxu0 0.0
    %749 = vmatprep.subr.mxu0 0.0
    %750 = vmatpush2.msra.mxu0 0.0
    %751 = vmatprep.subr.mxu0 0.0
    %752 = vmatpush2.msra.mxu0 0.0
    %753 = vmatprep.mubr.f32.mxu0 0.0
    %754 = vmatmul.mubr.f32.gmra.mxu0 %v687
    %v755 = vpop.f32.mrf.mxu0
    %v756 = vadd.f32 0.0, %v755
    %v757 = vpop.f32.mrf.mxu0
    %758 = vdwg.mxu0
    %v759 = vadd.f32 %v244, %v756
    %v760 = vxor.u32 %v759, 2147483648
    %v761 = vmul.f32 %v760, 1.442695
    %v762 = vpow.pop %v761
    %v763 = vadd.f32 %v762, 1.0
    %v764 = vrcp.pop %v763
    %v765 = vmul.f32 1.0, %v764
    %v766 = vtanh.pop %v759
    %v767 = vmul.f32 %v765, %v677
    %769 = vrot.lane.b32.xlu0 %v766, 64
    %v770 = vpop.permute.xlu0 %769
    %v772 = vmul.f32 %v765, %v770
    %774 = vrot.lane.b32.xlu0 %v772, 32
    %v775 = vpop.permute.xlu0 %774
    %v777 = vadd.f32 %v767, %v775
    %v778 = vtanh.pop %v777
    %780 = vrot.lane.b32.xlu0 %v778, 64
    %v781 = vpop.permute.xlu0 %780
    %v783 = vmul.f32 %v765, %v781
    %785 = vrot.lane.b32.xlu0 %v783, 32
    %v786 = vpop.permute.xlu0 %785
    %v787 = vsel %vm282, %v786, 0
    %789 = vmatprep.subr.mxu0 0.0
    %790 = vmatpush1.msra.mxu0 0.0
    %791 = vmatprep.subr.mxu0 0.0
    %792 = vmatpush1.msra.mxu0 0.0
    %793 = vmatprep.subr.mxu0 0.0
    %794 = vmatpush1.msra.mxu0 0.0
    %795 = vmatprep.subr.mxu0 0.0
    %796 = vmatpush1.msra.mxu0 0.0
    %797 = vmatprep.subr.mxu0 0.0
    %798 = vmatpush1.msra.mxu0 0.0
    %799 = vmatprep.subr.mxu0 0.0
    %800 = vmatpush1.msra.mxu0 0.0
    %801 = vmatprep.subr.mxu0 0.0
    %802 = vmatpush1.msra.mxu0 0.0
    %803 = vmatprep.subr.mxu0 0.0
    %804 = vmatpush1.msra.mxu0 0.0
    %805 = vmatprep.subr.mxu0 0.0
    %806 = vmatpush1.msra.mxu0 0.0
    %807 = vmatprep.subr.mxu0 0.0
    %808 = vmatpush1.msra.mxu0 0.0
    %809 = vmatprep.subr.mxu0 0.0
    %810 = vmatpush1.msra.mxu0 0.0
    %811 = vmatprep.subr.mxu0 0.0
    %812 = vmatpush1.msra.mxu0 0.0
    %813 = vmatprep.subr.mxu0 0.0
    %814 = vmatpush1.msra.mxu0 %v260
    %815 = vmatprep.subr.mxu0 0.0
    %816 = vmatpush1.msra.mxu0 %v259
    %817 = vmatprep.subr.mxu0 0.0
    %818 = vmatpush1.msra.mxu0 %v258
    %819 = vmatprep.subr.mxu0 0.0
    %820 = vmatpush1.msra.mxu0 %v257
    %821 = vmatprep.subr.mxu0 0.0
    %822 = vmatpush2.msra.mxu0 0.0
    %823 = vmatprep.subr.mxu0 0.0
    %824 = vmatpush2.msra.mxu0 0.0
    %825 = vmatprep.subr.mxu0 0.0
    %826 = vmatpush2.msra.mxu0 0.0
    %827 = vmatprep.subr.mxu0 0.0
    %828 = vmatpush2.msra.mxu0 0.0
    %829 = vmatprep.subr.mxu0 0.0
    %830 = vmatpush2.msra.mxu0 0.0
    %831 = vmatprep.subr.mxu0 0.0
    %832 = vmatpush2.msra.mxu0 0.0
    %833 = vmatprep.subr.mxu0 0.0
    %834 = vmatpush2.msra.mxu0 0.0
    %835 = vmatprep.subr.mxu0 0.0
    %836 = vmatpush2.msra.mxu0 0.0
    %837 = vmatprep.subr.mxu0 0.0
    %838 = vmatpush2.msra.mxu0 0.0
    %839 = vmatprep.subr.mxu0 0.0
    %840 = vmatpush2.msra.mxu0 0.0
    %841 = vmatprep.subr.mxu0 0.0
    %842 = vmatpush2.msra.mxu0 0.0
    %843 = vmatprep.subr.mxu0 0.0
    %844 = vmatpush2.msra.mxu0 0.0
    %845 = vmatprep.subr.mxu0 0.0
    %846 = vmatpush2.msra.mxu0 0.0
    %847 = vmatprep.subr.mxu0 0.0
    %848 = vmatpush2.msra.mxu0 0.0
    %849 = vmatprep.subr.mxu0 0.0
    %850 = vmatpush2.msra.mxu0 0.0
    %851 = vmatprep.subr.mxu0 0.0
    %852 = vmatpush2.msra.mxu0 0.0
    %853 = vmatprep.mubr.f32.mxu0 0.0
    %854 = vmatmul.mubr.f32.gmra.mxu0 %v787
    %v855 = vpop.f32.mrf.mxu0
    %v856 = vadd.f32 0.0, %v855
    %v857 = vpop.f32.mrf.mxu0
    %858 = vdwg.mxu0
    %v859 = vadd.f32 %v249, %v856
    %v860 = vxor.u32 %v859, 2147483648
    %v861 = vmul.f32 %v860, 1.442695
    %v862 = vpow.pop %v861
    %v863 = vadd.f32 %v862, 1.0
    %v864 = vrcp.pop %v863
    %v865 = vmul.f32 1.0, %v864
    %v866 = vtanh.pop %v859
    %v867 = vmul.f32 %v865, %v777
    %869 = vrot.lane.b32.xlu0 %v866, 64
    %v870 = vpop.permute.xlu0 %869
    %v872 = vmul.f32 %v865, %v870
    %874 = vrot.lane.b32.xlu0 %v872, 32
    %v875 = vpop.permute.xlu0 %874
    %v877 = vadd.f32 %v867, %v875
    %v878 = vtanh.pop %v877
    %880 = vrot.lane.b32.xlu0 %v878, 64
    %v881 = vpop.permute.xlu0 %880
    %v883 = vmul.f32 %v865, %v881
    %885 = vrot.lane.b32.xlu0 %v883, 32
    %v886 = vpop.permute.xlu0 %885
    %v887 = vsel %vm282, %v886, 0
    %889 = vmatprep.subr.mxu0 0.0
    %890 = vmatpush1.msra.mxu0 0.0
    %891 = vmatprep.subr.mxu0 0.0
    %892 = vmatpush1.msra.mxu0 0.0
    %893 = vmatprep.subr.mxu0 0.0
    %894 = vmatpush1.msra.mxu0 0.0
    %895 = vmatprep.subr.mxu0 0.0
    %896 = vmatpush1.msra.mxu0 0.0
    %897 = vmatprep.subr.mxu0 0.0
    %898 = vmatpush1.msra.mxu0 0.0
    %899 = vmatprep.subr.mxu0 0.0
    %900 = vmatpush1.msra.mxu0 0.0
    %901 = vmatprep.subr.mxu0 0.0
    %902 = vmatpush1.msra.mxu0 0.0
    %903 = vmatprep.subr.mxu0 0.0
    %904 = vmatpush1.msra.mxu0 0.0
    %905 = vmatprep.subr.mxu0 0.0
    %906 = vmatpush1.msra.mxu0 0.0
    %907 = vmatprep.subr.mxu0 0.0
    %908 = vmatpush1.msra.mxu0 0.0
    %909 = vmatprep.subr.mxu0 0.0
    %910 = vmatpush1.msra.mxu0 0.0
    %911 = vmatprep.subr.mxu0 0.0
    %912 = vmatpush1.msra.mxu0 0.0
    %913 = vmatprep.subr.mxu0 0.0
    %914 = vmatpush1.msra.mxu0 %v260
    %915 = vmatprep.subr.mxu0 0.0
    %916 = vmatpush1.msra.mxu0 %v259
    %917 = vmatprep.subr.mxu0 0.0
    %918 = vmatpush1.msra.mxu0 %v258
    %919 = vmatprep.subr.mxu0 0.0
    %920 = vmatpush1.msra.mxu0 %v257
    %921 = vmatprep.subr.mxu0 0.0
    %922 = vmatpush2.msra.mxu0 0.0
    %923 = vmatprep.subr.mxu0 0.0
    %924 = vmatpush2.msra.mxu0 0.0
    %925 = vmatprep.subr.mxu0 0.0
    %926 = vmatpush2.msra.mxu0 0.0
    %927 = vmatprep.subr.mxu0 0.0
    %928 = vmatpush2.msra.mxu0 0.0
    %929 = vmatprep.subr.mxu0 0.0
    %930 = vmatpush2.msra.mxu0 0.0
    %931 = vmatprep.subr.mxu0 0.0
    %932 = vmatpush2.msra.mxu0 0.0
    %933 = vmatprep.subr.mxu0 0.0
    %934 = vmatpush2.msra.mxu0 0.0
    %935 = vmatprep.subr.mxu0 0.0
    %936 = vmatpush2.msra.mxu0 0.0
    %937 = vmatprep.subr.mxu0 0.0
    %938 = vmatpush2.msra.mxu0 0.0
    %939 = vmatprep.subr.mxu0 0.0
    %940 = vmatpush2.msra.mxu0 0.0
    %941 = vmatprep.subr.mxu0 0.0
    %942 = vmatpush2.msra.mxu0 0.0
    %943 = vmatprep.subr.mxu0 0.0
    %944 = vmatpush2.msra.mxu0 0.0
    %945 = vmatprep.subr.mxu0 0.0
    %946 = vmatpush2.msra.mxu0 0.0
    %947 = vmatprep.subr.mxu0 0.0
    %948 = vmatpush2.msra.mxu0 0.0
    %949 = vmatprep.subr.mxu0 0.0
    %950 = vmatpush2.msra.mxu0 0.0
    %951 = vmatprep.subr.mxu0 0.0
    %952 = vmatpush2.msra.mxu0 0.0
    %953 = vmatprep.mubr.f32.mxu0 0.0
    %954 = vmatmul.mubr.f32.gmra.mxu0 %v887
    %v955 = vpop.f32.mrf.mxu0
    %v956 = vadd.f32 0.0, %v955
    %v957 = vpop.f32.mrf.mxu0
    %958 = vdwg.mxu0
    %v959 = vadd.f32 %v254, %v956
    %v960 = vxor.u32 %v959, 2147483648
    %v961 = vmul.f32 %v960, 1.442695
    %v962 = vpow.pop %v961
    %v963 = vadd.f32 %v962, 1.0
    %v964 = vrcp.pop %v963
    %v965 = vmul.f32 1.0, %v964
    %v966 = vtanh.pop %v959
    %v967 = vmul.f32 %v965, %v877
    %969 = vrot.lane.b32.xlu0 %v966, 64
    %v970 = vpop.permute.xlu0 %969
    %v972 = vmul.f32 %v965, %v970
    %974 = vrot.lane.b32.xlu0 %v972, 32
    %v975 = vpop.permute.xlu0 %974
    %v977 = vadd.f32 %v967, %v975
    %v978 = vtanh.pop %v977
    %980 = vrot.lane.b32.xlu0 %v978, 64
    %v981 = vpop.permute.xlu0 %980
    %v983 = vmul.f32 %v965, %v981
    %v984 = vld [vmem:[%s4] sm:$0xff]
    %v985 = vld [vmem:[%s4 + $0x8] sm:$0xff]
    %v986 = vld [vmem:[%s4 + $0x10] sm:$0xff]
    %v987 = vld [vmem:[%s4 + $0x18] sm:$0xff]
    %v988 = vld [vmem:[%s6] sm:$0x1]
    %v990 = vlaneseq
    %v991 = vshrl.u32 %v990, 7
    %v992 = vsub.s32 0, %v991
    %v993 = vrot.slane %v988, %v992
    %996 = vrot.lane.b32.xlu0 %v983, 32
    %v997 = vpop.permute.xlu0 %996
    %v998 = vsel %vm282, %v997, 0
    %1000 = vmatprep.subr.mxu0 0.0
    %1001 = vmatpush1.msra.mxu0 0.0
    %1002 = vmatprep.subr.mxu0 0.0
    %1003 = vmatpush1.msra.mxu0 0.0
    %1004 = vmatprep.subr.mxu0 0.0
    %1005 = vmatpush1.msra.mxu0 0.0
    %1006 = vmatprep.subr.mxu0 0.0
    %1007 = vmatpush1.msra.mxu0 0.0
    %1008 = vmatprep.subr.mxu0 0.0
    %1009 = vmatpush1.msra.mxu0 0.0
    %1010 = vmatprep.subr.mxu0 0.0
    %1011 = vmatpush1.msra.mxu0 0.0
    %1012 = vmatprep.subr.mxu0 0.0
    %1013 = vmatpush1.msra.mxu0 0.0
    %1014 = vmatprep.subr.mxu0 0.0
    %1015 = vmatpush1.msra.mxu0 0.0
    %1016 = vmatprep.subr.mxu0 0.0
    %1017 = vmatpush1.msra.mxu0 0.0
    %1018 = vmatprep.subr.mxu0 0.0
    %1019 = vmatpush1.msra.mxu0 0.0
    %1020 = vmatprep.subr.mxu0 0.0
    %1021 = vmatpush1.msra.mxu0 0.0
    %1022 = vmatprep.subr.mxu0 0.0
    %1023 = vmatpush1.msra.mxu0 0.0
    %1024 = vmatprep.subr.mxu0 0.0
    %1025 = vmatpush1.msra.mxu0 %v987
    %1026 = vmatprep.subr.mxu0 0.0
    %1027 = vmatpush1.msra.mxu0 %v986
    %1028 = vmatprep.subr.mxu0 0.0
    %1029 = vmatpush1.msra.mxu0 %v985
    %1030 = vmatprep.subr.mxu0 0.0
    %1031 = vmatpush1.msra.mxu0 %v984
    %1032 = vmatprep.subr.mxu0 0.0
    %1033 = vmatpush2.msra.mxu0 0.0
    %1034 = vmatprep.subr.mxu0 0.0
    %1035 = vmatpush2.msra.mxu0 0.0
    %1036 = vmatprep.subr.mxu0 0.0
    %1037 = vmatpush2.msra.mxu0 0.0
    %1038 = vmatprep.subr.mxu0 0.0
    %1039 = vmatpush2.msra.mxu0 0.0
    %1040 = vmatprep.subr.mxu0 0.0
    %1041 = vmatpush2.msra.mxu0 0.0
    %1042 = vmatprep.subr.mxu0 0.0
    %1043 = vmatpush2.msra.mxu0 0.0
    %1044 = vmatprep.subr.mxu0 0.0
    %1045 = vmatpush2.msra.mxu0 0.0
    %1046 = vmatprep.subr.mxu0 0.0
    %1047 = vmatpush2.msra.mxu0 0.0
    %1048 = vmatprep.subr.mxu0 0.0
    %1049 = vmatpush2.msra.mxu0 0.0
    %1050 = vmatprep.subr.mxu0 0.0
    %1051 = vmatpush2.msra.mxu0 0.0
    %1052 = vmatprep.subr.mxu0 0.0
    %1053 = vmatpush2.msra.mxu0 0.0
    %1054 = vmatprep.subr.mxu0 0.0
    %1055 = vmatpush2.msra.mxu0 0.0
    %1056 = vmatprep.subr.mxu0 0.0
    %1057 = vmatpush2.msra.mxu0 0.0
    %1058 = vmatprep.subr.mxu0 0.0
    %1059 = vmatpush2.msra.mxu0 0.0
    %1060 = vmatprep.subr.mxu0 0.0
    %1061 = vmatpush2.msra.mxu0 0.0
    %1062 = vmatprep.subr.mxu0 0.0
    %1063 = vmatpush2.msra.mxu0 0.0
    %1064 = vmatprep.mubr.f32.mxu0 0.0
    %1065 = vmatmul.mubr.f32.gmra.mxu0 %v283
    %v1066 = vpop.f32.mrf.mxu0
    %v1067 = vadd.f32 %v993, %v1066
    %v1068 = vpop.f32.mrf.mxu0
    %1069 = vmatprep.mubr.f32.mxu0 0.0
    %1070 = vmatmul.mubr.f32.gmra.mxu0 %v387
    %v1071 = vpop.f32.mrf.mxu0
    %v1072 = vadd.f32 %v993, %v1071
    %v1073 = vpop.f32.mrf.mxu0
    %1074 = vmatprep.mubr.f32.mxu0 0.0
    %1075 = vmatmul.mubr.f32.gmra.mxu0 %v487
    %v1076 = vpop.f32.mrf.mxu0
    %v1077 = vadd.f32 %v993, %v1076
    %v1078 = vpop.f32.mrf.mxu0
    %1079 = vmatprep.mubr.f32.mxu0 0.0
    %1080 = vmatmul.mubr.f32.gmra.mxu0 %v587
    %v1081 = vpop.f32.mrf.mxu0
    %v1082 = vadd.f32 %v993, %v1081
    %v1083 = vpop.f32.mrf.mxu0
    %1084 = vmatprep.mubr.f32.mxu0 0.0
    %1085 = vmatmul.mubr.f32.gmra.mxu0 %v687
    %v1086 = vpop.f32.mrf.mxu0
    %v1087 = vadd.f32 %v993, %v1086
    %v1088 = vpop.f32.mrf.mxu0
    %1089 = vmatprep.mubr.f32.mxu0 0.0
    %1090 = vmatmul.mubr.f32.gmra.mxu0 %v787
    %v1091 = vpop.f32.mrf.mxu0
    %v1092 = vadd.f32 %v993, %v1091
    %v1093 = vpop.f32.mrf.mxu0
    %1094 = vmatprep.mubr.f32.mxu0 0.0
    %1095 = vmatmul.mubr.f32.gmra.mxu0 %v887
    %v1096 = vpop.f32.mrf.mxu0
    %v1097 = vadd.f32 %v993, %v1096
    %v1098 = vpop.f32.mrf.mxu0
    %1099 = vmatprep.mubr.f32.mxu0 0.0
    %1100 = vmatmul.mubr.f32.gmra.mxu0 %v998
    %v1101 = vpop.f32.mrf.mxu0
    %v1102 = vadd.f32 %v993, %v1101
    %v1103 = vpop.f32.mrf.mxu0
    %1104 = vdwg.mxu0
    %v1105 = vld [vmem:[%s5] sm:$0xff]
    %v1106 = vld [vmem:[%s5 + $0x8] sm:$0xff]
    %v1107 = vld [vmem:[%s5 + $0x10] sm:$0xff]
    %v1108 = vld [vmem:[%s5 + $0x18] sm:$0xff]
    %v1109 = vxor.u32 %v1067, 2147483648
    %v1110 = vmul.f32 %v1109, 1.442695
    %v1111 = vpow.pop %v1110
    %v1112 = vadd.f32 %v1111, 1.0
    %v1113 = vrcp.pop %v1112
    %v1114 = vmul.f32 1.0, %v1113
    %v1115 = vtanh.pop %v1067
    %1117 = vrot.lane.b32.xlu0 %v1115, 64
    %v1118 = vpop.permute.xlu0 %1117
    %v1120 = vmul.f32 %v1114, %v1118
    %v1121 = vtanh.pop %v1120
    %1123 = vrot.lane.b32.xlu0 %v1121, 96
    %v1124 = vpop.permute.xlu0 %1123
    %v1126 = vmul.f32 %v1114, %v1124
    %1128 = vrot.lane.b32.xlu0 %v1126, 32
    %v1129 = vpop.permute.xlu0 %1128
    %v1130 = vsel %vm282, %v1129, 0
    %1132 = vmatprep.subr.mxu0 0.0
    %1133 = vmatpush1.msra.mxu0 0.0
    %1134 = vmatprep.subr.mxu0 0.0
    %1135 = vmatpush1.msra.mxu0 0.0
    %1136 = vmatprep.subr.mxu0 0.0
    %1137 = vmatpush1.msra.mxu0 0.0
    %1138 = vmatprep.subr.mxu0 0.0
    %1139 = vmatpush1.msra.mxu0 0.0
    %1140 = vmatprep.subr.mxu0 0.0
    %1141 = vmatpush1.msra.mxu0 0.0
    %1142 = vmatprep.subr.mxu0 0.0
    %1143 = vmatpush1.msra.mxu0 0.0
    %1144 = vmatprep.subr.mxu0 0.0
    %1145 = vmatpush1.msra.mxu0 0.0
    %1146 = vmatprep.subr.mxu0 0.0
    %1147 = vmatpush1.msra.mxu0 0.0
    %1148 = vmatprep.subr.mxu0 0.0
    %1149 = vmatpush1.msra.mxu0 0.0
    %1150 = vmatprep.subr.mxu0 0.0
    %1151 = vmatpush1.msra.mxu0 0.0
    %1152 = vmatprep.subr.mxu0 0.0
    %1153 = vmatpush1.msra.mxu0 0.0
    %1154 = vmatprep.subr.mxu0 0.0
    %1155 = vmatpush1.msra.mxu0 0.0
    %1156 = vmatprep.subr.mxu0 0.0
    %1157 = vmatpush1.msra.mxu0 %v1108
    %1158 = vmatprep.subr.mxu0 0.0
    %1159 = vmatpush1.msra.mxu0 %v1107
    %1160 = vmatprep.subr.mxu0 0.0
    %1161 = vmatpush1.msra.mxu0 %v1106
    %1162 = vmatprep.subr.mxu0 0.0
    %1163 = vmatpush1.msra.mxu0 %v1105
    %1164 = vmatprep.subr.mxu0 0.0
    %1165 = vmatpush2.msra.mxu0 0.0
    %1166 = vmatprep.subr.mxu0 0.0
    %1167 = vmatpush2.msra.mxu0 0.0
    %1168 = vmatprep.subr.mxu0 0.0
    %1169 = vmatpush2.msra.mxu0 0.0
    %1170 = vmatprep.subr.mxu0 0.0
    %1171 = vmatpush2.msra.mxu0 0.0
    %1172 = vmatprep.subr.mxu0 0.0
    %1173 = vmatpush2.msra.mxu0 0.0
    %1174 = vmatprep.subr.mxu0 0.0
    %1175 = vmatpush2.msra.mxu0 0.0
    %1176 = vmatprep.subr.mxu0 0.0
    %1177 = vmatpush2.msra.mxu0 0.0
    %1178 = vmatprep.subr.mxu0 0.0
    %1179 = vmatpush2.msra.mxu0 0.0
    %1180 = vmatprep.subr.mxu0 0.0
    %1181 = vmatpush2.msra.mxu0 0.0
    %1182 = vmatprep.subr.mxu0 0.0
    %1183 = vmatpush2.msra.mxu0 0.0
    %1184 = vmatprep.subr.mxu0 0.0
    %1185 = vmatpush2.msra.mxu0 0.0
    %1186 = vmatprep.subr.mxu0 0.0
    %1187 = vmatpush2.msra.mxu0 0.0
    %1188 = vmatprep.subr.mxu0 0.0
    %1189 = vmatpush2.msra.mxu0 0.0
    %1190 = vmatprep.subr.mxu0 0.0
    %1191 = vmatpush2.msra.mxu0 0.0
    %1192 = vmatprep.subr.mxu0 0.0
    %1193 = vmatpush2.msra.mxu0 0.0
    %1194 = vmatprep.subr.mxu0 0.0
    %1195 = vmatpush2.msra.mxu0 0.0
    %1196 = vmatprep.mubr.f32.mxu0 0.0
    %1197 = vmatmul.mubr.f32.gmra.mxu0 %v1130
    %v1198 = vpop.f32.mrf.mxu0
    %v1199 = vadd.f32 0.0, %v1198
    %v1200 = vpop.f32.mrf.mxu0
    %1201 = vdwg.mxu0
    %v1202 = vadd.f32 %v1072, %v1199
    %v1203 = vxor.u32 %v1202, 2147483648
    %v1204 = vmul.f32 %v1203, 1.442695
    %v1205 = vpow.pop %v1204
    %v1206 = vadd.f32 %v1205, 1.0
    %v1207 = vrcp.pop %v1206
    %v1208 = vmul.f32 1.0, %v1207
    %v1209 = vtanh.pop %v1202
    %1211 = vrot.lane.b32.xlu0 %v1120, 32
    %v1212 = vpop.permute.xlu0 %1211
    %v1214 = vmul.f32 %v1208, %v1212
    %1216 = vrot.lane.b32.xlu0 %v1209, 64
    %v1217 = vpop.permute.xlu0 %1216
    %v1219 = vmul.f32 %v1208, %v1217
    %1221 = vrot.lane.b32.xlu0 %v1219, 32
    %v1222 = vpop.permute.xlu0 %1221
    %v1224 = vadd.f32 %v1214, %v1222
    %v1225 = vtanh.pop %v1224
    %1227 = vrot.lane.b32.xlu0 %v1225, 64
    %v1228 = vpop.permute.xlu0 %1227
    %v1230 = vmul.f32 %v1208, %v1228
    %1232 = vrot.lane.b32.xlu0 %v1230, 32
    %v1233 = vpop.permute.xlu0 %1232
    %v1234 = vsel %vm282, %v1233, 0
    %1236 = vmatprep.subr.mxu0 0.0
    %1237 = vmatpush1.msra.mxu0 0.0
    %1238 = vmatprep.subr.mxu0 0.0
    %1239 = vmatpush1.msra.mxu0 0.0
    %1240 = vmatprep.subr.mxu0 0.0
    %1241 = vmatpush1.msra.mxu0 0.0
    %1242 = vmatprep.subr.mxu0 0.0
    %1243 = vmatpush1.msra.mxu0 0.0
    %1244 = vmatprep.subr.mxu0 0.0
    %1245 = vmatpush1.msra.mxu0 0.0
    %1246 = vmatprep.subr.mxu0 0.0
    %1247 = vmatpush1.msra.mxu0 0.0
    %1248 = vmatprep.subr.mxu0 0.0
    %1249 = vmatpush1.msra.mxu0 0.0
    %1250 = vmatprep.subr.mxu0 0.0
    %1251 = vmatpush1.msra.mxu0 0.0
    %1252 = vmatprep.subr.mxu0 0.0
    %1253 = vmatpush1.msra.mxu0 0.0
    %1254 = vmatprep.subr.mxu0 0.0
    %1255 = vmatpush1.msra.mxu0 0.0
    %1256 = vmatprep.subr.mxu0 0.0
    %1257 = vmatpush1.msra.mxu0 0.0
    %1258 = vmatprep.subr.mxu0 0.0
    %1259 = vmatpush1.msra.mxu0 0.0
    %1260 = vmatprep.subr.mxu0 0.0
    %1261 = vmatpush1.msra.mxu0 %v1108
    %1262 = vmatprep.subr.mxu0 0.0
    %1263 = vmatpush1.msra.mxu0 %v1107
    %1264 = vmatprep.subr.mxu0 0.0
    %1265 = vmatpush1.msra.mxu0 %v1106
    %1266 = vmatprep.subr.mxu0 0.0
    %1267 = vmatpush1.msra.mxu0 %v1105
    %1268 = vmatprep.subr.mxu0 0.0
    %1269 = vmatpush2.msra.mxu0 0.0
    %1270 = vmatprep.subr.mxu0 0.0
    %1271 = vmatpush2.msra.mxu0 0.0
    %1272 = vmatprep.subr.mxu0 0.0
    %1273 = vmatpush2.msra.mxu0 0.0
    %1274 = vmatprep.subr.mxu0 0.0
    %1275 = vmatpush2.msra.mxu0 0.0
    %1276 = vmatprep.subr.mxu0 0.0
    %1277 = vmatpush2.msra.mxu0 0.0
    %1278 = vmatprep.subr.mxu0 0.0
    %1279 = vmatpush2.msra.mxu0 0.0
    %1280 = vmatprep.subr.mxu0 0.0
    %1281 = vmatpush2.msra.mxu0 0.0
    %1282 = vmatprep.subr.mxu0 0.0
    %1283 = vmatpush2.msra.mxu0 0.0
    %1284 = vmatprep.subr.mxu0 0.0
    %1285 = vmatpush2.msra.mxu0 0.0
    %1286 = vmatprep.subr.mxu0 0.0
    %1287 = vmatpush2.msra.mxu0 0.0
    %1288 = vmatprep.subr.mxu0 0.0
    %1289 = vmatpush2.msra.mxu0 0.0
    %1290 = vmatprep.subr.mxu0 0.0
    %1291 = vmatpush2.msra.mxu0 0.0
    %1292 = vmatprep.subr.mxu0 0.0
    %1293 = vmatpush2.msra.mxu0 0.0
    %1294 = vmatprep.subr.mxu0 0.0
    %1295 = vmatpush2.msra.mxu0 0.0
    %1296 = vmatprep.subr.mxu0 0.0
    %1297 = vmatpush2.msra.mxu0 0.0
    %1298 = vmatprep.subr.mxu0 0.0
    %1299 = vmatpush2.msra.mxu0 0.0
    %1300 = vmatprep.mubr.f32.mxu0 0.0
    %1301 = vmatmul.mubr.f32.gmra.mxu0 %v1234
    %v1302 = vpop.f32.mrf.mxu0
    %v1303 = vadd.f32 0.0, %v1302
    %v1304 = vpop.f32.mrf.mxu0
    %1305 = vdwg.mxu0
    %v1306 = vadd.f32 %v1077, %v1303
    %v1307 = vxor.u32 %v1306, 2147483648
    %v1308 = vmul.f32 %v1307, 1.442695
    %v1309 = vpow.pop %v1308
    %v1310 = vadd.f32 %v1309, 1.0
    %v1311 = vrcp.pop %v1310
    %v1312 = vmul.f32 1.0, %v1311
    %v1313 = vtanh.pop %v1306
    %v1314 = vmul.f32 %v1312, %v1224
    %1316 = vrot.lane.b32.xlu0 %v1313, 64
    %v1317 = vpop.permute.xlu0 %1316
    %v1319 = vmul.f32 %v1312, %v1317
    %1321 = vrot.lane.b32.xlu0 %v1319, 32
    %v1322 = vpop.permute.xlu0 %1321
    %v1324 = vadd.f32 %v1314, %v1322
    %v1325 = vtanh.pop %v1324
    %1327 = vrot.lane.b32.xlu0 %v1325, 64
    %v1328 = vpop.permute.xlu0 %1327
    %v1330 = vmul.f32 %v1312, %v1328
    %1332 = vrot.lane.b32.xlu0 %v1330, 32
    %v1333 = vpop.permute.xlu0 %1332
    %v1334 = vsel %vm282, %v1333, 0
    %1336 = vmatprep.subr.mxu0 0.0
    %1337 = vmatpush1.msra.mxu0 0.0
    %1338 = vmatprep.subr.mxu0 0.0
    %1339 = vmatpush1.msra.mxu0 0.0
    %1340 = vmatprep.subr.mxu0 0.0
    %1341 = vmatpush1.msra.mxu0 0.0
    %1342 = vmatprep.subr.mxu0 0.0
    %1343 = vmatpush1.msra.mxu0 0.0
    %1344 = vmatprep.subr.mxu0 0.0
    %1345 = vmatpush1.msra.mxu0 0.0
    %1346 = vmatprep.subr.mxu0 0.0
    %1347 = vmatpush1.msra.mxu0 0.0
    %1348 = vmatprep.subr.mxu0 0.0
    %1349 = vmatpush1.msra.mxu0 0.0
    %1350 = vmatprep.subr.mxu0 0.0
    %1351 = vmatpush1.msra.mxu0 0.0
    %1352 = vmatprep.subr.mxu0 0.0
    %1353 = vmatpush1.msra.mxu0 0.0
    %1354 = vmatprep.subr.mxu0 0.0
    %1355 = vmatpush1.msra.mxu0 0.0
    %1356 = vmatprep.subr.mxu0 0.0
    %1357 = vmatpush1.msra.mxu0 0.0
    %1358 = vmatprep.subr.mxu0 0.0
    %1359 = vmatpush1.msra.mxu0 0.0
    %1360 = vmatprep.subr.mxu0 0.0
    %1361 = vmatpush1.msra.mxu0 %v1108
    %1362 = vmatprep.subr.mxu0 0.0
    %1363 = vmatpush1.msra.mxu0 %v1107
    %1364 = vmatprep.subr.mxu0 0.0
    %1365 = vmatpush1.msra.mxu0 %v1106
    %1366 = vmatprep.subr.mxu0 0.0
    %1367 = vmatpush1.msra.mxu0 %v1105
    %1368 = vmatprep.subr.mxu0 0.0
    %1369 = vmatpush2.msra.mxu0 0.0
    %1370 = vmatprep.subr.mxu0 0.0
    %1371 = vmatpush2.msra.mxu0 0.0
    %1372 = vmatprep.subr.mxu0 0.0
    %1373 = vmatpush2.msra.mxu0 0.0
    %1374 = vmatprep.subr.mxu0 0.0
    %1375 = vmatpush2.msra.mxu0 0.0
    %1376 = vmatprep.subr.mxu0 0.0
    %1377 = vmatpush2.msra.mxu0 0.0
    %1378 = vmatprep.subr.mxu0 0.0
    %1379 = vmatpush2.msra.mxu0 0.0
    %1380 = vmatprep.subr.mxu0 0.0
    %1381 = vmatpush2.msra.mxu0 0.0
    %1382 = vmatprep.subr.mxu0 0.0
    %1383 = vmatpush2.msra.mxu0 0.0
    %1384 = vmatprep.subr.mxu0 0.0
    %1385 = vmatpush2.msra.mxu0 0.0
    %1386 = vmatprep.subr.mxu0 0.0
    %1387 = vmatpush2.msra.mxu0 0.0
    %1388 = vmatprep.subr.mxu0 0.0
    %1389 = vmatpush2.msra.mxu0 0.0
    %1390 = vmatprep.subr.mxu0 0.0
    %1391 = vmatpush2.msra.mxu0 0.0
    %1392 = vmatprep.subr.mxu0 0.0
    %1393 = vmatpush2.msra.mxu0 0.0
    %1394 = vmatprep.subr.mxu0 0.0
    %1395 = vmatpush2.msra.mxu0 0.0
    %1396 = vmatprep.subr.mxu0 0.0
    %1397 = vmatpush2.msra.mxu0 0.0
    %1398 = vmatprep.subr.mxu0 0.0
    %1399 = vmatpush2.msra.mxu0 0.0
    %1400 = vmatprep.mubr.f32.mxu0 0.0
    %1401 = vmatmul.mubr.f32.gmra.mxu0 %v1334
    %v1402 = vpop.f32.mrf.mxu0
    %v1403 = vadd.f32 0.0, %v1402
    %v1404 = vpop.f32.mrf.mxu0
    %1405 = vdwg.mxu0
    %v1406 = vadd.f32 %v1082, %v1403
    %v1407 = vxor.u32 %v1406, 2147483648
    %v1408 = vmul.f32 %v1407, 1.442695
    %v1409 = vpow.pop %v1408
    %v1410 = vadd.f32 %v1409, 1.0
    %v1411 = vrcp.pop %v1410
    %v1412 = vmul.f32 1.0, %v1411
    %v1413 = vtanh.pop %v1406
    %v1414 = vmul.f32 %v1412, %v1324
    %1416 = vrot.lane.b32.xlu0 %v1413, 64
    %v1417 = vpop.permute.xlu0 %1416
    %v1419 = vmul.f32 %v1412, %v1417
    %1421 = vrot.lane.b32.xlu0 %v1419, 32
    %v1422 = vpop.permute.xlu0 %1421
    %v1424 = vadd.f32 %v1414, %v1422
    %v1425 = vtanh.pop %v1424
    %1427 = vrot.lane.b32.xlu0 %v1425, 64
    %v1428 = vpop.permute.xlu0 %1427
    %v1430 = vmul.f32 %v1412, %v1428
    %1432 = vrot.lane.b32.xlu0 %v1430, 32
    %v1433 = vpop.permute.xlu0 %1432
    %v1434 = vsel %vm282, %v1433, 0
    %1436 = vmatprep.subr.mxu0 0.0
    %1437 = vmatpush1.msra.mxu0 0.0
    %1438 = vmatprep.subr.mxu0 0.0
    %1439 = vmatpush1.msra.mxu0 0.0
    %1440 = vmatprep.subr.mxu0 0.0
    %1441 = vmatpush1.msra.mxu0 0.0
    %1442 = vmatprep.subr.mxu0 0.0
    %1443 = vmatpush1.msra.mxu0 0.0
    %1444 = vmatprep.subr.mxu0 0.0
    %1445 = vmatpush1.msra.mxu0 0.0
    %1446 = vmatprep.subr.mxu0 0.0
    %1447 = vmatpush1.msra.mxu0 0.0
    %1448 = vmatprep.subr.mxu0 0.0
    %1449 = vmatpush1.msra.mxu0 0.0
    %1450 = vmatprep.subr.mxu0 0.0
    %1451 = vmatpush1.msra.mxu0 0.0
    %1452 = vmatprep.subr.mxu0 0.0
    %1453 = vmatpush1.msra.mxu0 0.0
    %1454 = vmatprep.subr.mxu0 0.0
    %1455 = vmatpush1.msra.mxu0 0.0
    %1456 = vmatprep.subr.mxu0 0.0
    %1457 = vmatpush1.msra.mxu0 0.0
    %1458 = vmatprep.subr.mxu0 0.0
    %1459 = vmatpush1.msra.mxu0 0.0
    %1460 = vmatprep.subr.mxu0 0.0
    %1461 = vmatpush1.msra.mxu0 %v1108
    %1462 = vmatprep.subr.mxu0 0.0
    %1463 = vmatpush1.msra.mxu0 %v1107
    %1464 = vmatprep.subr.mxu0 0.0
    %1465 = vmatpush1.msra.mxu0 %v1106
    %1466 = vmatprep.subr.mxu0 0.0
    %1467 = vmatpush1.msra.mxu0 %v1105
    %1468 = vmatprep.subr.mxu0 0.0
    %1469 = vmatpush2.msra.mxu0 0.0
    %1470 = vmatprep.subr.mxu0 0.0
    %1471 = vmatpush2.msra.mxu0 0.0
    %1472 = vmatprep.subr.mxu0 0.0
    %1473 = vmatpush2.msra.mxu0 0.0
    %1474 = vmatprep.subr.mxu0 0.0
    %1475 = vmatpush2.msra.mxu0 0.0
    %1476 = vmatprep.subr.mxu0 0.0
    %1477 = vmatpush2.msra.mxu0 0.0
    %1478 = vmatprep.subr.mxu0 0.0
    %1479 = vmatpush2.msra.mxu0 0.0
    %1480 = vmatprep.subr.mxu0 0.0
    %1481 = vmatpush2.msra.mxu0 0.0
    %1482 = vmatprep.subr.mxu0 0.0
    %1483 = vmatpush2.msra.mxu0 0.0
    %1484 = vmatprep.subr.mxu0 0.0
    %1485 = vmatpush2.msra.mxu0 0.0
    %1486 = vmatprep.subr.mxu0 0.0
    %1487 = vmatpush2.msra.mxu0 0.0
    %1488 = vmatprep.subr.mxu0 0.0
    %1489 = vmatpush2.msra.mxu0 0.0
    %1490 = vmatprep.subr.mxu0 0.0
    %1491 = vmatpush2.msra.mxu0 0.0
    %1492 = vmatprep.subr.mxu0 0.0
    %1493 = vmatpush2.msra.mxu0 0.0
    %1494 = vmatprep.subr.mxu0 0.0
    %1495 = vmatpush2.msra.mxu0 0.0
    %1496 = vmatprep.subr.mxu0 0.0
    %1497 = vmatpush2.msra.mxu0 0.0
    %1498 = vmatprep.subr.mxu0 0.0
    %1499 = vmatpush2.msra.mxu0 0.0
    %1500 = vmatprep.mubr.f32.mxu0 0.0
    %1501 = vmatmul.mubr.f32.gmra.mxu0 %v1434
    %v1502 = vpop.f32.mrf.mxu0
    %v1503 = vadd.f32 0.0, %v1502
    %v1504 = vpop.f32.mrf.mxu0
    %1505 = vdwg.mxu0
    %v1506 = vadd.f32 %v1087, %v1503
    %v1507 = vxor.u32 %v1506, 2147483648
    %v1508 = vmul.f32 %v1507, 1.442695
    %v1509 = vpow.pop %v1508
    %v1510 = vadd.f32 %v1509, 1.0
    %v1511 = vrcp.pop %v1510
    %v1512 = vmul.f32 1.0, %v1511
    %v1513 = vtanh.pop %v1506
    %v1514 = vmul.f32 %v1512, %v1424
    %1516 = vrot.lane.b32.xlu0 %v1513, 64
    %v1517 = vpop.permute.xlu0 %1516
    %v1519 = vmul.f32 %v1512, %v1517
    %1521 = vrot.lane.b32.xlu0 %v1519, 32
    %v1522 = vpop.permute.xlu0 %1521
    %v1524 = vadd.f32 %v1514, %v1522
    %v1525 = vtanh.pop %v1524
    %1527 = vrot.lane.b32.xlu0 %v1525, 64
    %v1528 = vpop.permute.xlu0 %1527
    %v1530 = vmul.f32 %v1512, %v1528
    %1532 = vrot.lane.b32.xlu0 %v1530, 32
    %v1533 = vpop.permute.xlu0 %1532
    %v1534 = vsel %vm282, %v1533, 0
    %1536 = vmatprep.subr.mxu0 0.0
    %1537 = vmatpush1.msra.mxu0 0.0
    %1538 = vmatprep.subr.mxu0 0.0
    %1539 = vmatpush1.msra.mxu0 0.0
    %1540 = vmatprep.subr.mxu0 0.0
    %1541 = vmatpush1.msra.mxu0 0.0
    %1542 = vmatprep.subr.mxu0 0.0
    %1543 = vmatpush1.msra.mxu0 0.0
    %1544 = vmatprep.subr.mxu0 0.0
    %1545 = vmatpush1.msra.mxu0 0.0
    %1546 = vmatprep.subr.mxu0 0.0
    %1547 = vmatpush1.msra.mxu0 0.0
    %1548 = vmatprep.subr.mxu0 0.0
    %1549 = vmatpush1.msra.mxu0 0.0
    %1550 = vmatprep.subr.mxu0 0.0
    %1551 = vmatpush1.msra.mxu0 0.0
    %1552 = vmatprep.subr.mxu0 0.0
    %1553 = vmatpush1.msra.mxu0 0.0
    %1554 = vmatprep.subr.mxu0 0.0
    %1555 = vmatpush1.msra.mxu0 0.0
    %1556 = vmatprep.subr.mxu0 0.0
    %1557 = vmatpush1.msra.mxu0 0.0
    %1558 = vmatprep.subr.mxu0 0.0
    %1559 = vmatpush1.msra.mxu0 0.0
    %1560 = vmatprep.subr.mxu0 0.0
    %1561 = vmatpush1.msra.mxu0 %v1108
    %1562 = vmatprep.subr.mxu0 0.0
    %1563 = vmatpush1.msra.mxu0 %v1107
    %1564 = vmatprep.subr.mxu0 0.0
    %1565 = vmatpush1.msra.mxu0 %v1106
    %1566 = vmatprep.subr.mxu0 0.0
    %1567 = vmatpush1.msra.mxu0 %v1105
    %1568 = vmatprep.subr.mxu0 0.0
    %1569 = vmatpush2.msra.mxu0 0.0
    %1570 = vmatprep.subr.mxu0 0.0
    %1571 = vmatpush2.msra.mxu0 0.0
    %1572 = vmatprep.subr.mxu0 0.0
    %1573 = vmatpush2.msra.mxu0 0.0
    %1574 = vmatprep.subr.mxu0 0.0
    %1575 = vmatpush2.msra.mxu0 0.0
    %1576 = vmatprep.subr.mxu0 0.0
    %1577 = vmatpush2.msra.mxu0 0.0
    %1578 = vmatprep.subr.mxu0 0.0
    %1579 = vmatpush2.msra.mxu0 0.0
    %1580 = vmatprep.subr.mxu0 0.0
    %1581 = vmatpush2.msra.mxu0 0.0
    %1582 = vmatprep.subr.mxu0 0.0
    %1583 = vmatpush2.msra.mxu0 0.0
    %1584 = vmatprep.subr.mxu0 0.0
    %1585 = vmatpush2.msra.mxu0 0.0
    %1586 = vmatprep.subr.mxu0 0.0
    %1587 = vmatpush2.msra.mxu0 0.0
    %1588 = vmatprep.subr.mxu0 0.0
    %1589 = vmatpush2.msra.mxu0 0.0
    %1590 = vmatprep.subr.mxu0 0.0
    %1591 = vmatpush2.msra.mxu0 0.0
    %1592 = vmatprep.subr.mxu0 0.0
    %1593 = vmatpush2.msra.mxu0 0.0
    %1594 = vmatprep.subr.mxu0 0.0
    %1595 = vmatpush2.msra.mxu0 0.0
    %1596 = vmatprep.subr.mxu0 0.0
    %1597 = vmatpush2.msra.mxu0 0.0
    %1598 = vmatprep.subr.mxu0 0.0
    %1599 = vmatpush2.msra.mxu0 0.0
    %1600 = vmatprep.mubr.f32.mxu0 0.0
    %1601 = vmatmul.mubr.f32.gmra.mxu0 %v1534
    %v1602 = vpop.f32.mrf.mxu0
    %v1603 = vadd.f32 0.0, %v1602
    %v1604 = vpop.f32.mrf.mxu0
    %1605 = vdwg.mxu0
    %v1606 = vadd.f32 %v1092, %v1603
    %v1607 = vxor.u32 %v1606, 2147483648
    %v1608 = vmul.f32 %v1607, 1.442695
    %v1609 = vpow.pop %v1608
    %v1610 = vadd.f32 %v1609, 1.0
    %v1611 = vrcp.pop %v1610
    %v1612 = vmul.f32 1.0, %v1611
    %v1613 = vtanh.pop %v1606
    %v1614 = vmul.f32 %v1612, %v1524
    %1616 = vrot.lane.b32.xlu0 %v1613, 64
    %v1617 = vpop.permute.xlu0 %1616
    %v1619 = vmul.f32 %v1612, %v1617
    %1621 = vrot.lane.b32.xlu0 %v1619, 32
    %v1622 = vpop.permute.xlu0 %1621
    %v1624 = vadd.f32 %v1614, %v1622
    %v1625 = vtanh.pop %v1624
    %1627 = vrot.lane.b32.xlu0 %v1625, 64
    %v1628 = vpop.permute.xlu0 %1627
    %v1630 = vmul.f32 %v1612, %v1628
    %1632 = vrot.lane.b32.xlu0 %v1630, 32
    %v1633 = vpop.permute.xlu0 %1632
    %v1634 = vsel %vm282, %v1633, 0
    %1636 = vmatprep.subr.mxu0 0.0
    %1637 = vmatpush1.msra.mxu0 0.0
    %1638 = vmatprep.subr.mxu0 0.0
    %1639 = vmatpush1.msra.mxu0 0.0
    %1640 = vmatprep.subr.mxu0 0.0
    %1641 = vmatpush1.msra.mxu0 0.0
    %1642 = vmatprep.subr.mxu0 0.0
    %1643 = vmatpush1.msra.mxu0 0.0
    %1644 = vmatprep.subr.mxu0 0.0
    %1645 = vmatpush1.msra.mxu0 0.0
    %1646 = vmatprep.subr.mxu0 0.0
    %1647 = vmatpush1.msra.mxu0 0.0
    %1648 = vmatprep.subr.mxu0 0.0
    %1649 = vmatpush1.msra.mxu0 0.0
    %1650 = vmatprep.subr.mxu0 0.0
    %1651 = vmatpush1.msra.mxu0 0.0
    %1652 = vmatprep.subr.mxu0 0.0
    %1653 = vmatpush1.msra.mxu0 0.0
    %1654 = vmatprep.subr.mxu0 0.0
    %1655 = vmatpush1.msra.mxu0 0.0
    %1656 = vmatprep.subr.mxu0 0.0
    %1657 = vmatpush1.msra.mxu0 0.0
    %1658 = vmatprep.subr.mxu0 0.0
    %1659 = vmatpush1.msra.mxu0 0.0
    %1660 = vmatprep.subr.mxu0 0.0
    %1661 = vmatpush1.msra.mxu0 %v1108
    %1662 = vmatprep.subr.mxu0 0.0
    %1663 = vmatpush1.msra.mxu0 %v1107
    %1664 = vmatprep.subr.mxu0 0.0
    %1665 = vmatpush1.msra.mxu0 %v1106
    %1666 = vmatprep.subr.mxu0 0.0
    %1667 = vmatpush1.msra.mxu0 %v1105
    %1668 = vmatprep.subr.mxu0 0.0
    %1669 = vmatpush2.msra.mxu0 0.0
    %1670 = vmatprep.subr.mxu0 0.0
    %1671 = vmatpush2.msra.mxu0 0.0
    %1672 = vmatprep.subr.mxu0 0.0
    %1673 = vmatpush2.msra.mxu0 0.0
    %1674 = vmatprep.subr.mxu0 0.0
    %1675 = vmatpush2.msra.mxu0 0.0
    %1676 = vmatprep.subr.mxu0 0.0
    %1677 = vmatpush2.msra.mxu0 0.0
    %1678 = vmatprep.subr.mxu0 0.0
    %1679 = vmatpush2.msra.mxu0 0.0
    %1680 = vmatprep.subr.mxu0 0.0
    %1681 = vmatpush2.msra.mxu0 0.0
    %1682 = vmatprep.subr.mxu0 0.0
    %1683 = vmatpush2.msra.mxu0 0.0
    %1684 = vmatprep.subr.mxu0 0.0
    %1685 = vmatpush2.msra.mxu0 0.0
    %1686 = vmatprep.subr.mxu0 0.0
    %1687 = vmatpush2.msra.mxu0 0.0
    %1688 = vmatprep.subr.mxu0 0.0
    %1689 = vmatpush2.msra.mxu0 0.0
    %1690 = vmatprep.subr.mxu0 0.0
    %1691 = vmatpush2.msra.mxu0 0.0
    %1692 = vmatprep.subr.mxu0 0.0
    %1693 = vmatpush2.msra.mxu0 0.0
    %1694 = vmatprep.subr.mxu0 0.0
    %1695 = vmatpush2.msra.mxu0 0.0
    %1696 = vmatprep.subr.mxu0 0.0
    %1697 = vmatpush2.msra.mxu0 0.0
    %1698 = vmatprep.subr.mxu0 0.0
    %1699 = vmatpush2.msra.mxu0 0.0
    %1700 = vmatprep.mubr.f32.mxu0 0.0
    %1701 = vmatmul.mubr.f32.gmra.mxu0 %v1634
    %v1702 = vpop.f32.mrf.mxu0
    %v1703 = vadd.f32 0.0, %v1702
    %v1704 = vpop.f32.mrf.mxu0
    %1705 = vdwg.mxu0
    %v1706 = vadd.f32 %v1097, %v1703
    %v1707 = vxor.u32 %v1706, 2147483648
    %v1708 = vmul.f32 %v1707, 1.442695
    %v1709 = vpow.pop %v1708
    %v1710 = vadd.f32 %v1709, 1.0
    %v1711 = vrcp.pop %v1710
    %v1712 = vmul.f32 1.0, %v1711
    %v1713 = vtanh.pop %v1706
    %v1714 = vmul.f32 %v1712, %v1624
    %1716 = vrot.lane.b32.xlu0 %v1713, 64
    %v1717 = vpop.permute.xlu0 %1716
    %v1719 = vmul.f32 %v1712, %v1717
    %1721 = vrot.lane.b32.xlu0 %v1719, 32
    %v1722 = vpop.permute.xlu0 %1721
    %v1724 = vadd.f32 %v1714, %v1722
    %v1725 = vtanh.pop %v1724
    %1727 = vrot.lane.b32.xlu0 %v1725, 64
    %v1728 = vpop.permute.xlu0 %1727
    %v1730 = vmul.f32 %v1712, %v1728
    %1732 = vrot.lane.b32.xlu0 %v1730, 32
    %v1733 = vpop.permute.xlu0 %1732
    %v1734 = vsel %vm282, %v1733, 0
    %1736 = vmatprep.subr.mxu0 0.0
    %1737 = vmatpush1.msra.mxu0 0.0
    %1738 = vmatprep.subr.mxu0 0.0
    %1739 = vmatpush1.msra.mxu0 0.0
    %1740 = vmatprep.subr.mxu0 0.0
    %1741 = vmatpush1.msra.mxu0 0.0
    %1742 = vmatprep.subr.mxu0 0.0
    %1743 = vmatpush1.msra.mxu0 0.0
    %1744 = vmatprep.subr.mxu0 0.0
    %1745 = vmatpush1.msra.mxu0 0.0
    %1746 = vmatprep.subr.mxu0 0.0
    %1747 = vmatpush1.msra.mxu0 0.0
    %1748 = vmatprep.subr.mxu0 0.0
    %1749 = vmatpush1.msra.mxu0 0.0
    %1750 = vmatprep.subr.mxu0 0.0
    %1751 = vmatpush1.msra.mxu0 0.0
    %1752 = vmatprep.subr.mxu0 0.0
    %1753 = vmatpush1.msra.mxu0 0.0
    %1754 = vmatprep.subr.mxu0 0.0
    %1755 = vmatpush1.msra.mxu0 0.0
    %1756 = vmatprep.subr.mxu0 0.0
    %1757 = vmatpush1.msra.mxu0 0.0
    %1758 = vmatprep.subr.mxu0 0.0
    %1759 = vmatpush1.msra.mxu0 0.0
    %1760 = vmatprep.subr.mxu0 0.0
    %1761 = vmatpush1.msra.mxu0 %v1108
    %1762 = vmatprep.subr.mxu0 0.0
    %1763 = vmatpush1.msra.mxu0 %v1107
    %1764 = vmatprep.subr.mxu0 0.0
    %1765 = vmatpush1.msra.mxu0 %v1106
    %1766 = vmatprep.subr.mxu0 0.0
    %1767 = vmatpush1.msra.mxu0 %v1105
    %1768 = vmatprep.subr.mxu0 0.0
    %1769 = vmatpush2.msra.mxu0 0.0
    %1770 = vmatprep.subr.mxu0 0.0
    %1771 = vmatpush2.msra.mxu0 0.0
    %1772 = vmatprep.subr.mxu0 0.0
    %1773 = vmatpush2.msra.mxu0 0.0
    %1774 = vmatprep.subr.mxu0 0.0
    %1775 = vmatpush2.msra.mxu0 0.0
    %1776 = vmatprep.subr.mxu0 0.0
    %1777 = vmatpush2.msra.mxu0 0.0
    %1778 = vmatprep.subr.mxu0 0.0
    %1779 = vmatpush2.msra.mxu0 0.0
    %1780 = vmatprep.subr.mxu0 0.0
    %1781 = vmatpush2.msra.mxu0 0.0
    %1782 = vmatprep.subr.mxu0 0.0
    %1783 = vmatpush2.msra.mxu0 0.0
    %1784 = vmatprep.subr.mxu0 0.0
    %1785 = vmatpush2.msra.mxu0 0.0
    %1786 = vmatprep.subr.mxu0 0.0
    %1787 = vmatpush2.msra.mxu0 0.0
    %1788 = vmatprep.subr.mxu0 0.0
    %1789 = vmatpush2.msra.mxu0 0.0
    %1790 = vmatprep.subr.mxu0 0.0
    %1791 = vmatpush2.msra.mxu0 0.0
    %1792 = vmatprep.subr.mxu0 0.0
    %1793 = vmatpush2.msra.mxu0 0.0
    %1794 = vmatprep.subr.mxu0 0.0
    %1795 = vmatpush2.msra.mxu0 0.0
    %1796 = vmatprep.subr.mxu0 0.0
    %1797 = vmatpush2.msra.mxu0 0.0
    %1798 = vmatprep.subr.mxu0 0.0
    %1799 = vmatpush2.msra.mxu0 0.0
    %1800 = vmatprep.mubr.f32.mxu0 0.0
    %1801 = vmatmul.mubr.f32.gmra.mxu0 %v1734
    %v1802 = vpop.f32.mrf.mxu0
    %v1803 = vadd.f32 0.0, %v1802
    %v1804 = vpop.f32.mrf.mxu0
    %1805 = vdwg.mxu0
    %v1806 = vadd.f32 %v1102, %v1803
    %v1807 = vxor.u32 %v1806, 2147483648
    %v1808 = vmul.f32 %v1807, 1.442695
    %v1809 = vpow.pop %v1808
    %v1810 = vadd.f32 %v1809, 1.0
    %v1811 = vrcp.pop %v1810
    %v1812 = vmul.f32 1.0, %v1811
    %v1813 = vtanh.pop %v1806
    %v1814 = vmul.f32 %v1812, %v1724
    %1816 = vrot.lane.b32.xlu0 %v1813, 64
    %v1817 = vpop.permute.xlu0 %1816
    %v1819 = vmul.f32 %v1812, %v1817
    %1821 = vrot.lane.b32.xlu0 %v1819, 32
    %v1822 = vpop.permute.xlu0 %1821
    %v1824 = vadd.f32 %v1814, %v1822
    %v1825 = vtanh.pop %v1824
    %1827 = vrot.lane.b32.xlu0 %v1825, 64
    %v1828 = vpop.permute.xlu0 %1827
    %v1830 = vmul.f32 %v1812, %v1828
    %v1831 = vld [vmem:[#allocation3] sm:$0xff]
    %v1832 = vld [vmem:[#allocation3 + $0x8] sm:$0xff]
    %v1833 = vld [vmem:[#allocation3 + $0x10] sm:$0xff]
    %v1834 = vld [vmem:[#allocation3 + $0x18] sm:$0xff]
    %v1835 = vld [vmem:[%s9] sm:$0x1]
    %v1837 = vlaneseq
    %v1838 = vshrl.u32 %v1837, 7
    %v1839 = vsub.s32 0, %v1838
    %v1840 = vrot.slane %v1835, %v1839
    %1843 = vrot.lane.b32.xlu0 %v1830, 32
    %v1844 = vpop.permute.xlu0 %1843
    %v1845 = vsel %vm282, %v1844, 0
    %1847 = vmatprep.subr.mxu0 0.0
    %1848 = vmatpush1.msra.mxu0 0.0
    %1849 = vmatprep.subr.mxu0 0.0
    %1850 = vmatpush1.msra.mxu0 0.0
    %1851 = vmatprep.subr.mxu0 0.0
    %1852 = vmatpush1.msra.mxu0 0.0
    %1853 = vmatprep.subr.mxu0 0.0
    %1854 = vmatpush1.msra.mxu0 0.0
    %1855 = vmatprep.subr.mxu0 0.0
    %1856 = vmatpush1.msra.mxu0 0.0
    %1857 = vmatprep.subr.mxu0 0.0
    %1858 = vmatpush1.msra.mxu0 0.0
    %1859 = vmatprep.subr.mxu0 0.0
    %1860 = vmatpush1.msra.mxu0 0.0
    %1861 = vmatprep.subr.mxu0 0.0
    %1862 = vmatpush1.msra.mxu0 0.0
    %1863 = vmatprep.subr.mxu0 0.0
    %1864 = vmatpush1.msra.mxu0 0.0
    %1865 = vmatprep.subr.mxu0 0.0
    %1866 = vmatpush1.msra.mxu0 0.0
    %1867 = vmatprep.subr.mxu0 0.0
    %1868 = vmatpush1.msra.mxu0 0.0
    %1869 = vmatprep.subr.mxu0 0.0
    %1870 = vmatpush1.msra.mxu0 0.0
    %1871 = vmatprep.subr.mxu0 0.0
    %1872 = vmatpush1.msra.mxu0 %v1834
    %1873 = vmatprep.subr.mxu0 0.0
    %1874 = vmatpush1.msra.mxu0 %v1833
    %1875 = vmatprep.subr.mxu0 0.0
    %1876 = vmatpush1.msra.mxu0 %v1832
    %1877 = vmatprep.subr.mxu0 0.0
    %1878 = vmatpush1.msra.mxu0 %v1831
    %1879 = vmatprep.subr.mxu0 0.0
    %1880 = vmatpush2.msra.mxu0 0.0
    %1881 = vmatprep.subr.mxu0 0.0
    %1882 = vmatpush2.msra.mxu0 0.0
    %1883 = vmatprep.subr.mxu0 0.0
    %1884 = vmatpush2.msra.mxu0 0.0
    %1885 = vmatprep.subr.mxu0 0.0
    %1886 = vmatpush2.msra.mxu0 0.0
    %1887 = vmatprep.subr.mxu0 0.0
    %1888 = vmatpush2.msra.mxu0 0.0
    %1889 = vmatprep.subr.mxu0 0.0
    %1890 = vmatpush2.msra.mxu0 0.0
    %1891 = vmatprep.subr.mxu0 0.0
    %1892 = vmatpush2.msra.mxu0 0.0
    %1893 = vmatprep.subr.mxu0 0.0
    %1894 = vmatpush2.msra.mxu0 0.0
    %1895 = vmatprep.subr.mxu0 0.0
    %1896 = vmatpush2.msra.mxu0 0.0
    %1897 = vmatprep.subr.mxu0 0.0
    %1898 = vmatpush2.msra.mxu0 0.0
    %1899 = vmatprep.subr.mxu0 0.0
    %1900 = vmatpush2.msra.mxu0 0.0
    %1901 = vmatprep.subr.mxu0 0.0
    %1902 = vmatpush2.msra.mxu0 0.0
    %1903 = vmatprep.subr.mxu0 0.0
    %1904 = vmatpush2.msra.mxu0 0.0
    %1905 = vmatprep.subr.mxu0 0.0
    %1906 = vmatpush2.msra.mxu0 0.0
    %1907 = vmatprep.subr.mxu0 0.0
    %1908 = vmatpush2.msra.mxu0 0.0
    %1909 = vmatprep.subr.mxu0 0.0
    %1910 = vmatpush2.msra.mxu0 0.0
    %1911 = vmatprep.mubr.f32.mxu0 0.0
    %1912 = vmatmul.mubr.f32.gmra.mxu0 %v1130
    %v1913 = vpop.f32.mrf.mxu0
    %v1914 = vadd.f32 %v1840, %v1913
    %v1915 = vpop.f32.mrf.mxu0
    %1916 = vmatprep.mubr.f32.mxu0 0.0
    %1917 = vmatmul.mubr.f32.gmra.mxu0 %v1234
    %v1918 = vpop.f32.mrf.mxu0
    %v1919 = vadd.f32 %v1840, %v1918
    %v1920 = vpop.f32.mrf.mxu0
    %1921 = vmatprep.mubr.f32.mxu0 0.0
    %1922 = vmatmul.mubr.f32.gmra.mxu0 %v1334
    %v1923 = vpop.f32.mrf.mxu0
    %v1924 = vadd.f32 %v1840, %v1923
    %v1925 = vpop.f32.mrf.mxu0
    %1926 = vmatprep.mubr.f32.mxu0 0.0
    %1927 = vmatmul.mubr.f32.gmra.mxu0 %v1434
    %v1928 = vpop.f32.mrf.mxu0
    %v1929 = vadd.f32 %v1840, %v1928
    %v1930 = vpop.f32.mrf.mxu0
    %1931 = vmatprep.mubr.f32.mxu0 0.0
    %1932 = vmatmul.mubr.f32.gmra.mxu0 %v1534
    %v1933 = vpop.f32.mrf.mxu0
    %v1934 = vadd.f32 %v1840, %v1933
    %v1935 = vpop.f32.mrf.mxu0
    %1936 = vmatprep.mubr.f32.mxu0 0.0
    %1937 = vmatmul.mubr.f32.gmra.mxu0 %v1634
    %v1938 = vpop.f32.mrf.mxu0
    %v1939 = vadd.f32 %v1840, %v1938
    %v1940 = vpop.f32.mrf.mxu0
    %1941 = vmatprep.mubr.f32.mxu0 0.0
    %1942 = vmatmul.mubr.f32.gmra.mxu0 %v1734
    %v1943 = vpop.f32.mrf.mxu0
    %v1944 = vadd.f32 %v1840, %v1943
    %v1945 = vpop.f32.mrf.mxu0
    %1946 = vmatprep.mubr.f32.mxu0 0.0
    %1947 = vmatmul.mubr.f32.gmra.mxu0 %v1845
    %v1948 = vpop.f32.mrf.mxu0
    %v1949 = vadd.f32 %v1840, %v1948
    %v1950 = vpop.f32.mrf.mxu0
    %1951 = vdwg.mxu0
    %v1952 = vld [vmem:[#allocation5] sm:$0xff]
    %v1953 = vld [vmem:[#allocation5 + $0x8] sm:$0xff]
    %v1954 = vld [vmem:[#allocation5 + $0x10] sm:$0xff]
    %v1955 = vld [vmem:[#allocation5 + $0x18] sm:$0xff]
    %v1956 = vxor.u32 %v1914, 2147483648
    %v1957 = vmul.f32 %v1956, 1.442695
    %v1958 = vpow.pop %v1957
    %v1959 = vadd.f32 %v1958, 1.0
    %v1960 = vrcp.pop %v1959
    %v1961 = vmul.f32 1.0, %v1960
    %v1962 = vtanh.pop %v1914
    %1964 = vrot.lane.b32.xlu0 %v1962, 64
    %v1965 = vpop.permute.xlu0 %1964
    %v1967 = vmul.f32 %v1961, %v1965
    %v1968 = vtanh.pop %v1967
    %1970 = vrot.lane.b32.xlu0 %v1968, 96
    %v1971 = vpop.permute.xlu0 %1970
    %v1973 = vmul.f32 %v1961, %v1971
    %1975 = vrot.lane.b32.xlu0 %v1973, 32
    %v1976 = vpop.permute.xlu0 %1975
    %v1977 = vsel %vm282, %v1976, 0
    %1979 = vmatprep.subr.mxu0 0.0
    %1980 = vmatpush1.msra.mxu0 0.0
    %1981 = vmatprep.subr.mxu0 0.0
    %1982 = vmatpush1.msra.mxu0 0.0
    %1983 = vmatprep.subr.mxu0 0.0
    %1984 = vmatpush1.msra.mxu0 0.0
    %1985 = vmatprep.subr.mxu0 0.0
    %1986 = vmatpush1.msra.mxu0 0.0
    %1987 = vmatprep.subr.mxu0 0.0
    %1988 = vmatpush1.msra.mxu0 0.0
    %1989 = vmatprep.subr.mxu0 0.0
    %1990 = vmatpush1.msra.mxu0 0.0
    %1991 = vmatprep.subr.mxu0 0.0
    %1992 = vmatpush1.msra.mxu0 0.0
    %1993 = vmatprep.subr.mxu0 0.0
    %1994 = vmatpush1.msra.mxu0 0.0
    %1995 = vmatprep.subr.mxu0 0.0
    %1996 = vmatpush1.msra.mxu0 0.0
    %1997 = vmatprep.subr.mxu0 0.0
    %1998 = vmatpush1.msra.mxu0 0.0
    %1999 = vmatprep.subr.mxu0 0.0
    %2000 = vmatpush1.msra.mxu0 0.0
    %2001 = vmatprep.subr.mxu0 0.0
    %2002 = vmatpush1.msra.mxu0 0.0
    %2003 = vmatprep.subr.mxu0 0.0
    %2004 = vmatpush1.msra.mxu0 %v1955
    %2005 = vmatprep.subr.mxu0 0.0
    %2006 = vmatpush1.msra.mxu0 %v1954
    %2007 = vmatprep.subr.mxu0 0.0
    %2008 = vmatpush1.msra.mxu0 %v1953
    %2009 = vmatprep.subr.mxu0 0.0
    %2010 = vmatpush1.msra.mxu0 %v1952
    %2011 = vmatprep.subr.mxu0 0.0
    %2012 = vmatpush2.msra.mxu0 0.0
    %2013 = vmatprep.subr.mxu0 0.0
    %2014 = vmatpush2.msra.mxu0 0.0
    %2015 = vmatprep.subr.mxu0 0.0
    %2016 = vmatpush2.msra.mxu0 0.0
    %2017 = vmatprep.subr.mxu0 0.0
    %2018 = vmatpush2.msra.mxu0 0.0
    %2019 = vmatprep.subr.mxu0 0.0
    %2020 = vmatpush2.msra.mxu0 0.0
    %2021 = vmatprep.subr.mxu0 0.0
    %2022 = vmatpush2.msra.mxu0 0.0
    %2023 = vmatprep.subr.mxu0 0.0
    %2024 = vmatpush2.msra.mxu0 0.0
    %2025 = vmatprep.subr.mxu0 0.0
    %2026 = vmatpush2.msra.mxu0 0.0
    %2027 = vmatprep.subr.mxu0 0.0
    %2028 = vmatpush2.msra.mxu0 0.0
    %2029 = vmatprep.subr.mxu0 0.0
    %2030 = vmatpush2.msra.mxu0 0.0
    %2031 = vmatprep.subr.mxu0 0.0
    %2032 = vmatpush2.msra.mxu0 0.0
    %2033 = vmatprep.subr.mxu0 0.0
    %2034 = vmatpush2.msra.mxu0 0.0
    %2035 = vmatprep.subr.mxu0 0.0
    %2036 = vmatpush2.msra.mxu0 0.0
    %2037 = vmatprep.subr.mxu0 0.0
    %2038 = vmatpush2.msra.mxu0 0.0
    %2039 = vmatprep.subr.mxu0 0.0
    %2040 = vmatpush2.msra.mxu0 0.0
    %2041 = vmatprep.subr.mxu0 0.0
    %2042 = vmatpush2.msra.mxu0 0.0
    %2043 = vmatprep.mubr.f32.mxu0 0.0
    %2044 = vmatmul.mubr.f32.gmra.mxu0 %v1977
    %v2045 = vpop.f32.mrf.mxu0
    %v2046 = vadd.f32 0.0, %v2045
    %v2047 = vpop.f32.mrf.mxu0
    %2048 = vdwg.mxu0
    %v2049 = vadd.f32 %v1919, %v2046
    %v2050 = vxor.u32 %v2049, 2147483648
    %v2051 = vmul.f32 %v2050, 1.442695
    %v2052 = vpow.pop %v2051
    %v2053 = vadd.f32 %v2052, 1.0
    %v2054 = vrcp.pop %v2053
    %v2055 = vmul.f32 1.0, %v2054
    %v2056 = vtanh.pop %v2049
    %2058 = vrot.lane.b32.xlu0 %v1967, 32
    %v2059 = vpop.permute.xlu0 %2058
    %v2061 = vmul.f32 %v2055, %v2059
    %2063 = vrot.lane.b32.xlu0 %v2056, 64
    %v2064 = vpop.permute.xlu0 %2063
    %v2066 = vmul.f32 %v2055, %v2064
    %2068 = vrot.lane.b32.xlu0 %v2066, 32
    %v2069 = vpop.permute.xlu0 %2068
    %v2071 = vadd.f32 %v2061, %v2069
    %v2072 = vtanh.pop %v2071
    %2074 = vrot.lane.b32.xlu0 %v2072, 64
    %v2075 = vpop.permute.xlu0 %2074
    %v2077 = vmul.f32 %v2055, %v2075
    %2079 = vrot.lane.b32.xlu0 %v2077, 32
    %v2080 = vpop.permute.xlu0 %2079
    %v2081 = vsel %vm282, %v2080, 0
    %2083 = vmatprep.subr.mxu0 0.0
    %2084 = vmatpush1.msra.mxu0 0.0
    %2085 = vmatprep.subr.mxu0 0.0
    %2086 = vmatpush1.msra.mxu0 0.0
    %2087 = vmatprep.subr.mxu0 0.0
    %2088 = vmatpush1.msra.mxu0 0.0
    %2089 = vmatprep.subr.mxu0 0.0
    %2090 = vmatpush1.msra.mxu0 0.0
    %2091 = vmatprep.subr.mxu0 0.0
    %2092 = vmatpush1.msra.mxu0 0.0
    %2093 = vmatprep.subr.mxu0 0.0
    %2094 = vmatpush1.msra.mxu0 0.0
    %2095 = vmatprep.subr.mxu0 0.0
    %2096 = vmatpush1.msra.mxu0 0.0
    %2097 = vmatprep.subr.mxu0 0.0
    %2098 = vmatpush1.msra.mxu0 0.0
    %2099 = vmatprep.subr.mxu0 0.0
    %2100 = vmatpush1.msra.mxu0 0.0
    %2101 = vmatprep.subr.mxu0 0.0
    %2102 = vmatpush1.msra.mxu0 0.0
    %2103 = vmatprep.subr.mxu0 0.0
    %2104 = vmatpush1.msra.mxu0 0.0
    %2105 = vmatprep.subr.mxu0 0.0
    %2106 = vmatpush1.msra.mxu0 0.0
    %2107 = vmatprep.subr.mxu0 0.0
    %2108 = vmatpush1.msra.mxu0 %v1955
    %2109 = vmatprep.subr.mxu0 0.0
    %2110 = vmatpush1.msra.mxu0 %v1954
    %2111 = vmatprep.subr.mxu0 0.0
    %2112 = vmatpush1.msra.mxu0 %v1953
    %2113 = vmatprep.subr.mxu0 0.0
    %2114 = vmatpush1.msra.mxu0 %v1952
    %2115 = vmatprep.subr.mxu0 0.0
    %2116 = vmatpush2.msra.mxu0 0.0
    %2117 = vmatprep.subr.mxu0 0.0
    %2118 = vmatpush2.msra.mxu0 0.0
    %2119 = vmatprep.subr.mxu0 0.0
    %2120 = vmatpush2.msra.mxu0 0.0
    %2121 = vmatprep.subr.mxu0 0.0
    %2122 = vmatpush2.msra.mxu0 0.0
    %2123 = vmatprep.subr.mxu0 0.0
    %2124 = vmatpush2.msra.mxu0 0.0
    %2125 = vmatprep.subr.mxu0 0.0
    %2126 = vmatpush2.msra.mxu0 0.0
    %2127 = vmatprep.subr.mxu0 0.0
    %2128 = vmatpush2.msra.mxu0 0.0
    %2129 = vmatprep.subr.mxu0 0.0
    %2130 = vmatpush2.msra.mxu0 0.0
    %2131 = vmatprep.subr.mxu0 0.0
    %2132 = vmatpush2.msra.mxu0 0.0
    %2133 = vmatprep.subr.mxu0 0.0
    %2134 = vmatpush2.msra.mxu0 0.0
    %2135 = vmatprep.subr.mxu0 0.0
    %2136 = vmatpush2.msra.mxu0 0.0
    %2137 = vmatprep.subr.mxu0 0.0
    %2138 = vmatpush2.msra.mxu0 0.0
    %2139 = vmatprep.subr.mxu0 0.0
    %2140 = vmatpush2.msra.mxu0 0.0
    %2141 = vmatprep.subr.mxu0 0.0
    %2142 = vmatpush2.msra.mxu0 0.0
    %2143 = vmatprep.subr.mxu0 0.0
    %2144 = vmatpush2.msra.mxu0 0.0
    %2145 = vmatprep.subr.mxu0 0.0
    %2146 = vmatpush2.msra.mxu0 0.0
    %2147 = vmatprep.mubr.f32.mxu0 0.0
    %2148 = vmatmul.mubr.f32.gmra.mxu0 %v2081
    %v2149 = vpop.f32.mrf.mxu0
    %v2150 = vadd.f32 0.0, %v2149
    %v2151 = vpop.f32.mrf.mxu0
    %2152 = vdwg.mxu0
    %v2153 = vadd.f32 %v1924, %v2150
    %v2154 = vxor.u32 %v2153, 2147483648
    %v2155 = vmul.f32 %v2154, 1.442695
    %v2156 = vpow.pop %v2155
    %v2157 = vadd.f32 %v2156, 1.0
    %v2158 = vrcp.pop %v2157
    %v2159 = vmul.f32 1.0, %v2158
    %v2160 = vtanh.pop %v2153
    %v2161 = vmul.f32 %v2159, %v2071
    %2163 = vrot.lane.b32.xlu0 %v2160, 64
    %v2164 = vpop.permute.xlu0 %2163
    %v2166 = vmul.f32 %v2159, %v2164
    %2168 = vrot.lane.b32.xlu0 %v2166, 32
    %v2169 = vpop.permute.xlu0 %2168
    %v2171 = vadd.f32 %v2161, %v2169
    %v2172 = vtanh.pop %v2171
    %2174 = vrot.lane.b32.xlu0 %v2172, 64
    %v2175 = vpop.permute.xlu0 %2174
    %v2177 = vmul.f32 %v2159, %v2175
    %2179 = vrot.lane.b32.xlu0 %v2177, 32
    %v2180 = vpop.permute.xlu0 %2179
    %v2181 = vsel %vm282, %v2180, 0
    %2183 = vmatprep.subr.mxu0 0.0
    %2184 = vmatpush1.msra.mxu0 0.0
    %2185 = vmatprep.subr.mxu0 0.0
    %2186 = vmatpush1.msra.mxu0 0.0
    %2187 = vmatprep.subr.mxu0 0.0
    %2188 = vmatpush1.msra.mxu0 0.0
    %2189 = vmatprep.subr.mxu0 0.0
    %2190 = vmatpush1.msra.mxu0 0.0
    %2191 = vmatprep.subr.mxu0 0.0
    %2192 = vmatpush1.msra.mxu0 0.0
    %2193 = vmatprep.subr.mxu0 0.0
    %2194 = vmatpush1.msra.mxu0 0.0
    %2195 = vmatprep.subr.mxu0 0.0
    %2196 = vmatpush1.msra.mxu0 0.0
    %2197 = vmatprep.subr.mxu0 0.0
    %2198 = vmatpush1.msra.mxu0 0.0
    %2199 = vmatprep.subr.mxu0 0.0
    %2200 = vmatpush1.msra.mxu0 0.0
    %2201 = vmatprep.subr.mxu0 0.0
    %2202 = vmatpush1.msra.mxu0 0.0
    %2203 = vmatprep.subr.mxu0 0.0
    %2204 = vmatpush1.msra.mxu0 0.0
    %2205 = vmatprep.subr.mxu0 0.0
    %2206 = vmatpush1.msra.mxu0 0.0
    %2207 = vmatprep.subr.mxu0 0.0
    %2208 = vmatpush1.msra.mxu0 %v1955
    %2209 = vmatprep.subr.mxu0 0.0
    %2210 = vmatpush1.msra.mxu0 %v1954
    %2211 = vmatprep.subr.mxu0 0.0
    %2212 = vmatpush1.msra.mxu0 %v1953
    %2213 = vmatprep.subr.mxu0 0.0
    %2214 = vmatpush1.msra.mxu0 %v1952
    %2215 = vmatprep.subr.mxu0 0.0
    %2216 = vmatpush2.msra.mxu0 0.0
    %2217 = vmatprep.subr.mxu0 0.0
    %2218 = vmatpush2.msra.mxu0 0.0
    %2219 = vmatprep.subr.mxu0 0.0
    %2220 = vmatpush2.msra.mxu0 0.0
    %2221 = vmatprep.subr.mxu0 0.0
    %2222 = vmatpush2.msra.mxu0 0.0
    %2223 = vmatprep.subr.mxu0 0.0
    %2224 = vmatpush2.msra.mxu0 0.0
    %2225 = vmatprep.subr.mxu0 0.0
    %2226 = vmatpush2.msra.mxu0 0.0
    %2227 = vmatprep.subr.mxu0 0.0
    %2228 = vmatpush2.msra.mxu0 0.0
    %2229 = vmatprep.subr.mxu0 0.0
    %2230 = vmatpush2.msra.mxu0 0.0
    %2231 = vmatprep.subr.mxu0 0.0
    %2232 = vmatpush2.msra.mxu0 0.0
    %2233 = vmatprep.subr.mxu0 0.0
    %2234 = vmatpush2.msra.mxu0 0.0
    %2235 = vmatprep.subr.mxu0 0.0
    %2236 = vmatpush2.msra.mxu0 0.0
    %2237 = vmatprep.subr.mxu0 0.0
    %2238 = vmatpush2.msra.mxu0 0.0
    %2239 = vmatprep.subr.mxu0 0.0
    %2240 = vmatpush2.msra.mxu0 0.0
    %2241 = vmatprep.subr.mxu0 0.0
    %2242 = vmatpush2.msra.mxu0 0.0
    %2243 = vmatprep.subr.mxu0 0.0
    %2244 = vmatpush2.msra.mxu0 0.0
    %2245 = vmatprep.subr.mxu0 0.0
    %2246 = vmatpush2.msra.mxu0 0.0
    %2247 = vmatprep.mubr.f32.mxu0 0.0
    %2248 = vmatmul.mubr.f32.gmra.mxu0 %v2181
    %v2249 = vpop.f32.mrf.mxu0
    %v2250 = vadd.f32 0.0, %v2249
    %v2251 = vpop.f32.mrf.mxu0
    %2252 = vdwg.mxu0
    %v2253 = vadd.f32 %v1929, %v2250
    %v2254 = vxor.u32 %v2253, 2147483648
    %v2255 = vmul.f32 %v2254, 1.442695
    %v2256 = vpow.pop %v2255
    %v2257 = vadd.f32 %v2256, 1.0
    %v2258 = vrcp.pop %v2257
    %v2259 = vmul.f32 1.0, %v2258
    %v2260 = vtanh.pop %v2253
    %v2261 = vmul.f32 %v2259, %v2171
    %2263 = vrot.lane.b32.xlu0 %v2260, 64
    %v2264 = vpop.permute.xlu0 %2263
    %v2266 = vmul.f32 %v2259, %v2264
    %2268 = vrot.lane.b32.xlu0 %v2266, 32
    %v2269 = vpop.permute.xlu0 %2268
    %v2271 = vadd.f32 %v2261, %v2269
    %v2272 = vtanh.pop %v2271
    %2274 = vrot.lane.b32.xlu0 %v2272, 64
    %v2275 = vpop.permute.xlu0 %2274
    %v2277 = vmul.f32 %v2259, %v2275
    %2279 = vrot.lane.b32.xlu0 %v2277, 32
    %v2280 = vpop.permute.xlu0 %2279
    %v2281 = vsel %vm282, %v2280, 0
    %2283 = vmatprep.subr.mxu0 0.0
    %2284 = vmatpush1.msra.mxu0 0.0
    %2285 = vmatprep.subr.mxu0 0.0
    %2286 = vmatpush1.msra.mxu0 0.0
    %2287 = vmatprep.subr.mxu0 0.0
    %2288 = vmatpush1.msra.mxu0 0.0
    %2289 = vmatprep.subr.mxu0 0.0
    %2290 = vmatpush1.msra.mxu0 0.0
    %2291 = vmatprep.subr.mxu0 0.0
    %2292 = vmatpush1.msra.mxu0 0.0
    %2293 = vmatprep.subr.mxu0 0.0
    %2294 = vmatpush1.msra.mxu0 0.0
    %2295 = vmatprep.subr.mxu0 0.0
    %2296 = vmatpush1.msra.mxu0 0.0
    %2297 = vmatprep.subr.mxu0 0.0
    %2298 = vmatpush1.msra.mxu0 0.0
    %2299 = vmatprep.subr.mxu0 0.0
    %2300 = vmatpush1.msra.mxu0 0.0
    %2301 = vmatprep.subr.mxu0 0.0
    %2302 = vmatpush1.msra.mxu0 0.0
    %2303 = vmatprep.subr.mxu0 0.0
    %2304 = vmatpush1.msra.mxu0 0.0
    %2305 = vmatprep.subr.mxu0 0.0
    %2306 = vmatpush1.msra.mxu0 0.0
    %2307 = vmatprep.subr.mxu0 0.0
    %2308 = vmatpush1.msra.mxu0 %v1955
    %2309 = vmatprep.subr.mxu0 0.0
    %2310 = vmatpush1.msra.mxu0 %v1954
    %2311 = vmatprep.subr.mxu0 0.0
    %2312 = vmatpush1.msra.mxu0 %v1953
    %2313 = vmatprep.subr.mxu0 0.0
    %2314 = vmatpush1.msra.mxu0 %v1952
    %2315 = vmatprep.subr.mxu0 0.0
    %2316 = vmatpush2.msra.mxu0 0.0
    %2317 = vmatprep.subr.mxu0 0.0
    %2318 = vmatpush2.msra.mxu0 0.0
    %2319 = vmatprep.subr.mxu0 0.0
    %2320 = vmatpush2.msra.mxu0 0.0
    %2321 = vmatprep.subr.mxu0 0.0
    %2322 = vmatpush2.msra.mxu0 0.0
    %2323 = vmatprep.subr.mxu0 0.0
    %2324 = vmatpush2.msra.mxu0 0.0
    %2325 = vmatprep.subr.mxu0 0.0
    %2326 = vmatpush2.msra.mxu0 0.0
    %2327 = vmatprep.subr.mxu0 0.0
    %2328 = vmatpush2.msra.mxu0 0.0
    %2329 = vmatprep.subr.mxu0 0.0
    %2330 = vmatpush2.msra.mxu0 0.0
    %2331 = vmatprep.subr.mxu0 0.0
    %2332 = vmatpush2.msra.mxu0 0.0
    %2333 = vmatprep.subr.mxu0 0.0
    %2334 = vmatpush2.msra.mxu0 0.0
    %2335 = vmatprep.subr.mxu0 0.0
    %2336 = vmatpush2.msra.mxu0 0.0
    %2337 = vmatprep.subr.mxu0 0.0
    %2338 = vmatpush2.msra.mxu0 0.0
    %2339 = vmatprep.subr.mxu0 0.0
    %2340 = vmatpush2.msra.mxu0 0.0
    %2341 = vmatprep.subr.mxu0 0.0
    %2342 = vmatpush2.msra.mxu0 0.0
    %2343 = vmatprep.subr.mxu0 0.0
    %2344 = vmatpush2.msra.mxu0 0.0
    %2345 = vmatprep.subr.mxu0 0.0
    %2346 = vmatpush2.msra.mxu0 0.0
    %2347 = vmatprep.mubr.f32.mxu0 0.0
    %2348 = vmatmul.mubr.f32.gmra.mxu0 %v2281
    %v2349 = vpop.f32.mrf.mxu0
    %v2350 = vadd.f32 0.0, %v2349
    %v2351 = vpop.f32.mrf.mxu0
    %2352 = vdwg.mxu0
    %v2353 = vadd.f32 %v1934, %v2350
    %v2354 = vxor.u32 %v2353, 2147483648
    %v2355 = vmul.f32 %v2354, 1.442695
    %v2356 = vpow.pop %v2355
    %v2357 = vadd.f32 %v2356, 1.0
    %v2358 = vrcp.pop %v2357
    %v2359 = vmul.f32 1.0, %v2358
    %v2360 = vtanh.pop %v2353
    %v2361 = vmul.f32 %v2359, %v2271
    %2363 = vrot.lane.b32.xlu0 %v2360, 64
    %v2364 = vpop.permute.xlu0 %2363
    %v2366 = vmul.f32 %v2359, %v2364
    %2368 = vrot.lane.b32.xlu0 %v2366, 32
    %v2369 = vpop.permute.xlu0 %2368
    %v2371 = vadd.f32 %v2361, %v2369
    %v2372 = vtanh.pop %v2371
    %2374 = vrot.lane.b32.xlu0 %v2372, 64
    %v2375 = vpop.permute.xlu0 %2374
    %v2377 = vmul.f32 %v2359, %v2375
    %2379 = vrot.lane.b32.xlu0 %v2377, 32
    %v2380 = vpop.permute.xlu0 %2379
    %v2381 = vsel %vm282, %v2380, 0
    %2383 = vmatprep.subr.mxu0 0.0
    %2384 = vmatpush1.msra.mxu0 0.0
    %2385 = vmatprep.subr.mxu0 0.0
    %2386 = vmatpush1.msra.mxu0 0.0
    %2387 = vmatprep.subr.mxu0 0.0
    %2388 = vmatpush1.msra.mxu0 0.0
    %2389 = vmatprep.subr.mxu0 0.0
    %2390 = vmatpush1.msra.mxu0 0.0
    %2391 = vmatprep.subr.mxu0 0.0
    %2392 = vmatpush1.msra.mxu0 0.0
    %2393 = vmatprep.subr.mxu0 0.0
    %2394 = vmatpush1.msra.mxu0 0.0
    %2395 = vmatprep.subr.mxu0 0.0
    %2396 = vmatpush1.msra.mxu0 0.0
    %2397 = vmatprep.subr.mxu0 0.0
    %2398 = vmatpush1.msra.mxu0 0.0
    %2399 = vmatprep.subr.mxu0 0.0
    %2400 = vmatpush1.msra.mxu0 0.0
    %2401 = vmatprep.subr.mxu0 0.0
    %2402 = vmatpush1.msra.mxu0 0.0
    %2403 = vmatprep.subr.mxu0 0.0
    %2404 = vmatpush1.msra.mxu0 0.0
    %2405 = vmatprep.subr.mxu0 0.0
    %2406 = vmatpush1.msra.mxu0 0.0
    %2407 = vmatprep.subr.mxu0 0.0
    %2408 = vmatpush1.msra.mxu0 %v1955
    %2409 = vmatprep.subr.mxu0 0.0
    %2410 = vmatpush1.msra.mxu0 %v1954
    %2411 = vmatprep.subr.mxu0 0.0
    %2412 = vmatpush1.msra.mxu0 %v1953
    %2413 = vmatprep.subr.mxu0 0.0
    %2414 = vmatpush1.msra.mxu0 %v1952
    %2415 = vmatprep.subr.mxu0 0.0
    %2416 = vmatpush2.msra.mxu0 0.0
    %2417 = vmatprep.subr.mxu0 0.0
    %2418 = vmatpush2.msra.mxu0 0.0
    %2419 = vmatprep.subr.mxu0 0.0
    %2420 = vmatpush2.msra.mxu0 0.0
    %2421 = vmatprep.subr.mxu0 0.0
    %2422 = vmatpush2.msra.mxu0 0.0
    %2423 = vmatprep.subr.mxu0 0.0
    %2424 = vmatpush2.msra.mxu0 0.0
    %2425 = vmatprep.subr.mxu0 0.0
    %2426 = vmatpush2.msra.mxu0 0.0
    %2427 = vmatprep.subr.mxu0 0.0
    %2428 = vmatpush2.msra.mxu0 0.0
    %2429 = vmatprep.subr.mxu0 0.0
    %2430 = vmatpush2.msra.mxu0 0.0
    %2431 = vmatprep.subr.mxu0 0.0
    %2432 = vmatpush2.msra.mxu0 0.0
    %2433 = vmatprep.subr.mxu0 0.0
    %2434 = vmatpush2.msra.mxu0 0.0
    %2435 = vmatprep.subr.mxu0 0.0
    %2436 = vmatpush2.msra.mxu0 0.0
    %2437 = vmatprep.subr.mxu0 0.0
    %2438 = vmatpush2.msra.mxu0 0.0
    %2439 = vmatprep.subr.mxu0 0.0
    %2440 = vmatpush2.msra.mxu0 0.0
    %2441 = vmatprep.subr.mxu0 0.0
    %2442 = vmatpush2.msra.mxu0 0.0
    %2443 = vmatprep.subr.mxu0 0.0
    %2444 = vmatpush2.msra.mxu0 0.0
    %2445 = vmatprep.subr.mxu0 0.0
    %2446 = vmatpush2.msra.mxu0 0.0
    %2447 = vmatprep.mubr.f32.mxu0 0.0
    %2448 = vmatmul.mubr.f32.gmra.mxu0 %v2381
    %v2449 = vpop.f32.mrf.mxu0
    %v2450 = vadd.f32 0.0, %v2449
    %v2451 = vpop.f32.mrf.mxu0
    %2452 = vdwg.mxu0
    %v2453 = vadd.f32 %v1939, %v2450
    %v2454 = vxor.u32 %v2453, 2147483648
    %v2455 = vmul.f32 %v2454, 1.442695
    %v2456 = vpow.pop %v2455
    %v2457 = vadd.f32 %v2456, 1.0
    %v2458 = vrcp.pop %v2457
    %v2459 = vmul.f32 1.0, %v2458
    %v2460 = vtanh.pop %v2453
    %v2461 = vmul.f32 %v2459, %v2371
    %2463 = vrot.lane.b32.xlu0 %v2460, 64
    %v2464 = vpop.permute.xlu0 %2463
    %v2466 = vmul.f32 %v2459, %v2464
    %2468 = vrot.lane.b32.xlu0 %v2466, 32
    %v2469 = vpop.permute.xlu0 %2468
    %v2471 = vadd.f32 %v2461, %v2469
    %v2472 = vtanh.pop %v2471
    %2474 = vrot.lane.b32.xlu0 %v2472, 64
    %v2475 = vpop.permute.xlu0 %2474
    %v2477 = vmul.f32 %v2459, %v2475
    %2479 = vrot.lane.b32.xlu0 %v2477, 32
    %v2480 = vpop.permute.xlu0 %2479
    %v2481 = vsel %vm282, %v2480, 0
    %2483 = vmatprep.subr.mxu0 0.0
    %2484 = vmatpush1.msra.mxu0 0.0
    %2485 = vmatprep.subr.mxu0 0.0
    %2486 = vmatpush1.msra.mxu0 0.0
    %2487 = vmatprep.subr.mxu0 0.0
    %2488 = vmatpush1.msra.mxu0 0.0
    %2489 = vmatprep.subr.mxu0 0.0
    %2490 = vmatpush1.msra.mxu0 0.0
    %2491 = vmatprep.subr.mxu0 0.0
    %2492 = vmatpush1.msra.mxu0 0.0
    %2493 = vmatprep.subr.mxu0 0.0
    %2494 = vmatpush1.msra.mxu0 0.0
    %2495 = vmatprep.subr.mxu0 0.0
    %2496 = vmatpush1.msra.mxu0 0.0
    %2497 = vmatprep.subr.mxu0 0.0
    %2498 = vmatpush1.msra.mxu0 0.0
    %2499 = vmatprep.subr.mxu0 0.0
    %2500 = vmatpush1.msra.mxu0 0.0
    %2501 = vmatprep.subr.mxu0 0.0
    %2502 = vmatpush1.msra.mxu0 0.0
    %2503 = vmatprep.subr.mxu0 0.0
    %2504 = vmatpush1.msra.mxu0 0.0
    %2505 = vmatprep.subr.mxu0 0.0
    %2506 = vmatpush1.msra.mxu0 0.0
    %2507 = vmatprep.subr.mxu0 0.0
    %2508 = vmatpush1.msra.mxu0 %v1955
    %2509 = vmatprep.subr.mxu0 0.0
    %2510 = vmatpush1.msra.mxu0 %v1954
    %2511 = vmatprep.subr.mxu0 0.0
    %2512 = vmatpush1.msra.mxu0 %v1953
    %2513 = vmatprep.subr.mxu0 0.0
    %2514 = vmatpush1.msra.mxu0 %v1952
    %2515 = vmatprep.subr.mxu0 0.0
    %2516 = vmatpush2.msra.mxu0 0.0
    %2517 = vmatprep.subr.mxu0 0.0
    %2518 = vmatpush2.msra.mxu0 0.0
    %2519 = vmatprep.subr.mxu0 0.0
    %2520 = vmatpush2.msra.mxu0 0.0
    %2521 = vmatprep.subr.mxu0 0.0
    %2522 = vmatpush2.msra.mxu0 0.0
    %2523 = vmatprep.subr.mxu0 0.0
    %2524 = vmatpush2.msra.mxu0 0.0
    %2525 = vmatprep.subr.mxu0 0.0
    %2526 = vmatpush2.msra.mxu0 0.0
    %2527 = vmatprep.subr.mxu0 0.0
    %2528 = vmatpush2.msra.mxu0 0.0
    %2529 = vmatprep.subr.mxu0 0.0
    %2530 = vmatpush2.msra.mxu0 0.0
    %2531 = vmatprep.subr.mxu0 0.0
    %2532 = vmatpush2.msra.mxu0 0.0
    %2533 = vmatprep.subr.mxu0 0.0
    %2534 = vmatpush2.msra.mxu0 0.0
    %2535 = vmatprep.subr.mxu0 0.0
    %2536 = vmatpush2.msra.mxu0 0.0
    %2537 = vmatprep.subr.mxu0 0.0
    %2538 = vmatpush2.msra.mxu0 0.0
    %2539 = vmatprep.subr.mxu0 0.0
    %2540 = vmatpush2.msra.mxu0 0.0
    %2541 = vmatprep.subr.mxu0 0.0
    %2542 = vmatpush2.msra.mxu0 0.0
    %2543 = vmatprep.subr.mxu0 0.0
    %2544 = vmatpush2.msra.mxu0 0.0
    %2545 = vmatprep.subr.mxu0 0.0
    %2546 = vmatpush2.msra.mxu0 0.0
    %2547 = vmatprep.mubr.f32.mxu0 0.0
    %2548 = vmatmul.mubr.f32.gmra.mxu0 %v2481
    %v2549 = vpop.f32.mrf.mxu0
    %v2550 = vadd.f32 0.0, %v2549
    %v2551 = vpop.f32.mrf.mxu0
    %2552 = vdwg.mxu0
    %v2553 = vadd.f32 %v1944, %v2550
    %v2554 = vxor.u32 %v2553, 2147483648
    %v2555 = vmul.f32 %v2554, 1.442695
    %v2556 = vpow.pop %v2555
    %v2557 = vadd.f32 %v2556, 1.0
    %v2558 = vrcp.pop %v2557
    %v2559 = vmul.f32 1.0, %v2558
    %v2560 = vtanh.pop %v2553
    %v2561 = vmul.f32 %v2559, %v2471
    %2563 = vrot.lane.b32.xlu0 %v2560, 64
    %v2564 = vpop.permute.xlu0 %2563
    %v2566 = vmul.f32 %v2559, %v2564
    %2568 = vrot.lane.b32.xlu0 %v2566, 32
    %v2569 = vpop.permute.xlu0 %2568
    %v2571 = vadd.f32 %v2561, %v2569
    %v2572 = vtanh.pop %v2571
    %2574 = vrot.lane.b32.xlu0 %v2572, 64
    %v2575 = vpop.permute.xlu0 %2574
    %v2577 = vmul.f32 %v2559, %v2575
    %2579 = vrot.lane.b32.xlu0 %v2577, 32
    %v2580 = vpop.permute.xlu0 %2579
    %v2581 = vsel %vm282, %v2580, 0
    %2583 = vmatprep.subr.mxu0 0.0
    %2584 = vmatpush1.msra.mxu0 0.0
    %2585 = vmatprep.subr.mxu0 0.0
    %2586 = vmatpush1.msra.mxu0 0.0
    %2587 = vmatprep.subr.mxu0 0.0
    %2588 = vmatpush1.msra.mxu0 0.0
    %2589 = vmatprep.subr.mxu0 0.0
    %2590 = vmatpush1.msra.mxu0 0.0
    %2591 = vmatprep.subr.mxu0 0.0
    %2592 = vmatpush1.msra.mxu0 0.0
    %2593 = vmatprep.subr.mxu0 0.0
    %2594 = vmatpush1.msra.mxu0 0.0
    %2595 = vmatprep.subr.mxu0 0.0
    %2596 = vmatpush1.msra.mxu0 0.0
    %2597 = vmatprep.subr.mxu0 0.0
    %2598 = vmatpush1.msra.mxu0 0.0
    %2599 = vmatprep.subr.mxu0 0.0
    %2600 = vmatpush1.msra.mxu0 0.0
    %2601 = vmatprep.subr.mxu0 0.0
    %2602 = vmatpush1.msra.mxu0 0.0
    %2603 = vmatprep.subr.mxu0 0.0
    %2604 = vmatpush1.msra.mxu0 0.0
    %2605 = vmatprep.subr.mxu0 0.0
    %2606 = vmatpush1.msra.mxu0 0.0
    %2607 = vmatprep.subr.mxu0 0.0
    %2608 = vmatpush1.msra.mxu0 %v1955
    %2609 = vmatprep.subr.mxu0 0.0
    %2610 = vmatpush1.msra.mxu0 %v1954
    %2611 = vmatprep.subr.mxu0 0.0
    %2612 = vmatpush1.msra.mxu0 %v1953
    %2613 = vmatprep.subr.mxu0 0.0
    %2614 = vmatpush1.msra.mxu0 %v1952
    %2615 = vmatprep.subr.mxu0 0.0
    %2616 = vmatpush2.msra.mxu0 0.0
    %2617 = vmatprep.subr.mxu0 0.0
    %2618 = vmatpush2.msra.mxu0 0.0
    %2619 = vmatprep.subr.mxu0 0.0
    %2620 = vmatpush2.msra.mxu0 0.0
    %2621 = vmatprep.subr.mxu0 0.0
    %2622 = vmatpush2.msra.mxu0 0.0
    %2623 = vmatprep.subr.mxu0 0.0
    %2624 = vmatpush2.msra.mxu0 0.0
    %2625 = vmatprep.subr.mxu0 0.0
    %2626 = vmatpush2.msra.mxu0 0.0
    %2627 = vmatprep.subr.mxu0 0.0
    %2628 = vmatpush2.msra.mxu0 0.0
    %2629 = vmatprep.subr.mxu0 0.0
    %2630 = vmatpush2.msra.mxu0 0.0
    %2631 = vmatprep.subr.mxu0 0.0
    %2632 = vmatpush2.msra.mxu0 0.0
    %2633 = vmatprep.subr.mxu0 0.0
    %2634 = vmatpush2.msra.mxu0 0.0
    %2635 = vmatprep.subr.mxu0 0.0
    %2636 = vmatpush2.msra.mxu0 0.0
    %2637 = vmatprep.subr.mxu0 0.0
    %2638 = vmatpush2.msra.mxu0 0.0
    %2639 = vmatprep.subr.mxu0 0.0
    %2640 = vmatpush2.msra.mxu0 0.0
    %2641 = vmatprep.subr.mxu0 0.0
    %2642 = vmatpush2.msra.mxu0 0.0
    %2643 = vmatprep.subr.mxu0 0.0
    %2644 = vmatpush2.msra.mxu0 0.0
    %2645 = vmatprep.subr.mxu0 0.0
    %2646 = vmatpush2.msra.mxu0 0.0
    %2647 = vmatprep.mubr.f32.mxu0 0.0
    %2648 = vmatmul.mubr.f32.gmra.mxu0 %v2581
    %v2649 = vpop.f32.mrf.mxu0
    %v2650 = vadd.f32 0.0, %v2649
    %v2651 = vpop.f32.mrf.mxu0
    %2652 = vdwg.mxu0
    %v2653 = vadd.f32 %v1949, %v2650
    %v2654 = vxor.u32 %v2653, 2147483648
    %v2655 = vmul.f32 %v2654, 1.442695
    %v2656 = vpow.pop %v2655
    %v2657 = vadd.f32 %v2656, 1.0
    %v2658 = vrcp.pop %v2657
    %v2659 = vmul.f32 1.0, %v2658
    %v2660 = vtanh.pop %v2653
    %v2661 = vmul.f32 %v2659, %v2571
    %2663 = vrot.lane.b32.xlu0 %v2660, 64
    %v2664 = vpop.permute.xlu0 %2663
    %v2666 = vmul.f32 %v2659, %v2664
    %2668 = vrot.lane.b32.xlu0 %v2666, 32
    %v2669 = vpop.permute.xlu0 %2668
    %v2671 = vadd.f32 %v2661, %v2669
    %v2672 = vtanh.pop %v2671
    %2674 = vrot.lane.b32.xlu0 %v2672, 64
    %v2675 = vpop.permute.xlu0 %2674
    %v2677 = vmul.f32 %v2659, %v2675
    %v2678 = vld [vmem:[#allocation7] sm:$0xff]
    %v2679 = vld [vmem:[#allocation7 + $0x8] sm:$0xff]
    %v2680 = vld [vmem:[#allocation7 + $0x10] sm:$0xff]
    %v2681 = vld [vmem:[#allocation7 + $0x18] sm:$0xff]
    %v2682 = vld [vmem:[%s12] sm:$0x1]
    %v2684 = vlaneseq
    %v2685 = vshrl.u32 %v2684, 7
    %v2686 = vsub.s32 0, %v2685
    %v2687 = vrot.slane %v2682, %v2686
    %2690 = vrot.lane.b32.xlu0 %v2677, 32
    %v2691 = vpop.permute.xlu0 %2690
    %v2692 = vsel %vm282, %v2691, 0
    %2694 = vmatprep.subr.mxu0 0.0
    %2695 = vmatpush1.msra.mxu0 0.0
    %2696 = vmatprep.subr.mxu0 0.0
    %2697 = vmatpush1.msra.mxu0 0.0
    %2698 = vmatprep.subr.mxu0 0.0
    %2699 = vmatpush1.msra.mxu0 0.0
    %2700 = vmatprep.subr.mxu0 0.0
    %2701 = vmatpush1.msra.mxu0 0.0
    %2702 = vmatprep.subr.mxu0 0.0
    %2703 = vmatpush1.msra.mxu0 0.0
    %2704 = vmatprep.subr.mxu0 0.0
    %2705 = vmatpush1.msra.mxu0 0.0
    %2706 = vmatprep.subr.mxu0 0.0
    %2707 = vmatpush1.msra.mxu0 0.0
    %2708 = vmatprep.subr.mxu0 0.0
    %2709 = vmatpush1.msra.mxu0 0.0
    %2710 = vmatprep.subr.mxu0 0.0
    %2711 = vmatpush1.msra.mxu0 0.0
    %2712 = vmatprep.subr.mxu0 0.0
    %2713 = vmatpush1.msra.mxu0 0.0
    %2714 = vmatprep.subr.mxu0 0.0
    %2715 = vmatpush1.msra.mxu0 0.0
    %2716 = vmatprep.subr.mxu0 0.0
    %2717 = vmatpush1.msra.mxu0 0.0
    %2718 = vmatprep.subr.mxu0 0.0
    %2719 = vmatpush1.msra.mxu0 %v2681
    %2720 = vmatprep.subr.mxu0 0.0
    %2721 = vmatpush1.msra.mxu0 %v2680
    %2722 = vmatprep.subr.mxu0 0.0
    %2723 = vmatpush1.msra.mxu0 %v2679
    %2724 = vmatprep.subr.mxu0 0.0
    %2725 = vmatpush1.msra.mxu0 %v2678
    %2726 = vmatprep.subr.mxu0 0.0
    %2727 = vmatpush2.msra.mxu0 0.0
    %2728 = vmatprep.subr.mxu0 0.0
    %2729 = vmatpush2.msra.mxu0 0.0
    %2730 = vmatprep.subr.mxu0 0.0
    %2731 = vmatpush2.msra.mxu0 0.0
    %2732 = vmatprep.subr.mxu0 0.0
    %2733 = vmatpush2.msra.mxu0 0.0
    %2734 = vmatprep.subr.mxu0 0.0
    %2735 = vmatpush2.msra.mxu0 0.0
    %2736 = vmatprep.subr.mxu0 0.0
    %2737 = vmatpush2.msra.mxu0 0.0
    %2738 = vmatprep.subr.mxu0 0.0
    %2739 = vmatpush2.msra.mxu0 0.0
    %2740 = vmatprep.subr.mxu0 0.0
    %2741 = vmatpush2.msra.mxu0 0.0
    %2742 = vmatprep.subr.mxu0 0.0
    %2743 = vmatpush2.msra.mxu0 0.0
    %2744 = vmatprep.subr.mxu0 0.0
    %2745 = vmatpush2.msra.mxu0 0.0
    %2746 = vmatprep.subr.mxu0 0.0
    %2747 = vmatpush2.msra.mxu0 0.0
    %2748 = vmatprep.subr.mxu0 0.0
    %2749 = vmatpush2.msra.mxu0 0.0
    %2750 = vmatprep.subr.mxu0 0.0
    %2751 = vmatpush2.msra.mxu0 0.0
    %2752 = vmatprep.subr.mxu0 0.0
    %2753 = vmatpush2.msra.mxu0 0.0
    %2754 = vmatprep.subr.mxu0 0.0
    %2755 = vmatpush2.msra.mxu0 0.0
    %2756 = vmatprep.subr.mxu0 0.0
    %2757 = vmatpush2.msra.mxu0 0.0
    %2758 = vmatprep.mubr.f32.mxu0 0.0
    %2759 = vmatmul.mubr.f32.gmra.mxu0 %v1977
    %v2760 = vpop.f32.mrf.mxu0
    %v2761 = vadd.f32 %v2687, %v2760
    %v2762 = vpop.f32.mrf.mxu0
    %2763 = vmatprep.mubr.f32.mxu0 0.0
    %2764 = vmatmul.mubr.f32.gmra.mxu0 %v2081
    %v2765 = vpop.f32.mrf.mxu0
    %v2766 = vadd.f32 %v2687, %v2765
    %v2767 = vpop.f32.mrf.mxu0
    %2768 = vmatprep.mubr.f32.mxu0 0.0
    %2769 = vmatmul.mubr.f32.gmra.mxu0 %v2181
    %v2770 = vpop.f32.mrf.mxu0
    %v2771 = vadd.f32 %v2687, %v2770
    %v2772 = vpop.f32.mrf.mxu0
    %2773 = vmatprep.mubr.f32.mxu0 0.0
    %2774 = vmatmul.mubr.f32.gmra.mxu0 %v2281
    %v2775 = vpop.f32.mrf.mxu0
    %v2776 = vadd.f32 %v2687, %v2775
    %v2777 = vpop.f32.mrf.mxu0
    %2778 = vmatprep.mubr.f32.mxu0 0.0
    %2779 = vmatmul.mubr.f32.gmra.mxu0 %v2381
    %v2780 = vpop.f32.mrf.mxu0
    %v2781 = vadd.f32 %v2687, %v2780
    %v2782 = vpop.f32.mrf.mxu0
    %2783 = vmatprep.mubr.f32.mxu0 0.0
    %2784 = vmatmul.mubr.f32.gmra.mxu0 %v2481
    %v2785 = vpop.f32.mrf.mxu0
    %v2786 = vadd.f32 %v2687, %v2785
    %v2787 = vpop.f32.mrf.mxu0
    %2788 = vmatprep.mubr.f32.mxu0 0.0
    %2789 = vmatmul.mubr.f32.gmra.mxu0 %v2581
    %v2790 = vpop.f32.mrf.mxu0
    %v2791 = vadd.f32 %v2687, %v2790
    %v2792 = vpop.f32.mrf.mxu0
    %2793 = vmatprep.mubr.f32.mxu0 0.0
    %2794 = vmatmul.mubr.f32.gmra.mxu0 %v2692
    %v2795 = vpop.f32.mrf.mxu0
    %v2796 = vadd.f32 %v2687, %v2795
    %v2797 = vpop.f32.mrf.mxu0
    %2798 = vdwg.mxu0
    %v2799 = vld [vmem:[#allocation8] sm:$0xff]
    %v2800 = vld [vmem:[#allocation8 + $0x8] sm:$0xff]
    %v2801 = vld [vmem:[#allocation8 + $0x10] sm:$0xff]
    %v2802 = vld [vmem:[#allocation8 + $0x18] sm:$0xff]
    %v2803 = vxor.u32 %v2761, 2147483648
    %v2804 = vmul.f32 %v2803, 1.442695
    %v2805 = vpow.pop %v2804
    %v2806 = vadd.f32 %v2805, 1.0
    %v2807 = vrcp.pop %v2806
    %v2808 = vmul.f32 1.0, %v2807
    %v2809 = vtanh.pop %v2761
    %2811 = vrot.lane.b32.xlu0 %v2809, 64
    %v2812 = vpop.permute.xlu0 %2811
    %v2814 = vmul.f32 %v2808, %v2812
    %v2815 = vtanh.pop %v2814
    %2817 = vrot.lane.b32.xlu0 %v2815, 96
    %v2818 = vpop.permute.xlu0 %2817
    %v2820 = vmul.f32 %v2808, %v2818
    %2822 = vrot.lane.b32.xlu0 %v2820, 32
    %v2823 = vpop.permute.xlu0 %2822
    %v2824 = vsel %vm282, %v2823, 0
    %2826 = vmatprep.subr.mxu0 0.0
    %2827 = vmatpush1.msra.mxu0 0.0
    %2828 = vmatprep.subr.mxu0 0.0
    %2829 = vmatpush1.msra.mxu0 0.0
    %2830 = vmatprep.subr.mxu0 0.0
    %2831 = vmatpush1.msra.mxu0 0.0
    %2832 = vmatprep.subr.mxu0 0.0
    %2833 = vmatpush1.msra.mxu0 0.0
    %2834 = vmatprep.subr.mxu0 0.0
    %2835 = vmatpush1.msra.mxu0 0.0
    %2836 = vmatprep.subr.mxu0 0.0
    %2837 = vmatpush1.msra.mxu0 0.0
    %2838 = vmatprep.subr.mxu0 0.0
    %2839 = vmatpush1.msra.mxu0 0.0
    %2840 = vmatprep.subr.mxu0 0.0
    %2841 = vmatpush1.msra.mxu0 0.0
    %2842 = vmatprep.subr.mxu0 0.0
    %2843 = vmatpush1.msra.mxu0 0.0
    %2844 = vmatprep.subr.mxu0 0.0
    %2845 = vmatpush1.msra.mxu0 0.0
    %2846 = vmatprep.subr.mxu0 0.0
    %2847 = vmatpush1.msra.mxu0 0.0
    %2848 = vmatprep.subr.mxu0 0.0
    %2849 = vmatpush1.msra.mxu0 0.0
    %2850 = vmatprep.subr.mxu0 0.0
    %2851 = vmatpush1.msra.mxu0 %v2802
    %2852 = vmatprep.subr.mxu0 0.0
    %2853 = vmatpush1.msra.mxu0 %v2801
    %2854 = vmatprep.subr.mxu0 0.0
    %2855 = vmatpush1.msra.mxu0 %v2800
    %2856 = vmatprep.subr.mxu0 0.0
    %2857 = vmatpush1.msra.mxu0 %v2799
    %2858 = vmatprep.subr.mxu0 0.0
    %2859 = vmatpush2.msra.mxu0 0.0
    %2860 = vmatprep.subr.mxu0 0.0
    %2861 = vmatpush2.msra.mxu0 0.0
    %2862 = vmatprep.subr.mxu0 0.0
    %2863 = vmatpush2.msra.mxu0 0.0
    %2864 = vmatprep.subr.mxu0 0.0
    %2865 = vmatpush2.msra.mxu0 0.0
    %2866 = vmatprep.subr.mxu0 0.0
    %2867 = vmatpush2.msra.mxu0 0.0
    %2868 = vmatprep.subr.mxu0 0.0
    %2869 = vmatpush2.msra.mxu0 0.0
    %2870 = vmatprep.subr.mxu0 0.0
    %2871 = vmatpush2.msra.mxu0 0.0
    %2872 = vmatprep.subr.mxu0 0.0
    %2873 = vmatpush2.msra.mxu0 0.0
    %2874 = vmatprep.subr.mxu0 0.0
    %2875 = vmatpush2.msra.mxu0 0.0
    %2876 = vmatprep.subr.mxu0 0.0
    %2877 = vmatpush2.msra.mxu0 0.0
    %2878 = vmatprep.subr.mxu0 0.0
    %2879 = vmatpush2.msra.mxu0 0.0
    %2880 = vmatprep.subr.mxu0 0.0
    %2881 = vmatpush2.msra.mxu0 0.0
    %2882 = vmatprep.subr.mxu0 0.0
    %2883 = vmatpush2.msra.mxu0 0.0
    %2884 = vmatprep.subr.mxu0 0.0
    %2885 = vmatpush2.msra.mxu0 0.0
    %2886 = vmatprep.subr.mxu0 0.0
    %2887 = vmatpush2.msra.mxu0 0.0
    %2888 = vmatprep.subr.mxu0 0.0
    %2889 = vmatpush2.msra.mxu0 0.0
    %2890 = vmatprep.mubr.f32.mxu0 0.0
    %2891 = vmatmul.mubr.f32.gmra.mxu0 %v2824
    %v2892 = vpop.f32.mrf.mxu0
    %v2893 = vadd.f32 0.0, %v2892
    %v2894 = vpop.f32.mrf.mxu0
    %2895 = vdwg.mxu0
    %v2896 = vadd.f32 %v2766, %v2893
    %v2897 = vxor.u32 %v2896, 2147483648
    %v2898 = vmul.f32 %v2897, 1.442695
    %v2899 = vpow.pop %v2898
    %v2900 = vadd.f32 %v2899, 1.0
    %v2901 = vrcp.pop %v2900
    %v2902 = vmul.f32 1.0, %v2901
    %v2903 = vtanh.pop %v2896
    %2905 = vrot.lane.b32.xlu0 %v2814, 32
    %v2906 = vpop.permute.xlu0 %2905
    %v2908 = vmul.f32 %v2902, %v2906
    %2910 = vrot.lane.b32.xlu0 %v2903, 64
    %v2911 = vpop.permute.xlu0 %2910
    %v2913 = vmul.f32 %v2902, %v2911
    %2915 = vrot.lane.b32.xlu0 %v2913, 32
    %v2916 = vpop.permute.xlu0 %2915
    %v2918 = vadd.f32 %v2908, %v2916
    %v2919 = vtanh.pop %v2918
    %2921 = vrot.lane.b32.xlu0 %v2919, 64
    %v2922 = vpop.permute.xlu0 %2921
    %v2924 = vmul.f32 %v2902, %v2922
    %2926 = vrot.lane.b32.xlu0 %v2924, 32
    %v2927 = vpop.permute.xlu0 %2926
    %v2928 = vsel %vm282, %v2927, 0
    %2930 = vmatprep.subr.mxu0 0.0
    %2931 = vmatpush1.msra.mxu0 0.0
    %2932 = vmatprep.subr.mxu0 0.0
    %2933 = vmatpush1.msra.mxu0 0.0
    %2934 = vmatprep.subr.mxu0 0.0
    %2935 = vmatpush1.msra.mxu0 0.0
    %2936 = vmatprep.subr.mxu0 0.0
    %2937 = vmatpush1.msra.mxu0 0.0
    %2938 = vmatprep.subr.mxu0 0.0
    %2939 = vmatpush1.msra.mxu0 0.0
    %2940 = vmatprep.subr.mxu0 0.0
    %2941 = vmatpush1.msra.mxu0 0.0
    %2942 = vmatprep.subr.mxu0 0.0
    %2943 = vmatpush1.msra.mxu0 0.0
    %2944 = vmatprep.subr.mxu0 0.0
    %2945 = vmatpush1.msra.mxu0 0.0
    %2946 = vmatprep.subr.mxu0 0.0
    %2947 = vmatpush1.msra.mxu0 0.0
    %2948 = vmatprep.subr.mxu0 0.0
    %2949 = vmatpush1.msra.mxu0 0.0
    %2950 = vmatprep.subr.mxu0 0.0
    %2951 = vmatpush1.msra.mxu0 0.0
    %2952 = vmatprep.subr.mxu0 0.0
    %2953 = vmatpush1.msra.mxu0 0.0
    %2954 = vmatprep.subr.mxu0 0.0
    %2955 = vmatpush1.msra.mxu0 %v2802
    %2956 = vmatprep.subr.mxu0 0.0
    %2957 = vmatpush1.msra.mxu0 %v2801
    %2958 = vmatprep.subr.mxu0 0.0
    %2959 = vmatpush1.msra.mxu0 %v2800
    %2960 = vmatprep.subr.mxu0 0.0
    %2961 = vmatpush1.msra.mxu0 %v2799
    %2962 = vmatprep.subr.mxu0 0.0
    %2963 = vmatpush2.msra.mxu0 0.0
    %2964 = vmatprep.subr.mxu0 0.0
    %2965 = vmatpush2.msra.mxu0 0.0
    %2966 = vmatprep.subr.mxu0 0.0
    %2967 = vmatpush2.msra.mxu0 0.0
    %2968 = vmatprep.subr.mxu0 0.0
    %2969 = vmatpush2.msra.mxu0 0.0
    %2970 = vmatprep.subr.mxu0 0.0
    %2971 = vmatpush2.msra.mxu0 0.0
    %2972 = vmatprep.subr.mxu0 0.0
    %2973 = vmatpush2.msra.mxu0 0.0
    %2974 = vmatprep.subr.mxu0 0.0
    %2975 = vmatpush2.msra.mxu0 0.0
    %2976 = vmatprep.subr.mxu0 0.0
    %2977 = vmatpush2.msra.mxu0 0.0
    %2978 = vmatprep.subr.mxu0 0.0
    %2979 = vmatpush2.msra.mxu0 0.0
    %2980 = vmatprep.subr.mxu0 0.0
    %2981 = vmatpush2.msra.mxu0 0.0
    %2982 = vmatprep.subr.mxu0 0.0
    %2983 = vmatpush2.msra.mxu0 0.0
    %2984 = vmatprep.subr.mxu0 0.0
    %2985 = vmatpush2.msra.mxu0 0.0
    %2986 = vmatprep.subr.mxu0 0.0
    %2987 = vmatpush2.msra.mxu0 0.0
    %2988 = vmatprep.subr.mxu0 0.0
    %2989 = vmatpush2.msra.mxu0 0.0
    %2990 = vmatprep.subr.mxu0 0.0
    %2991 = vmatpush2.msra.mxu0 0.0
    %2992 = vmatprep.subr.mxu0 0.0
    %2993 = vmatpush2.msra.mxu0 0.0
    %2994 = vmatprep.mubr.f32.mxu0 0.0
    %2995 = vmatmul.mubr.f32.gmra.mxu0 %v2928
    %v2996 = vpop.f32.mrf.mxu0
    %v2997 = vadd.f32 0.0, %v2996
    %v2998 = vpop.f32.mrf.mxu0
    %2999 = vdwg.mxu0
    %v3000 = vadd.f32 %v2771, %v2997
    %v3001 = vxor.u32 %v3000, 2147483648
    %v3002 = vmul.f32 %v3001, 1.442695
    %v3003 = vpow.pop %v3002
    %v3004 = vadd.f32 %v3003, 1.0
    %v3005 = vrcp.pop %v3004
    %v3006 = vmul.f32 1.0, %v3005
    %v3007 = vtanh.pop %v3000
    %v3008 = vmul.f32 %v3006, %v2918
    %3010 = vrot.lane.b32.xlu0 %v3007, 64
    %v3011 = vpop.permute.xlu0 %3010
    %v3013 = vmul.f32 %v3006, %v3011
    %3015 = vrot.lane.b32.xlu0 %v3013, 32
    %v3016 = vpop.permute.xlu0 %3015
    %v3018 = vadd.f32 %v3008, %v3016
    %v3019 = vtanh.pop %v3018
    %3021 = vrot.lane.b32.xlu0 %v3019, 64
    %v3022 = vpop.permute.xlu0 %3021
    %v3024 = vmul.f32 %v3006, %v3022
    %3026 = vrot.lane.b32.xlu0 %v3024, 32
    %v3027 = vpop.permute.xlu0 %3026
    %v3028 = vsel %vm282, %v3027, 0
    %3030 = vmatprep.subr.mxu0 0.0
    %3031 = vmatpush1.msra.mxu0 0.0
    %3032 = vmatprep.subr.mxu0 0.0
    %3033 = vmatpush1.msra.mxu0 0.0
    %3034 = vmatprep.subr.mxu0 0.0
    %3035 = vmatpush1.msra.mxu0 0.0
    %3036 = vmatprep.subr.mxu0 0.0
    %3037 = vmatpush1.msra.mxu0 0.0
    %3038 = vmatprep.subr.mxu0 0.0
    %3039 = vmatpush1.msra.mxu0 0.0
    %3040 = vmatprep.subr.mxu0 0.0
    %3041 = vmatpush1.msra.mxu0 0.0
    %3042 = vmatprep.subr.mxu0 0.0
    %3043 = vmatpush1.msra.mxu0 0.0
    %3044 = vmatprep.subr.mxu0 0.0
    %3045 = vmatpush1.msra.mxu0 0.0
    %3046 = vmatprep.subr.mxu0 0.0
    %3047 = vmatpush1.msra.mxu0 0.0
    %3048 = vmatprep.subr.mxu0 0.0
    %3049 = vmatpush1.msra.mxu0 0.0
    %3050 = vmatprep.subr.mxu0 0.0
    %3051 = vmatpush1.msra.mxu0 0.0
    %3052 = vmatprep.subr.mxu0 0.0
    %3053 = vmatpush1.msra.mxu0 0.0
    %3054 = vmatprep.subr.mxu0 0.0
    %3055 = vmatpush1.msra.mxu0 %v2802
    %3056 = vmatprep.subr.mxu0 0.0
    %3057 = vmatpush1.msra.mxu0 %v2801
    %3058 = vmatprep.subr.mxu0 0.0
    %3059 = vmatpush1.msra.mxu0 %v2800
    %3060 = vmatprep.subr.mxu0 0.0
    %3061 = vmatpush1.msra.mxu0 %v2799
    %3062 = vmatprep.subr.mxu0 0.0
    %3063 = vmatpush2.msra.mxu0 0.0
    %3064 = vmatprep.subr.mxu0 0.0
    %3065 = vmatpush2.msra.mxu0 0.0
    %3066 = vmatprep.subr.mxu0 0.0
    %3067 = vmatpush2.msra.mxu0 0.0
    %3068 = vmatprep.subr.mxu0 0.0
    %3069 = vmatpush2.msra.mxu0 0.0
    %3070 = vmatprep.subr.mxu0 0.0
    %3071 = vmatpush2.msra.mxu0 0.0
    %3072 = vmatprep.subr.mxu0 0.0
    %3073 = vmatpush2.msra.mxu0 0.0
    %3074 = vmatprep.subr.mxu0 0.0
    %3075 = vmatpush2.msra.mxu0 0.0
    %3076 = vmatprep.subr.mxu0 0.0
    %3077 = vmatpush2.msra.mxu0 0.0
    %3078 = vmatprep.subr.mxu0 0.0
    %3079 = vmatpush2.msra.mxu0 0.0
    %3080 = vmatprep.subr.mxu0 0.0
    %3081 = vmatpush2.msra.mxu0 0.0
    %3082 = vmatprep.subr.mxu0 0.0
    %3083 = vmatpush2.msra.mxu0 0.0
    %3084 = vmatprep.subr.mxu0 0.0
    %3085 = vmatpush2.msra.mxu0 0.0
    %3086 = vmatprep.subr.mxu0 0.0
    %3087 = vmatpush2.msra.mxu0 0.0
    %3088 = vmatprep.subr.mxu0 0.0
    %3089 = vmatpush2.msra.mxu0 0.0
    %3090 = vmatprep.subr.mxu0 0.0
    %3091 = vmatpush2.msra.mxu0 0.0
    %3092 = vmatprep.subr.mxu0 0.0
    %3093 = vmatpush2.msra.mxu0 0.0
    %3094 = vmatprep.mubr.f32.mxu0 0.0
    %3095 = vmatmul.mubr.f32.gmra.mxu0 %v3028
    %v3096 = vpop.f32.mrf.mxu0
    %v3097 = vadd.f32 0.0, %v3096
    %v3098 = vpop.f32.mrf.mxu0
    %3099 = vdwg.mxu0
    %v3100 = vadd.f32 %v2776, %v3097
    %v3101 = vxor.u32 %v3100, 2147483648
    %v3102 = vmul.f32 %v3101, 1.442695
    %v3103 = vpow.pop %v3102
    %v3104 = vadd.f32 %v3103, 1.0
    %v3105 = vrcp.pop %v3104
    %v3106 = vmul.f32 1.0, %v3105
    %v3107 = vtanh.pop %v3100
    %v3108 = vmul.f32 %v3106, %v3018
    %3110 = vrot.lane.b32.xlu0 %v3107, 64
    %v3111 = vpop.permute.xlu0 %3110
    %v3113 = vmul.f32 %v3106, %v3111
    %3115 = vrot.lane.b32.xlu0 %v3113, 32
    %v3116 = vpop.permute.xlu0 %3115
    %v3118 = vadd.f32 %v3108, %v3116
    %v3119 = vtanh.pop %v3118
    %3121 = vrot.lane.b32.xlu0 %v3119, 64
    %v3122 = vpop.permute.xlu0 %3121
    %v3124 = vmul.f32 %v3106, %v3122
    %3126 = vrot.lane.b32.xlu0 %v3124, 32
    %v3127 = vpop.permute.xlu0 %3126
    %v3128 = vsel %vm282, %v3127, 0
    %3130 = vmatprep.subr.mxu0 0.0
    %3131 = vmatpush1.msra.mxu0 0.0
    %3132 = vmatprep.subr.mxu0 0.0
    %3133 = vmatpush1.msra.mxu0 0.0
    %3134 = vmatprep.subr.mxu0 0.0
    %3135 = vmatpush1.msra.mxu0 0.0
    %3136 = vmatprep.subr.mxu0 0.0
    %3137 = vmatpush1.msra.mxu0 0.0
    %3138 = vmatprep.subr.mxu0 0.0
    %3139 = vmatpush1.msra.mxu0 0.0
    %3140 = vmatprep.subr.mxu0 0.0
    %3141 = vmatpush1.msra.mxu0 0.0
    %3142 = vmatprep.subr.mxu0 0.0
    %3143 = vmatpush1.msra.mxu0 0.0
    %3144 = vmatprep.subr.mxu0 0.0
    %3145 = vmatpush1.msra.mxu0 0.0
    %3146 = vmatprep.subr.mxu0 0.0
    %3147 = vmatpush1.msra.mxu0 0.0
    %3148 = vmatprep.subr.mxu0 0.0
    %3149 = vmatpush1.msra.mxu0 0.0
    %3150 = vmatprep.subr.mxu0 0.0
    %3151 = vmatpush1.msra.mxu0 0.0
    %3152 = vmatprep.subr.mxu0 0.0
    %3153 = vmatpush1.msra.mxu0 0.0
    %3154 = vmatprep.subr.mxu0 0.0
    %3155 = vmatpush1.msra.mxu0 %v2802
    %3156 = vmatprep.subr.mxu0 0.0
    %3157 = vmatpush1.msra.mxu0 %v2801
    %3158 = vmatprep.subr.mxu0 0.0
    %3159 = vmatpush1.msra.mxu0 %v2800
    %3160 = vmatprep.subr.mxu0 0.0
    %3161 = vmatpush1.msra.mxu0 %v2799
    %3162 = vmatprep.subr.mxu0 0.0
    %3163 = vmatpush2.msra.mxu0 0.0
    %3164 = vmatprep.subr.mxu0 0.0
    %3165 = vmatpush2.msra.mxu0 0.0
    %3166 = vmatprep.subr.mxu0 0.0
    %3167 = vmatpush2.msra.mxu0 0.0
    %3168 = vmatprep.subr.mxu0 0.0
    %3169 = vmatpush2.msra.mxu0 0.0
    %3170 = vmatprep.subr.mxu0 0.0
    %3171 = vmatpush2.msra.mxu0 0.0
    %3172 = vmatprep.subr.mxu0 0.0
    %3173 = vmatpush2.msra.mxu0 0.0
    %3174 = vmatprep.subr.mxu0 0.0
    %3175 = vmatpush2.msra.mxu0 0.0
    %3176 = vmatprep.subr.mxu0 0.0
    %3177 = vmatpush2.msra.mxu0 0.0
    %3178 = vmatprep.subr.mxu0 0.0
    %3179 = vmatpush2.msra.mxu0 0.0
    %3180 = vmatprep.subr.mxu0 0.0
    %3181 = vmatpush2.msra.mxu0 0.0
    %3182 = vmatprep.subr.mxu0 0.0
    %3183 = vmatpush2.msra.mxu0 0.0
    %3184 = vmatprep.subr.mxu0 0.0
    %3185 = vmatpush2.msra.mxu0 0.0
    %3186 = vmatprep.subr.mxu0 0.0
    %3187 = vmatpush2.msra.mxu0 0.0
    %3188 = vmatprep.subr.mxu0 0.0
    %3189 = vmatpush2.msra.mxu0 0.0
    %3190 = vmatprep.subr.mxu0 0.0
    %3191 = vmatpush2.msra.mxu0 0.0
    %3192 = vmatprep.subr.mxu0 0.0
    %3193 = vmatpush2.msra.mxu0 0.0
    %3194 = vmatprep.mubr.f32.mxu0 0.0
    %3195 = vmatmul.mubr.f32.gmra.mxu0 %v3128
    %v3196 = vpop.f32.mrf.mxu0
    %v3197 = vadd.f32 0.0, %v3196
    %v3198 = vpop.f32.mrf.mxu0
    %3199 = vdwg.mxu0
    %v3200 = vadd.f32 %v2781, %v3197
    %v3201 = vxor.u32 %v3200, 2147483648
    %v3202 = vmul.f32 %v3201, 1.442695
    %v3203 = vpow.pop %v3202
    %v3204 = vadd.f32 %v3203, 1.0
    %v3205 = vrcp.pop %v3204
    %v3206 = vmul.f32 1.0, %v3205
    %v3207 = vtanh.pop %v3200
    %v3208 = vmul.f32 %v3206, %v3118
    %3210 = vrot.lane.b32.xlu0 %v3207, 64
    %v3211 = vpop.permute.xlu0 %3210
    %v3213 = vmul.f32 %v3206, %v3211
    %3215 = vrot.lane.b32.xlu0 %v3213, 32
    %v3216 = vpop.permute.xlu0 %3215
    %v3218 = vadd.f32 %v3208, %v3216
    %v3219 = vtanh.pop %v3218
    %3221 = vrot.lane.b32.xlu0 %v3219, 64
    %v3222 = vpop.permute.xlu0 %3221
    %v3224 = vmul.f32 %v3206, %v3222
    %3226 = vrot.lane.b32.xlu0 %v3224, 32
    %v3227 = vpop.permute.xlu0 %3226
    %v3228 = vsel %vm282, %v3227, 0
    %3230 = vmatprep.subr.mxu0 0.0
    %3231 = vmatpush1.msra.mxu0 0.0
    %3232 = vmatprep.subr.mxu0 0.0
    %3233 = vmatpush1.msra.mxu0 0.0
    %3234 = vmatprep.subr.mxu0 0.0
    %3235 = vmatpush1.msra.mxu0 0.0
    %3236 = vmatprep.subr.mxu0 0.0
    %3237 = vmatpush1.msra.mxu0 0.0
    %3238 = vmatprep.subr.mxu0 0.0
    %3239 = vmatpush1.msra.mxu0 0.0
    %3240 = vmatprep.subr.mxu0 0.0
    %3241 = vmatpush1.msra.mxu0 0.0
    %3242 = vmatprep.subr.mxu0 0.0
    %3243 = vmatpush1.msra.mxu0 0.0
    %3244 = vmatprep.subr.mxu0 0.0
    %3245 = vmatpush1.msra.mxu0 0.0
    %3246 = vmatprep.subr.mxu0 0.0
    %3247 = vmatpush1.msra.mxu0 0.0
    %3248 = vmatprep.subr.mxu0 0.0
    %3249 = vmatpush1.msra.mxu0 0.0
    %3250 = vmatprep.subr.mxu0 0.0
    %3251 = vmatpush1.msra.mxu0 0.0
    %3252 = vmatprep.subr.mxu0 0.0
    %3253 = vmatpush1.msra.mxu0 0.0
    %3254 = vmatprep.subr.mxu0 0.0
    %3255 = vmatpush1.msra.mxu0 %v2802
    %3256 = vmatprep.subr.mxu0 0.0
    %3257 = vmatpush1.msra.mxu0 %v2801
    %3258 = vmatprep.subr.mxu0 0.0
    %3259 = vmatpush1.msra.mxu0 %v2800
    %3260 = vmatprep.subr.mxu0 0.0
    %3261 = vmatpush1.msra.mxu0 %v2799
    %3262 = vmatprep.subr.mxu0 0.0
    %3263 = vmatpush2.msra.mxu0 0.0
    %3264 = vmatprep.subr.mxu0 0.0
    %3265 = vmatpush2.msra.mxu0 0.0
    %3266 = vmatprep.subr.mxu0 0.0
    %3267 = vmatpush2.msra.mxu0 0.0
    %3268 = vmatprep.subr.mxu0 0.0
    %3269 = vmatpush2.msra.mxu0 0.0
    %3270 = vmatprep.subr.mxu0 0.0
    %3271 = vmatpush2.msra.mxu0 0.0
    %3272 = vmatprep.subr.mxu0 0.0
    %3273 = vmatpush2.msra.mxu0 0.0
    %3274 = vmatprep.subr.mxu0 0.0
    %3275 = vmatpush2.msra.mxu0 0.0
    %3276 = vmatprep.subr.mxu0 0.0
    %3277 = vmatpush2.msra.mxu0 0.0
    %3278 = vmatprep.subr.mxu0 0.0
    %3279 = vmatpush2.msra.mxu0 0.0
    %3280 = vmatprep.subr.mxu0 0.0
    %3281 = vmatpush2.msra.mxu0 0.0
    %3282 = vmatprep.subr.mxu0 0.0
    %3283 = vmatpush2.msra.mxu0 0.0
    %3284 = vmatprep.subr.mxu0 0.0
    %3285 = vmatpush2.msra.mxu0 0.0
    %3286 = vmatprep.subr.mxu0 0.0
    %3287 = vmatpush2.msra.mxu0 0.0
    %3288 = vmatprep.subr.mxu0 0.0
    %3289 = vmatpush2.msra.mxu0 0.0
    %3290 = vmatprep.subr.mxu0 0.0
    %3291 = vmatpush2.msra.mxu0 0.0
    %3292 = vmatprep.subr.mxu0 0.0
    %3293 = vmatpush2.msra.mxu0 0.0
    %3294 = vmatprep.mubr.f32.mxu0 0.0
    %3295 = vmatmul.mubr.f32.gmra.mxu0 %v3228
    %v3296 = vpop.f32.mrf.mxu0
    %v3297 = vadd.f32 0.0, %v3296
    %v3298 = vpop.f32.mrf.mxu0
    %3299 = vdwg.mxu0
    %v3300 = vadd.f32 %v2786, %v3297
    %v3301 = vxor.u32 %v3300, 2147483648
    %v3302 = vmul.f32 %v3301, 1.442695
    %v3303 = vpow.pop %v3302
    %v3304 = vadd.f32 %v3303, 1.0
    %v3305 = vrcp.pop %v3304
    %v3306 = vmul.f32 1.0, %v3305
    %v3307 = vtanh.pop %v3300
    %v3308 = vmul.f32 %v3306, %v3218
    %3310 = vrot.lane.b32.xlu0 %v3307, 64
    %v3311 = vpop.permute.xlu0 %3310
    %v3313 = vmul.f32 %v3306, %v3311
    %3315 = vrot.lane.b32.xlu0 %v3313, 32
    %v3316 = vpop.permute.xlu0 %3315
    %v3318 = vadd.f32 %v3308, %v3316
    %v3319 = vtanh.pop %v3318
    %3321 = vrot.lane.b32.xlu0 %v3319, 64
    %v3322 = vpop.permute.xlu0 %3321
    %v3324 = vmul.f32 %v3306, %v3322
    %3326 = vrot.lane.b32.xlu0 %v3324, 32
    %v3327 = vpop.permute.xlu0 %3326
    %v3328 = vsel %vm282, %v3327, 0
    %3330 = vmatprep.subr.mxu0 0.0
    %3331 = vmatpush1.msra.mxu0 0.0
    %3332 = vmatprep.subr.mxu0 0.0
    %3333 = vmatpush1.msra.mxu0 0.0
    %3334 = vmatprep.subr.mxu0 0.0
    %3335 = vmatpush1.msra.mxu0 0.0
    %3336 = vmatprep.subr.mxu0 0.0
    %3337 = vmatpush1.msra.mxu0 0.0
    %3338 = vmatprep.subr.mxu0 0.0
    %3339 = vmatpush1.msra.mxu0 0.0
    %3340 = vmatprep.subr.mxu0 0.0
    %3341 = vmatpush1.msra.mxu0 0.0
    %3342 = vmatprep.subr.mxu0 0.0
    %3343 = vmatpush1.msra.mxu0 0.0
    %3344 = vmatprep.subr.mxu0 0.0
    %3345 = vmatpush1.msra.mxu0 0.0
    %3346 = vmatprep.subr.mxu0 0.0
    %3347 = vmatpush1.msra.mxu0 0.0
    %3348 = vmatprep.subr.mxu0 0.0
    %3349 = vmatpush1.msra.mxu0 0.0
    %3350 = vmatprep.subr.mxu0 0.0
    %3351 = vmatpush1.msra.mxu0 0.0
    %3352 = vmatprep.subr.mxu0 0.0
    %3353 = vmatpush1.msra.mxu0 0.0
    %3354 = vmatprep.subr.mxu0 0.0
    %3355 = vmatpush1.msra.mxu0 %v2802
    %3356 = vmatprep.subr.mxu0 0.0
    %3357 = vmatpush1.msra.mxu0 %v2801
    %3358 = vmatprep.subr.mxu0 0.0
    %3359 = vmatpush1.msra.mxu0 %v2800
    %3360 = vmatprep.subr.mxu0 0.0
    %3361 = vmatpush1.msra.mxu0 %v2799
    %3362 = vmatprep.subr.mxu0 0.0
    %3363 = vmatpush2.msra.mxu0 0.0
    %3364 = vmatprep.subr.mxu0 0.0
    %3365 = vmatpush2.msra.mxu0 0.0
    %3366 = vmatprep.subr.mxu0 0.0
    %3367 = vmatpush2.msra.mxu0 0.0
    %3368 = vmatprep.subr.mxu0 0.0
    %3369 = vmatpush2.msra.mxu0 0.0
    %3370 = vmatprep.subr.mxu0 0.0
    %3371 = vmatpush2.msra.mxu0 0.0
    %3372 = vmatprep.subr.mxu0 0.0
    %3373 = vmatpush2.msra.mxu0 0.0
    %3374 = vmatprep.subr.mxu0 0.0
    %3375 = vmatpush2.msra.mxu0 0.0
    %3376 = vmatprep.subr.mxu0 0.0
    %3377 = vmatpush2.msra.mxu0 0.0
    %3378 = vmatprep.subr.mxu0 0.0
    %3379 = vmatpush2.msra.mxu0 0.0
    %3380 = vmatprep.subr.mxu0 0.0
    %3381 = vmatpush2.msra.mxu0 0.0
    %3382 = vmatprep.subr.mxu0 0.0
    %3383 = vmatpush2.msra.mxu0 0.0
    %3384 = vmatprep.subr.mxu0 0.0
    %3385 = vmatpush2.msra.mxu0 0.0
    %3386 = vmatprep.subr.mxu0 0.0
    %3387 = vmatpush2.msra.mxu0 0.0
    %3388 = vmatprep.subr.mxu0 0.0
    %3389 = vmatpush2.msra.mxu0 0.0
    %3390 = vmatprep.subr.mxu0 0.0
    %3391 = vmatpush2.msra.mxu0 0.0
    %3392 = vmatprep.subr.mxu0 0.0
    %3393 = vmatpush2.msra.mxu0 0.0
    %3394 = vmatprep.mubr.f32.mxu0 0.0
    %3395 = vmatmul.mubr.f32.gmra.mxu0 %v3328
    %v3396 = vpop.f32.mrf.mxu0
    %v3397 = vadd.f32 0.0, %v3396
    %v3398 = vpop.f32.mrf.mxu0
    %3399 = vdwg.mxu0
    %v3400 = vadd.f32 %v2791, %v3397
    %v3401 = vxor.u32 %v3400, 2147483648
    %v3402 = vmul.f32 %v3401, 1.442695
    %v3403 = vpow.pop %v3402
    %v3404 = vadd.f32 %v3403, 1.0
    %v3405 = vrcp.pop %v3404
    %v3406 = vmul.f32 1.0, %v3405
    %v3407 = vtanh.pop %v3400
    %v3408 = vmul.f32 %v3406, %v3318
    %3410 = vrot.lane.b32.xlu0 %v3407, 64
    %v3411 = vpop.permute.xlu0 %3410
    %v3413 = vmul.f32 %v3406, %v3411
    %3415 = vrot.lane.b32.xlu0 %v3413, 32
    %v3416 = vpop.permute.xlu0 %3415
    %v3418 = vadd.f32 %v3408, %v3416
    %v3419 = vtanh.pop %v3418
    %3421 = vrot.lane.b32.xlu0 %v3419, 64
    %v3422 = vpop.permute.xlu0 %3421
    %v3424 = vmul.f32 %v3406, %v3422
    %3426 = vrot.lane.b32.xlu0 %v3424, 32
    %v3427 = vpop.permute.xlu0 %3426
    %v3428 = vsel %vm282, %v3427, 0
    %3430 = vmatprep.subr.mxu0 0.0
    %3431 = vmatpush1.msra.mxu0 0.0
    %3432 = vmatprep.subr.mxu0 0.0
    %3433 = vmatpush1.msra.mxu0 0.0
    %3434 = vmatprep.subr.mxu0 0.0
    %3435 = vmatpush1.msra.mxu0 0.0
    %3436 = vmatprep.subr.mxu0 0.0
    %3437 = vmatpush1.msra.mxu0 0.0
    %3438 = vmatprep.subr.mxu0 0.0
    %3439 = vmatpush1.msra.mxu0 0.0
    %3440 = vmatprep.subr.mxu0 0.0
    %3441 = vmatpush1.msra.mxu0 0.0
    %3442 = vmatprep.subr.mxu0 0.0
    %3443 = vmatpush1.msra.mxu0 0.0
    %3444 = vmatprep.subr.mxu0 0.0
    %3445 = vmatpush1.msra.mxu0 0.0
    %3446 = vmatprep.subr.mxu0 0.0
    %3447 = vmatpush1.msra.mxu0 0.0
    %3448 = vmatprep.subr.mxu0 0.0
    %3449 = vmatpush1.msra.mxu0 0.0
    %3450 = vmatprep.subr.mxu0 0.0
    %3451 = vmatpush1.msra.mxu0 0.0
    %3452 = vmatprep.subr.mxu0 0.0
    %3453 = vmatpush1.msra.mxu0 0.0
    %3454 = vmatprep.subr.mxu0 0.0
    %3455 = vmatpush1.msra.mxu0 %v2802
    %3456 = vmatprep.subr.mxu0 0.0
    %3457 = vmatpush1.msra.mxu0 %v2801
    %3458 = vmatprep.subr.mxu0 0.0
    %3459 = vmatpush1.msra.mxu0 %v2800
    %3460 = vmatprep.subr.mxu0 0.0
    %3461 = vmatpush1.msra.mxu0 %v2799
    %3462 = vmatprep.subr.mxu0 0.0
    %3463 = vmatpush2.msra.mxu0 0.0
    %3464 = vmatprep.subr.mxu0 0.0
    %3465 = vmatpush2.msra.mxu0 0.0
    %3466 = vmatprep.subr.mxu0 0.0
    %3467 = vmatpush2.msra.mxu0 0.0
    %3468 = vmatprep.subr.mxu0 0.0
    %3469 = vmatpush2.msra.mxu0 0.0
    %3470 = vmatprep.subr.mxu0 0.0
    %3471 = vmatpush2.msra.mxu0 0.0
    %3472 = vmatprep.subr.mxu0 0.0
    %3473 = vmatpush2.msra.mxu0 0.0
    %3474 = vmatprep.subr.mxu0 0.0
    %3475 = vmatpush2.msra.mxu0 0.0
    %3476 = vmatprep.subr.mxu0 0.0
    %3477 = vmatpush2.msra.mxu0 0.0
    %3478 = vmatprep.subr.mxu0 0.0
    %3479 = vmatpush2.msra.mxu0 0.0
    %3480 = vmatprep.subr.mxu0 0.0
    %3481 = vmatpush2.msra.mxu0 0.0
    %3482 = vmatprep.subr.mxu0 0.0
    %3483 = vmatpush2.msra.mxu0 0.0
    %3484 = vmatprep.subr.mxu0 0.0
    %3485 = vmatpush2.msra.mxu0 0.0
    %3486 = vmatprep.subr.mxu0 0.0
    %3487 = vmatpush2.msra.mxu0 0.0
    %3488 = vmatprep.subr.mxu0 0.0
    %3489 = vmatpush2.msra.mxu0 0.0
    %3490 = vmatprep.subr.mxu0 0.0
    %3491 = vmatpush2.msra.mxu0 0.0
    %3492 = vmatprep.subr.mxu0 0.0
    %3493 = vmatpush2.msra.mxu0 0.0
    %3494 = vmatprep.mubr.f32.mxu0 0.0
    %3495 = vmatmul.mubr.f32.gmra.mxu0 %v3428
    %v3496 = vpop.f32.mrf.mxu0
    %v3497 = vadd.f32 0.0, %v3496
    %v3498 = vpop.f32.mrf.mxu0
    %3499 = vdwg.mxu0
    %v3500 = vadd.f32 %v2796, %v3497
    %v3501 = vxor.u32 %v3500, 2147483648
    %v3502 = vmul.f32 %v3501, 1.442695
    %v3503 = vpow.pop %v3502
    %v3504 = vadd.f32 %v3503, 1.0
    %v3505 = vrcp.pop %v3504
    %v3506 = vmul.f32 1.0, %v3505
    %v3507 = vtanh.pop %v3500
    %v3508 = vmul.f32 %v3506, %v3418
    %3510 = vrot.lane.b32.xlu0 %v3507, 64
    %v3511 = vpop.permute.xlu0 %3510
    %v3513 = vmul.f32 %v3506, %v3511
    %3515 = vrot.lane.b32.xlu0 %v3513, 32
    %v3516 = vpop.permute.xlu0 %3515
    %v3518 = vadd.f32 %v3508, %v3516
    %v3519 = vtanh.pop %v3518
    %3521 = vrot.lane.b32.xlu0 %v3519, 64
    %v3522 = vpop.permute.xlu0 %3521
    %v3524 = vmul.f32 %v3506, %v3522
    %v3525 = vld [vmem:[%s13] sm:$0xff]
    %v3526 = vld [vmem:[%s13 + $0x8] sm:$0xff]
    %v3527 = vld [vmem:[%s13 + $0x10] sm:$0xff]
    %v3528 = vld [vmem:[%s13 + $0x18] sm:$0xff]
    %v3529 = vld [vmem:[#allocation2] sm:$0x1]
    %v3531 = vlaneseq
    %v3532 = vshrl.u32 %v3531, 7
    %v3533 = vsub.s32 0, %v3532
    %v3534 = vrot.slane %v3529, %v3533
    %3537 = vrot.lane.b32.xlu0 %v3524, 32
    %v3538 = vpop.permute.xlu0 %3537
    %v3539 = vsel %vm282, %v3538, 0
    %3541 = vmatprep.subr.mxu0 0.0
    %3542 = vmatpush1.msra.mxu0 0.0
    %3543 = vmatprep.subr.mxu0 0.0
    %3544 = vmatpush1.msra.mxu0 0.0
    %3545 = vmatprep.subr.mxu0 0.0
    %3546 = vmatpush1.msra.mxu0 0.0
    %3547 = vmatprep.subr.mxu0 0.0
    %3548 = vmatpush1.msra.mxu0 0.0
    %3549 = vmatprep.subr.mxu0 0.0
    %3550 = vmatpush1.msra.mxu0 0.0
    %3551 = vmatprep.subr.mxu0 0.0
    %3552 = vmatpush1.msra.mxu0 0.0
    %3553 = vmatprep.subr.mxu0 0.0
    %3554 = vmatpush1.msra.mxu0 0.0
    %3555 = vmatprep.subr.mxu0 0.0
    %3556 = vmatpush1.msra.mxu0 0.0
    %3557 = vmatprep.subr.mxu0 0.0
    %3558 = vmatpush1.msra.mxu0 0.0
    %3559 = vmatprep.subr.mxu0 0.0
    %3560 = vmatpush1.msra.mxu0 0.0
    %3561 = vmatprep.subr.mxu0 0.0
    %3562 = vmatpush1.msra.mxu0 0.0
    %3563 = vmatprep.subr.mxu0 0.0
    %3564 = vmatpush1.msra.mxu0 0.0
    %3565 = vmatprep.subr.mxu0 0.0
    %3566 = vmatpush1.msra.mxu0 %v3528
    %3567 = vmatprep.subr.mxu0 0.0
    %3568 = vmatpush1.msra.mxu0 %v3527
    %3569 = vmatprep.subr.mxu0 0.0
    %3570 = vmatpush1.msra.mxu0 %v3526
    %3571 = vmatprep.subr.mxu0 0.0
    %3572 = vmatpush1.msra.mxu0 %v3525
    %3573 = vmatprep.subr.mxu0 0.0
    %3574 = vmatpush2.msra.mxu0 0.0
    %3575 = vmatprep.subr.mxu0 0.0
    %3576 = vmatpush2.msra.mxu0 0.0
    %3577 = vmatprep.subr.mxu0 0.0
    %3578 = vmatpush2.msra.mxu0 0.0
    %3579 = vmatprep.subr.mxu0 0.0
    %3580 = vmatpush2.msra.mxu0 0.0
    %3581 = vmatprep.subr.mxu0 0.0
    %3582 = vmatpush2.msra.mxu0 0.0
    %3583 = vmatprep.subr.mxu0 0.0
    %3584 = vmatpush2.msra.mxu0 0.0
    %3585 = vmatprep.subr.mxu0 0.0
    %3586 = vmatpush2.msra.mxu0 0.0
    %3587 = vmatprep.subr.mxu0 0.0
    %3588 = vmatpush2.msra.mxu0 0.0
    %3589 = vmatprep.subr.mxu0 0.0
    %3590 = vmatpush2.msra.mxu0 0.0
    %3591 = vmatprep.subr.mxu0 0.0
    %3592 = vmatpush2.msra.mxu0 0.0
    %3593 = vmatprep.subr.mxu0 0.0
    %3594 = vmatpush2.msra.mxu0 0.0
    %3595 = vmatprep.subr.mxu0 0.0
    %3596 = vmatpush2.msra.mxu0 0.0
    %3597 = vmatprep.subr.mxu0 0.0
    %3598 = vmatpush2.msra.mxu0 0.0
    %3599 = vmatprep.subr.mxu0 0.0
    %3600 = vmatpush2.msra.mxu0 0.0
    %3601 = vmatprep.subr.mxu0 0.0
    %3602 = vmatpush2.msra.mxu0 0.0
    %3603 = vmatprep.subr.mxu0 0.0
    %3604 = vmatpush2.msra.mxu0 0.0
    %3605 = vmatprep.mubr.f32.mxu0 0.0
    %3606 = vmatmul.mubr.f32.gmra.mxu0 %v3539
    %v3607 = vpop.f32.mrf.mxu0
    %v3608 = vadd.f32 %v3534, %v3607
    %v3609 = vpop.f32.mrf.mxu0
    %3610 = vdwg.mxu0
    %vm3611 = vcmask 7168
    %3612 = vst.msk [vmem:[%s15] sm:$0xff] %vm3611, %v3608
    // Predicated region
    $region78: #{tpu_custom_call.1} parent=1 // pred_check
      _
    $region79: #{tpu_custom_call.1} parent=1 // pred_check_branch
      %3614 = sbr.rel (0) target = $region81
    $region80: #{tpu_custom_call.1} parent=1 // pred_region
      _
    $region81: #{tpu_custom_call.1} parent=1 // pred_fallthru
      _
    // Predicated region
    $region82: #{tpu_custom_call.1} parent=1 // pred_check
      _
    $region83: #{tpu_custom_call.1} parent=1 // pred_check_branch
      %3616 = sbr.rel (0) target = $region85
    $region84: #{tpu_custom_call.1} parent=1 // pred_region
      _
    $region85: #{tpu_custom_call.1} parent=1 // pred_fallthru
      _
    %3617 = vsyncpa [#allocation4], 1
    %3618 = vsyncpa [#allocation6], 1
    %3619 = vsyncpa [#allocation9], 1

</llo_original>
